<compile_context>
chip_gen: v5e
topology: v5e:2x2
jax: 0.10.0
libtpu: 0.0.40
codegen_flags: <defaults>
</compile_context>

<pallas_src>
import numpy as np
import jax
import jax.numpy as jnp
from jax import lax
from jax.experimental import pallas as pl
from jax.experimental.pallas import tpu as pltpu

_LEAKY_SLOPE = 0.1
_PREC = lax.Precision.HIGHEST        # only the tiny channel mixes / reference


# ------------------------------------------------------------------ operators
def _dft2_matrix_t(h, w):
    """K^T such that fft2(x)_flat = x_flat @ K^T (row-major spatial flattening)."""
    fh = np.exp(-2j * np.pi * np.outer(np.arange(h), np.arange(h)) / h)
    fw = np.exp(-2j * np.pi * np.outer(np.arange(w), np.arange(w)) / w)
    kt = np.kron(fh, fw).T                        # K[(k,l),(h,w)] = fh[k,h]*fw[l,w]
    kr = np.real(kt).copy()
    ki = np.imag(kt).copy()
    # Snap numerically-tiny entries to exact zero so the purely-real FFT bins
    # (k,l in {0,H/2}x{0,W/2}) give fi == 0 exactly -> the angle branch cut at
    # +/-pi is evaluated identically by kernel and reference.
    kr[np.abs(kr) < 1e-6] = 0.0
    ki[np.abs(ki) < 1e-6] = 0.0
    return kr.astype(np.float32), ki.astype(np.float32)


def _inter_idft_crop_matrix_t(h, w):
    """E^T folding repeat_interleave(2, dims -2/-1) -> ifft2 on (2h,2w) -> corner crop.

    out[p,q] = sum_{h',w'} z[h',w'] * A[p,h'] * B[q,w'] with
      A[p,h'] = exp(2i*pi*p*h'/h) * (1 + exp(i*pi*p/h)) / (2h)   (B analogous),
    and the crop keeps rows p in [0,h/2) u [3h/2,2h) and cols q likewise.
    For H,W >= 32 this dense kron operator should be replaced by separable
    per-axis factors (O(H^2 + W^2) memory) instead of the dense (HW)^2 kron.
    """
    psel = np.concatenate([np.arange(h // 2), np.arange(3 * h // 2, 2 * h)])
    qsel = np.concatenate([np.arange(w // 2), np.arange(3 * w // 2, 2 * w)])
    ah = (np.exp(2j * np.pi * np.outer(psel, np.arange(h)) / h)
          * (1.0 + np.exp(1j * np.pi * psel / h))[:, None]) / (2.0 * h)
    bw = (np.exp(2j * np.pi * np.outer(qsel, np.arange(w)) / w)
          * (1.0 + np.exp(1j * np.pi * qsel / w))[:, None]) / (2.0 * w)
    et = np.kron(ah, bw).T                        # (h*w, h*w)
    return np.real(et).astype(np.float32).copy(), np.imag(et).astype(np.float32).copy()


def _atan2(y, x):
    """torch.angle equivalent from basic VPU ops (abs/div/mul/add/select)."""
    pi = jnp.float32(np.pi)
    ax, ay = jnp.abs(x), jnp.abs(y)
    swap = ay > ax
    num = jnp.where(swap, ax, ay)
    den = jnp.where(swap, ay, ax)
    den = jnp.where(den == 0.0, jnp.float32(1.0), den)
    t = num / den                                           # in [0, 1]
    mid = t > 0.41421356
    tr = jnp.where(mid, (t - 1.0) / (t + 1.0), t)           # |tr| <= tan(pi/8)
    off = jnp.where(mid, pi / 4.0, jnp.float32(0.0))
    z = tr * tr
    p = ((8.05374449538e-2 * z - 1.38776856032e-1) * z
         + 1.99777106478e-1) * z - 3.33329491539e-1         # Cephes atanf poly
    r = off + tr + tr * z * p                               # atan(t)
    r = jnp.where(swap, pi / 2.0 - r, r)
    r = jnp.where(x < 0.0, pi - r, r)
    r = jnp.where(y < 0.0, -r, r)
    return r


# --------------------------------------------------------------------- kernel
def _freup_inter_kernel(x_ref, kt2_ref, et2_ref,
                        aw1_ref, ab1_ref, aw2_ref, ab2_ref,
                        pw1_ref, pb1_ref, pw2_ref, pb2_ref,
                        postw_ref, postb_ref, o_ref):
    s = o_ref.shape[1]
    x = x_ref[...]                                          # (TM, s) bf16

    # fft2 as ONE dense DFT matmul against [K_r^T | K_i^T] (bf16 x bf16 -> f32).
    f = jnp.dot(x, kt2_ref[...], preferred_element_type=jnp.float32)  # (TM, 2s)
    fr = f[:, :s]                                           # lane-aligned slices
    fi = f[:, s:]

    mag = jnp.sqrt(fr * fr + fi * fi)                       # torch.abs(fft_x)
    pha = _atan2(fi, fr)                                    # torch.angle(fft_x)

    # 1x1 convs as block-diagonal (I_G (x) W) channel mixes over the slab rows,
    # kept in exact f32 (HIGHEST) so the phase path stays accurate.
    def fuse(v, w1, b1, w2, b2):
        u = jnp.dot(w1, v, precision=_PREC) + b1
        u = jnp.where(u >= 0.0, u, _LEAKY_SLOPE * u)
        return jnp.dot(w2, u, precision=_PREC) + b2

    Mag = fuse(mag, aw1_ref[...], ab1_ref[...], aw2_ref[...], ab2_ref[...])
    Pha = fuse(pha, pw1_ref[...], pb1_ref[...], pw2_ref[...], pb2_ref[...])

    zr = (Mag * jnp.cos(Pha)).astype(jnp.bfloat16)
    zi = (Mag * jnp.sin(Pha)).astype(jnp.bfloat16)

    # repeat_interleave(2,2/3) + ifft2 + corner-crop folded into [E_r^T | E_i^T].
    gr = jnp.dot(zr, et2_ref[...], preferred_element_type=jnp.float32)  # (TM, 2s)
    gi = jnp.dot(zi, et2_ref[...], preferred_element_type=jnp.float32)  # (TM, 2s)
    rr = gr[:, :s] - gi[:, s:]
    ri = gr[:, s:] + gi[:, :s]
    a = jnp.sqrt(rr * rr + ri * ri)                         # torch.abs(ifft2(.)) cropped

    # post 1x1 conv (commutes with the trailing nearest-neighbour upsample).
    o_ref[...] = jnp.dot(postw_ref[...], a, precision=_PREC) + postb_ref[...]


def freup_inter_forward(x, params):
    """x: (N, C, H, W) float32 -> (N, C, 2H, 2W) float32."""
    n, c, h, w = x.shape
    s = h * w
    R = n * c

    # Row-slab size: multiple of 8 (sublanes) and of C (whole channel groups),
    # capped near 256 so the DFT matmuls get a large M dimension.
    L = int(np.lcm(8, c))
    TM = min(max(L, (256 // L) * L), ((R + L - 1) // L) * L)
    Rpad = ((R + TM - 1) // TM) * TM
    G = TM // c

    ktr, kti = _dft2_matrix_t(h, w)
    etr, eti = _inter_idft_crop_matrix_t(h, w)
    kt2 = jnp.asarray(np.concatenate([ktr, kti], axis=1), jnp.bfloat16)   # (s, 2s)
    et2 = jnp.asarray(np.concatenate([etr, eti], axis=1), jnp.bfloat16)   # (s, 2s)

    aw1, ab1, aw2, ab2, pw1, pb1, pw2, pb2, pw, pb = params
    eye_g = jnp.eye(G, dtype=jnp.float32)
    wblk = lambda t: jnp.kron(eye_g, t.reshape(c, c).astype(jnp.float32))     # (TM, TM)
    bcol = lambda t: jnp.tile(t.reshape(c).astype(jnp.float32), (G,)).reshape(TM, 1)

    xf = x.reshape(R, s).astype(jnp.float32)
    if Rpad != R:
        xf = jnp.concatenate([xf, jnp.zeros((Rpad - R, s), jnp.float32)], axis=0)
    xf = xf.astype(jnp.bfloat16)

    const = lambda shape: pl.BlockSpec(shape, lambda i: (0, 0))   # grid-invariant operand

    crop_post = pl.pallas_call(
        _freup_inter_kernel,
        out_shape=jax.ShapeDtypeStruct((Rpad, s), jnp.float32),
        grid=(Rpad // TM,),
        in_specs=[
            pl.BlockSpec((TM, s), lambda i: (i, 0)),              # x slab
            const((s, 2 * s)),                                    # [K_r^T | K_i^T] bf16
            const((s, 2 * s)),                                    # [E_r^T | E_i^T] bf16
            const((TM, TM)), const((TM, 1)), const((TM, TM)), const((TM, 1)),  # amp_fuse
            const((TM, TM)), const((TM, 1)), const((TM, TM)), const((TM, 1)),  # pha_fuse
            const((TM, TM)), const((TM, 1)),                                   # post
        ],
        out_specs=pl.BlockSpec((TM, s), lambda i: (i, 0)),
        compiler_params=pltpu.CompilerParams(
            dimension_semantics=("parallel",),                    # independent row slabs
            vmem_limit_bytes=32 * 1024 * 1024),
    )(xf, kt2, et2,
      wblk(aw1), bcol(ab1), wblk(aw2), bcol(ab2),
      wblk(pw1), bcol(pb1), wblk(pw2), bcol(pb2),
      wblk(pw), bcol(pb))

    y = crop_post[:R].reshape(n, c, h, w)
    # F.interpolate(crop, (2H, 2W)) with the default nearest mode is pure 2x2
    # pixel replication; the 1x1 `post` conv commutes with it and was fused in
    # the kernel, so this is zero-FLOP layout plumbing.
    return jnp.repeat(jnp.repeat(y, 2, axis=2), 2, axis=3)


# ------------------------------------------------------------------ reference
def freup_inter_reference(x, params, ktr_bf, kti_bf):
    """Pure-JAX reference of the torch module.  The forward DFT goes through the
    same bf16 operator as the kernel so the angle branch cut at +/-pi is
    evaluated consistently (the operator itself is validated against np.fft)."""
    aw1, ab1, aw2, ab2, pw1, pb1, pw2, pb2, pw, pb = params
    n, c, h, w = x.shape
    s = h * w

    def conv1x1(v, wt, bt):
        return (jnp.einsum('oc,nchw->nohw', wt.reshape(c, c), v, precision=_PREC)
                + bt.reshape(1, c, 1, 1))

    def fuse(v, w1, b1, w2, b2):
        u = conv1x1(v, w1, b1)
        u = jnp.where(u >= 0.0, u, _LEAKY_SLOPE * u)
        return conv1x1(u, w2, b2)

    xr = x.reshape(n * c, s).astype(jnp.bfloat16)
    fr = jnp.dot(xr, ktr_bf, preferred_element_type=jnp.float32).reshape(n, c, h, w)
    fi = jnp.dot(xr, kti_bf, preferred_element_type=jnp.float32).reshape(n, c, h, w)
    mag = jnp.sqrt(fr * fr + fi * fi)
    pha = jnp.arctan2(fi, fr)

    Mag = fuse(mag, aw1, ab1, aw2, ab2)
    Pha = fuse(pha, pw1, pb1, pw2, pb2)
    ampf = jnp.repeat(jnp.repeat(Mag, 2, axis=2), 2, axis=3)
    phaf = jnp.repeat(jnp.repeat(Pha, 2, axis=2), 2, axis=3)
    out = jnp.abs(jnp.fft.ifft2(lax.complex(ampf * jnp.cos(phaf),
                                            ampf * jnp.sin(phaf))))   # (n,c,2h,2w)

    top = jnp.concatenate([out[..., :h // 2, :w // 2], out[..., :h // 2, 3 * w // 2:]], axis=-1)
    bot = jnp.concatenate([out[..., 3 * h // 2:, :w // 2], out[..., 3 * h // 2:, 3 * w // 2:]], axis=-1)
    crop = jnp.concatenate([top, bot], axis=-2)                       # (n,c,h,w)
    crop = jnp.repeat(jnp.repeat(crop, 2, axis=2), 2, axis=3)         # F.interpolate nearest x2
    return conv1x1(crop, pw, pb)


if __name__ == "__main__":
    key = jax.random.PRNGKey(0)
    N, C, H, W = 2, 4, 16, 16
    keys = jax.random.split(key, 13)
    x = jax.random.normal(keys[0], (N, C, H, W), jnp.float32)

    conv_w = lambda k: 0.2 * jax.random.normal(k, (C, C, 1, 1), jnp.float32)
    conv_b = lambda k: 0.1 * jax.random.normal(k, (C,), jnp.float32)
    params = (conv_w(keys[1]), conv_b(keys[2]),    # amp_fuse conv1
              conv_w(keys[3]), conv_b(keys[4]),    # amp_fuse conv2
              conv_w(keys[5]), conv_b(keys[6]),    # pha_fuse conv1
              conv_w(keys[7]), conv_b(keys[8]),    # pha_fuse conv2
              conv_w(keys[9]), conv_b(keys[10]))   # post

    ktr32, kti32 = _dft2_matrix_t(H, W)
    etr32, eti32 = _inter_idft_crop_matrix_t(H, W)

    # sanity: dense forward-DFT operator matches np.fft.fft2
    x_np = np.asarray(x, np.float64)
    f_mat = (x_np.reshape(N * C, -1)
             @ (ktr32.astype(np.complex128) + 1j * kti32)).reshape(N, C, H, W)
    f_ref = np.fft.fft2(x_np)
    assert np.max(np.abs(f_mat - f_ref)) / np.max(np.abs(f_ref)) < 1e-3

    # sanity: fused repeat_interleave(2,2)+ifft2+crop operator matches the literal path
    z_np = (np.asarray(jax.random.normal(keys[11], (N, C, H, W), jnp.float32), np.float64)
            + 1j * np.asarray(jax.random.normal(keys[12], (N, C, H, W), jnp.float32), np.float64))
    zup = np.repeat(np.repeat(z_np, 2, axis=2), 2, axis=3)
    full = np.fft.ifft2(zup)
    top = np.concatenate([full[..., :H // 2, :W // 2], full[..., :H // 2, 3 * W // 2:]], axis=-1)
    bot = np.concatenate([full[..., 3 * H // 2:, :W // 2], full[..., 3 * H // 2:, 3 * W // 2:]], axis=-1)
    lit = np.concatenate([top, bot], axis=-2)
    mat = (z_np.reshape(N * C, -1)
           @ (etr32.astype(np.complex128) + 1j * eti32)).reshape(N, C, H, W)
    assert np.max(np.abs(lit - mat)) / np.max(np.abs(lit)) < 1e-3

    out = jax.block_until_ready(freup_inter_forward(x, params))
    assert out.shape == (N, C, 2 * H, 2 * W), out.shape

    ref = jax.block_until_ready(
        freup_inter_reference(x, params,
                              jnp.asarray(ktr32, jnp.bfloat16),
                              jnp.asarray(kti32, jnp.bfloat16)))
    rel_err = float(jnp.max(jnp.abs(out - ref)) / (jnp.max(jnp.abs(ref)) + 1e-8))
    assert rel_err < 2e-2, f"kernel/reference mismatch, rel_err={rel_err}"
    print("KERNEL_OK")
</pallas_src>

<mosaic_0001>
module attributes {stable_mosaic.version = 11 : i64} {
  func.func @_freup_inter_kernel(%arg0: i32, %arg1: memref<8x256xbf16, #tpu.memory_space<vmem>>, %arg2: memref<256x512xbf16, #tpu.memory_space<vmem>>, %arg3: memref<256x512xbf16, #tpu.memory_space<vmem>>, %arg4: memref<8x8xf32, #tpu.memory_space<vmem>>, %arg5: memref<8x1xf32, #tpu.memory_space<vmem>>, %arg6: memref<8x8xf32, #tpu.memory_space<vmem>>, %arg7: memref<8x1xf32, #tpu.memory_space<vmem>>, %arg8: memref<8x8xf32, #tpu.memory_space<vmem>>, %arg9: memref<8x1xf32, #tpu.memory_space<vmem>>, %arg10: memref<8x8xf32, #tpu.memory_space<vmem>>, %arg11: memref<8x1xf32, #tpu.memory_space<vmem>>, %arg12: memref<8x8xf32, #tpu.memory_space<vmem>>, %arg13: memref<8x1xf32, #tpu.memory_space<vmem>>, %arg14: memref<8x256xf32, #tpu.memory_space<vmem>>) attributes {dimension_semantics = [#tpu.dimension_semantics<parallel>], iteration_bounds = array<i64: 1>, scalar_prefetch = 0 : i64, scratch_operands = 0 : i64, tpu.core_type = #tpu.core_type<tc>, window_params = [{transform_indices = @transform_0, window_bounds = array<i64: 8, 256>}, {pipeline_mode = #tpu.pipeline_mode<synchronous>, transform_indices = @transform_1, window_bounds = array<i64: 256, 512>}, {pipeline_mode = #tpu.pipeline_mode<synchronous>, transform_indices = @transform_2, window_bounds = array<i64: 256, 512>}, {pipeline_mode = #tpu.pipeline_mode<synchronous>, transform_indices = @transform_3, window_bounds = array<i64: 8, 8>}, {pipeline_mode = #tpu.pipeline_mode<synchronous>, transform_indices = @transform_4, window_bounds = array<i64: 8, 1>}, {pipeline_mode = #tpu.pipeline_mode<synchronous>, transform_indices = @transform_5, window_bounds = array<i64: 8, 8>}, {pipeline_mode = #tpu.pipeline_mode<synchronous>, transform_indices = @transform_6, window_bounds = array<i64: 8, 1>}, {pipeline_mode = #tpu.pipeline_mode<synchronous>, transform_indices = @transform_7, window_bounds = array<i64: 8, 8>}, {pipeline_mode = #tpu.pipeline_mode<synchronous>, transform_indices = @transform_8, window_bounds = array<i64: 8, 1>}, {pipeline_mode = #tpu.pipeline_mode<synchronous>, transform_indices = @transform_9, window_bounds = array<i64: 8, 8>}, {pipeline_mode = #tpu.pipeline_mode<synchronous>, transform_indices = @transform_10, window_bounds = array<i64: 8, 1>}, {pipeline_mode = #tpu.pipeline_mode<synchronous>, transform_indices = @transform_11, window_bounds = array<i64: 8, 8>}, {pipeline_mode = #tpu.pipeline_mode<synchronous>, transform_indices = @transform_12, window_bounds = array<i64: 8, 1>}, {transform_indices = @transform_13, window_bounds = array<i64: 8, 256>}]} {
    %c0 = arith.constant 0 : index
    %c0_0 = arith.constant 0 : index
    %0 = vector.load %arg1[%c0, %c0_0] : memref<8x256xbf16, #tpu.memory_space<vmem>>, vector<8x256xbf16>
    %c0_1 = arith.constant 0 : index
    %c0_2 = arith.constant 0 : index
    %1 = vector.load %arg2[%c0_1, %c0_2] : memref<256x512xbf16, #tpu.memory_space<vmem>>, vector<256x512xbf16>
    %cst = arith.constant dense<0.000000e+00> : vector<8x512xf32>
    %2 = tpu.matmul %0, %1, %cst {dimension_numbers = #tpu.dot_dimension_numbers<[1], [0], [0], [1], [0, 0, 1, 1], [], []>} : vector<8x256xbf16>, vector<256x512xbf16>, vector<8x512xf32> -> vector<8x512xf32>
    %3 = vector.extract_strided_slice %2 {offsets = [0, 0], sizes = [8, 256], strides = [1, 1]} : vector<8x512xf32> to vector<8x256xf32>
    %4 = vector.extract_strided_slice %2 {offsets = [0, 256], sizes = [8, 256], strides = [1, 1]} : vector<8x512xf32> to vector<8x256xf32>
    %5 = arith.mulf %3, %3 : vector<8x256xf32>
    %6 = arith.mulf %4, %4 : vector<8x256xf32>
    %7 = arith.addf %5, %6 : vector<8x256xf32>
    %8 = math.sqrt %7 : vector<8x256xf32>
    %9 = math.absf %3 : vector<8x256xf32>
    %10 = math.absf %4 : vector<8x256xf32>
    %11 = arith.cmpf ogt, %10, %9 : vector<8x256xf32>
    %12 = arith.select %11, %9, %10 : vector<8x256xi1>, vector<8x256xf32>
    %13 = arith.select %11, %10, %9 : vector<8x256xi1>, vector<8x256xf32>
    %cst_3 = arith.constant 0.000000e+00 : f32
    %14 = vector.broadcast %cst_3 : f32 to vector<8x256xf32>
    %15 = arith.cmpf oeq, %13, %14 : vector<8x256xf32>
    %cst_4 = arith.constant 1.000000e+00 : f32
    %16 = vector.broadcast %cst_4 : f32 to vector<8x256xf32>
    %17 = arith.select %15, %16, %13 : vector<8x256xi1>, vector<8x256xf32>
    %18 = arith.divf %12, %17 : vector<8x256xf32>
    %cst_5 = arith.constant 0.414213568 : f32
    %19 = vector.broadcast %cst_5 : f32 to vector<8x256xf32>
    %20 = arith.cmpf ogt, %18, %19 : vector<8x256xf32>
    %cst_6 = arith.constant 1.000000e+00 : f32
    %21 = vector.broadcast %cst_6 : f32 to vector<8x256xf32>
    %22 = arith.subf %18, %21 : vector<8x256xf32>
    %cst_7 = arith.constant 1.000000e+00 : f32
    %23 = vector.broadcast %cst_7 : f32 to vector<8x256xf32>
    %24 = arith.addf %18, %23 : vector<8x256xf32>
    %25 = arith.divf %22, %24 : vector<8x256xf32>
    %26 = arith.select %20, %25, %18 : vector<8x256xi1>, vector<8x256xf32>
    %cst_8 = arith.constant 3.14159274 : f32
    %cst_9 = arith.constant 4.000000e+00 : f32
    %27 = arith.divf %cst_8, %cst_9 : f32
    %cst_10 = arith.constant 0.000000e+00 : f32
    %28 = vector.broadcast %27 : f32 to vector<8x256xf32>
    %29 = vector.broadcast %cst_10 : f32 to vector<8x256xf32>
    %30 = arith.select %20, %28, %29 : vector<8x256xi1>, vector<8x256xf32>
    %31 = arith.mulf %26, %26 : vector<8x256xf32>
    %cst_11 = arith.constant 0.0805374458 : f32
    %32 = vector.broadcast %cst_11 : f32 to vector<8x256xf32>
    %33 = arith.mulf %32, %31 : vector<8x256xf32>
    %cst_12 = arith.constant 0.138776854 : f32
    %34 = vector.broadcast %cst_12 : f32 to vector<8x256xf32>
    %35 = arith.subf %33, %34 : vector<8x256xf32>
    %36 = arith.mulf %35, %31 : vector<8x256xf32>
    %cst_13 = arith.constant 0.199777111 : f32
    %37 = vector.broadcast %cst_13 : f32 to vector<8x256xf32>
    %38 = arith.addf %36, %37 : vector<8x256xf32>
    %39 = arith.mulf %38, %31 : vector<8x256xf32>
    %cst_14 = arith.constant 0.333329499 : f32
    %40 = vector.broadcast %cst_14 : f32 to vector<8x256xf32>
    %41 = arith.subf %39, %40 : vector<8x256xf32>
    %42 = arith.addf %30, %26 : vector<8x256xf32>
    %43 = arith.mulf %26, %31 : vector<8x256xf32>
    %44 = arith.mulf %43, %41 : vector<8x256xf32>
    %45 = arith.addf %42, %44 : vector<8x256xf32>
    %cst_15 = arith.constant 3.14159274 : f32
    %cst_16 = arith.constant 2.000000e+00 : f32
    %46 = arith.divf %cst_15, %cst_16 : f32
    %47 = vector.broadcast %46 : f32 to vector<8x256xf32>
    %48 = arith.subf %47, %45 : vector<8x256xf32>
    %49 = arith.select %11, %48, %45 : vector<8x256xi1>, vector<8x256xf32>
    %cst_17 = arith.constant 0.000000e+00 : f32
    %50 = vector.broadcast %cst_17 : f32 to vector<8x256xf32>
    %51 = arith.cmpf olt, %3, %50 : vector<8x256xf32>
    %cst_18 = arith.constant 3.14159274 : f32
    %52 = vector.broadcast %cst_18 : f32 to vector<8x256xf32>
    %53 = arith.subf %52, %49 : vector<8x256xf32>
    %54 = arith.select %51, %53, %49 : vector<8x256xi1>, vector<8x256xf32>
    %cst_19 = arith.constant 0.000000e+00 : f32
    %55 = vector.broadcast %cst_19 : f32 to vector<8x256xf32>
    %56 = arith.cmpf olt, %4, %55 : vector<8x256xf32>
    %cst_20 = arith.constant 0.000000e+00 : f32
    %57 = vector.broadcast %cst_20 : f32 to vector<8x256xf32>
    %58 = arith.subf %57, %54 : vector<8x256xf32>
    %59 = arith.select %56, %58, %54 : vector<8x256xi1>, vector<8x256xf32>
    %c0_21 = arith.constant 0 : index
    %c0_22 = arith.constant 0 : index
    %60 = vector.load %arg4[%c0_21, %c0_22] : memref<8x8xf32, #tpu.memory_space<vmem>>, vector<8x8xf32>
    %c0_23 = arith.constant 0 : index
    %c0_24 = arith.constant 0 : index
    %61 = vector.load %arg5[%c0_23, %c0_24] : memref<8x1xf32, #tpu.memory_space<vmem>>, vector<8x1xf32>
    %c0_25 = arith.constant 0 : index
    %c0_26 = arith.constant 0 : index
    %62 = vector.load %arg6[%c0_25, %c0_26] : memref<8x8xf32, #tpu.memory_space<vmem>>, vector<8x8xf32>
    %c0_27 = arith.constant 0 : index
    %c0_28 = arith.constant 0 : index
    %63 = vector.load %arg7[%c0_27, %c0_28] : memref<8x1xf32, #tpu.memory_space<vmem>>, vector<8x1xf32>
    %cst_29 = arith.constant dense<0.000000e+00> : vector<8x256xf32>
    %64 = tpu.matmul %60, %8, %cst_29 {dimension_numbers = #tpu.dot_dimension_numbers<[1], [0], [0], [1], [0, 0, 1, 1], [], []>, precision = #tpu.contract_precision<fp32>} : vector<8x8xf32>, vector<8x256xf32>, vector<8x256xf32> -> vector<8x256xf32>
    %65 = vector.broadcast %61 : vector<8x1xf32> to vector<8x256xf32>
    %66 = arith.addf %64, %65 : vector<8x256xf32>
    %cst_30 = arith.constant 0.000000e+00 : f32
    %67 = vector.broadcast %cst_30 : f32 to vector<8x256xf32>
    %68 = arith.cmpf oge, %66, %67 : vector<8x256xf32>
    %cst_31 = arith.constant 1.000000e-01 : f32
    %69 = vector.broadcast %cst_31 : f32 to vector<8x256xf32>
    %70 = arith.mulf %69, %66 : vector<8x256xf32>
    %71 = arith.select %68, %66, %70 : vector<8x256xi1>, vector<8x256xf32>
    %cst_32 = arith.constant dense<0.000000e+00> : vector<8x256xf32>
    %72 = tpu.matmul %62, %71, %cst_32 {dimension_numbers = #tpu.dot_dimension_numbers<[1], [0], [0], [1], [0, 0, 1, 1], [], []>, precision = #tpu.contract_precision<fp32>} : vector<8x8xf32>, vector<8x256xf32>, vector<8x256xf32> -> vector<8x256xf32>
    %73 = vector.broadcast %63 : vector<8x1xf32> to vector<8x256xf32>
    %74 = arith.addf %72, %73 : vector<8x256xf32>
    %c0_33 = arith.constant 0 : index
    %c0_34 = arith.constant 0 : index
    %75 = vector.load %arg8[%c0_33, %c0_34] : memref<8x8xf32, #tpu.memory_space<vmem>>, vector<8x8xf32>
    %c0_35 = arith.constant 0 : index
    %c0_36 = arith.constant 0 : index
    %76 = vector.load %arg9[%c0_35, %c0_36] : memref<8x1xf32, #tpu.memory_space<vmem>>, vector<8x1xf32>
    %c0_37 = arith.constant 0 : index
    %c0_38 = arith.constant 0 : index
    %77 = vector.load %arg10[%c0_37, %c0_38] : memref<8x8xf32, #tpu.memory_space<vmem>>, vector<8x8xf32>
    %c0_39 = arith.constant 0 : index
    %c0_40 = arith.constant 0 : index
    %78 = vector.load %arg11[%c0_39, %c0_40] : memref<8x1xf32, #tpu.memory_space<vmem>>, vector<8x1xf32>
    %cst_41 = arith.constant dense<0.000000e+00> : vector<8x256xf32>
    %79 = tpu.matmul %75, %59, %cst_41 {dimension_numbers = #tpu.dot_dimension_numbers<[1], [0], [0], [1], [0, 0, 1, 1], [], []>, precision = #tpu.contract_precision<fp32>} : vector<8x8xf32>, vector<8x256xf32>, vector<8x256xf32> -> vector<8x256xf32>
    %80 = vector.broadcast %76 : vector<8x1xf32> to vector<8x256xf32>
    %81 = arith.addf %79, %80 : vector<8x256xf32>
    %cst_42 = arith.constant 0.000000e+00 : f32
    %82 = vector.broadcast %cst_42 : f32 to vector<8x256xf32>
    %83 = arith.cmpf oge, %81, %82 : vector<8x256xf32>
    %cst_43 = arith.constant 1.000000e-01 : f32
    %84 = vector.broadcast %cst_43 : f32 to vector<8x256xf32>
    %85 = arith.mulf %84, %81 : vector<8x256xf32>
    %86 = arith.select %83, %81, %85 : vector<8x256xi1>, vector<8x256xf32>
    %cst_44 = arith.constant dense<0.000000e+00> : vector<8x256xf32>
    %87 = tpu.matmul %77, %86, %cst_44 {dimension_numbers = #tpu.dot_dimension_numbers<[1], [0], [0], [1], [0, 0, 1, 1], [], []>, precision = #tpu.contract_precision<fp32>} : vector<8x8xf32>, vector<8x256xf32>, vector<8x256xf32> -> vector<8x256xf32>
    %88 = vector.broadcast %78 : vector<8x1xf32> to vector<8x256xf32>
    %89 = arith.addf %87, %88 : vector<8x256xf32>
    %90 = math.cos %89 : vector<8x256xf32>
    %91 = arith.mulf %74, %90 : vector<8x256xf32>
    %92 = arith.truncf %91 : vector<8x256xf32> to vector<8x256xbf16>
    %93 = math.sin %89 : vector<8x256xf32>
    %94 = arith.mulf %74, %93 : vector<8x256xf32>
    %95 = arith.truncf %94 : vector<8x256xf32> to vector<8x256xbf16>
    %c0_45 = arith.constant 0 : index
    %c0_46 = arith.constant 0 : index
    %96 = vector.load %arg3[%c0_45, %c0_46] : memref<256x512xbf16, #tpu.memory_space<vmem>>, vector<256x512xbf16>
    %cst_47 = arith.constant dense<0.000000e+00> : vector<8x512xf32>
    %97 = tpu.matmul %92, %96, %cst_47 {dimension_numbers = #tpu.dot_dimension_numbers<[1], [0], [0], [1], [0, 0, 1, 1], [], []>} : vector<8x256xbf16>, vector<256x512xbf16>, vector<8x512xf32> -> vector<8x512xf32>
    %c0_48 = arith.constant 0 : index
    %c0_49 = arith.constant 0 : index
    %98 = vector.load %arg3[%c0_48, %c0_49] : memref<256x512xbf16, #tpu.memory_space<vmem>>, vector<256x512xbf16>
    %cst_50 = arith.constant dense<0.000000e+00> : vector<8x512xf32>
    %99 = tpu.matmul %95, %98, %cst_50 {dimension_numbers = #tpu.dot_dimension_numbers<[1], [0], [0], [1], [0, 0, 1, 1], [], []>} : vector<8x256xbf16>, vector<256x512xbf16>, vector<8x512xf32> -> vector<8x512xf32>
    %100 = vector.extract_strided_slice %97 {offsets = [0, 0], sizes = [8, 256], strides = [1, 1]} : vector<8x512xf32> to vector<8x256xf32>
    %101 = vector.extract_strided_slice %99 {offsets = [0, 256], sizes = [8, 256], strides = [1, 1]} : vector<8x512xf32> to vector<8x256xf32>
    %102 = arith.subf %100, %101 : vector<8x256xf32>
    %103 = vector.extract_strided_slice %97 {offsets = [0, 256], sizes = [8, 256], strides = [1, 1]} : vector<8x512xf32> to vector<8x256xf32>
    %104 = vector.extract_strided_slice %99 {offsets = [0, 0], sizes = [8, 256], strides = [1, 1]} : vector<8x512xf32> to vector<8x256xf32>
    %105 = arith.addf %103, %104 : vector<8x256xf32>
    %106 = arith.mulf %102, %102 : vector<8x256xf32>
    %107 = arith.mulf %105, %105 : vector<8x256xf32>
    %108 = arith.addf %106, %107 : vector<8x256xf32>
    %109 = math.sqrt %108 : vector<8x256xf32>
    %c0_51 = arith.constant 0 : index
    %c0_52 = arith.constant 0 : index
    %110 = vector.load %arg12[%c0_51, %c0_52] : memref<8x8xf32, #tpu.memory_space<vmem>>, vector<8x8xf32>
    %cst_53 = arith.constant dense<0.000000e+00> : vector<8x256xf32>
    %111 = tpu.matmul %110, %109, %cst_53 {dimension_numbers = #tpu.dot_dimension_numbers<[1], [0], [0], [1], [0, 0, 1, 1], [], []>, precision = #tpu.contract_precision<fp32>} : vector<8x8xf32>, vector<8x256xf32>, vector<8x256xf32> -> vector<8x256xf32>
    %c0_54 = arith.constant 0 : index
    %c0_55 = arith.constant 0 : index
    %112 = vector.load %arg13[%c0_54, %c0_55] : memref<8x1xf32, #tpu.memory_space<vmem>>, vector<8x1xf32>
    %113 = vector.broadcast %112 : vector<8x1xf32> to vector<8x256xf32>
    %114 = arith.addf %111, %113 : vector<8x256xf32>
    %c0_56 = arith.constant 0 : index
    %c0_57 = arith.constant 0 : index
    %115 = vector.load %arg14[%c0_56, %c0_57] : memref<8x256xf32, #tpu.memory_space<vmem>>, vector<8x256xf32>
    tpu.vector_store %arg14[%c0_56, %c0_57], %114 {strides = array<i32>} : memref<8x256xf32, #tpu.memory_space<vmem>>, vector<8x256xf32>,
    return
  }
  func.func @transform_0(%arg0: i32) -> (i32, i32) {
    %c0_i32 = arith.constant 0 : i32
    %c0_i32_0 = arith.constant 0 : i32
    return %arg0, %c0_i32 : i32, i32
  }
  func.func @transform_1(%arg0: i32) -> (i32, i32) {
    %c0_i32 = arith.constant 0 : i32
    %c0_i32_0 = arith.constant 0 : i32
    %c0_i32_1 = arith.constant 0 : i32
    return %c0_i32, %c0_i32_0 : i32, i32
  }
  func.func @transform_2(%arg0: i32) -> (i32, i32) {
    %c0_i32 = arith.constant 0 : i32
    %c0_i32_0 = arith.constant 0 : i32
    %c0_i32_1 = arith.constant 0 : i32
    return %c0_i32, %c0_i32_0 : i32, i32
  }
  func.func @transform_3(%arg0: i32) -> (i32, i32) {
    %c0_i32 = arith.constant 0 : i32
    %c0_i32_0 = arith.constant 0 : i32
    %c0_i32_1 = arith.constant 0 : i32
    return %c0_i32, %c0_i32_0 : i32, i32
  }
  func.func @transform_4(%arg0: i32) -> (i32, i32) {
    %c0_i32 = arith.constant 0 : i32
    %c0_i32_0 = arith.constant 0 : i32
    %c0_i32_1 = arith.constant 0 : i32
    return %c0_i32, %c0_i32_0 : i32, i32
  }
  func.func @transform_5(%arg0: i32) -> (i32, i32) {
    %c0_i32 = arith.constant 0 : i32
    %c0_i32_0 = arith.constant 0 : i32
    %c0_i32_1 = arith.constant 0 : i32
    return %c0_i32, %c0_i32_0 : i32, i32
  }
  func.func @transform_6(%arg0: i32) -> (i32, i32) {
    %c0_i32 = arith.constant 0 : i32
    %c0_i32_0 = arith.constant 0 : i32
    %c0_i32_1 = arith.constant 0 : i32
    return %c0_i32, %c0_i32_0 : i32, i32
  }
  func.func @transform_7(%arg0: i32) -> (i32, i32) {
    %c0_i32 = arith.constant 0 : i32
    %c0_i32_0 = arith.constant 0 : i32
    %c0_i32_1 = arith.constant 0 : i32
    return %c0_i32, %c0_i32_0 : i32, i32
  }
  func.func @transform_8(%arg0: i32) -> (i32, i32) {
    %c0_i32 = arith.constant 0 : i32
    %c0_i32_0 = arith.constant 0 : i32
    %c0_i32_1 = arith.constant 0 : i32
    return %c0_i32, %c0_i32_0 : i32, i32
  }
  func.func @transform_9(%arg0: i32) -> (i32, i32) {
    %c0_i32 = arith.constant 0 : i32
    %c0_i32_0 = arith.constant 0 : i32
    %c0_i32_1 = arith.constant 0 : i32
    return %c0_i32, %c0_i32_0 : i32, i32
  }
  func.func @transform_10(%arg0: i32) -> (i32, i32) {
    %c0_i32 = arith.constant 0 : i32
    %c0_i32_0 = arith.constant 0 : i32
    %c0_i32_1 = arith.constant 0 : i32
    return %c0_i32, %c0_i32_0 : i32, i32
  }
  func.func @transform_11(%arg0: i32) -> (i32, i32) {
    %c0_i32 = arith.constant 0 : i32
    %c0_i32_0 = arith.constant 0 : i32
    %c0_i32_1 = arith.constant 0 : i32
    return %c0_i32, %c0_i32_0 : i32, i32
  }
  func.func @transform_12(%arg0: i32) -> (i32, i32) {
    %c0_i32 = arith.constant 0 : i32
    %c0_i32_0 = arith.constant 0 : i32
    %c0_i32_1 = arith.constant 0 : i32
    return %c0_i32, %c0_i32_0 : i32, i32
  }
  func.func @transform_13(%arg0: i32) -> (i32, i32) {
    %c0_i32 = arith.constant 0 : i32
    %c0_i32_0 = arith.constant 0 : i32
    return %arg0, %c0_i32 : i32, i32
  }
}

</mosaic_0001>

<llo_original>
// kernel: tpu_custom_call.1
$region0: #{tpu_custom_call.1}
  #allocation0 [shape = 'u32[]', space=smem, size = 0x4, offset = 0x4, fixed_abs, tag = 'smem constant byte address 0x4 - core index']
  #allocation1 [shape = 'u32[72,128]{1,0:T(1,128)}', space=vmem, size = 0x9000, scoped, tag = 'internal scratch']
  %s0 = inlined_call_operand.vmem [shape: bf16[8,256], index: 0, kind: input, shape index: {}]
  %s1 = inlined_call_operand.hbm [shape: bf16[256,512], index: 1, kind: input, shape index: {}]
  %s2 = inlined_call_operand.hbm [shape: bf16[256,512], index: 2, kind: input, shape index: {}]
  %s3 = inlined_call_operand.vmem [shape: f32[8,8], index: 3, kind: input, shape index: {}]
  %s4 = inlined_call_operand.vmem [shape: f32[8,1], index: 4, kind: input, shape index: {}]
  %s5 = inlined_call_operand.vmem [shape: f32[8,8], index: 5, kind: input, shape index: {}]
  %s6 = inlined_call_operand.vmem [shape: f32[8,1], index: 6, kind: input, shape index: {}]
  %s7 = inlined_call_operand.vmem [shape: f32[8,8], index: 7, kind: input, shape index: {}]
  %s8 = inlined_call_operand.vmem [shape: f32[8,1], index: 8, kind: input, shape index: {}]
  %s9 = inlined_call_operand.vmem [shape: f32[8,8], index: 9, kind: input, shape index: {}]
  %s10 = inlined_call_operand.vmem [shape: f32[8,1], index: 10, kind: input, shape index: {}]
  %s11 = inlined_call_operand.vmem [shape: f32[8,8], index: 11, kind: input, shape index: {}]
  %s12 = inlined_call_operand.vmem [shape: f32[8,1], index: 12, kind: input, shape index: {}]
  %s13 = inlined_call_operand.hbm [shape: f32[8,256], index: 13, kind: output, shape index: {}]
  %s14 = sld [smem:[#allocation0]]
  $region70: #{tpu_custom_call.1} parent=0
    _
  %s16 = ssub.s32 1, %s14
  %s17 = scalar_select 0, %s16, %s14
  $region1: #{tpu_custom_call.1} parent=0
    #allocation2 [shape = 'u8[262144]{0}', space=vmem, size = 0x40000, scoped, tag = 'input window, operand 1, single buffered']
    #allocation3 [shape = 's32[1]{0}', space=sflag, size = 0x4, scoped, tag = 'scoped memory for tpu_custom_call.1']
    #allocation4 [shape = 's32[1]{0}', space=sflag, size = 0x4, scoped, tag = 'scoped memory for tpu_custom_call.1']
    #allocation5 [shape = 'u8[262144]{0}', space=vmem, size = 0x40000, scoped, tag = 'input window, operand 2, single buffered']
    #allocation6 [shape = 's32[1]{0}', space=sflag, size = 0x4, scoped, tag = 'scoped memory for tpu_custom_call.1']
    #allocation7 [shape = 'u8[8192]{0}', space=vmem, size = 0x2000, scoped, tag = 'output window, operand 0, single buffered']
    %18 = vsyncpa [#allocation3], 0
    %19 = vsyncpa [#allocation6], 0
    %20 = vsyncpa [#allocation4], 0
    // Predicated region
    $region2: #{tpu_custom_call.1} parent=1 // pred_check
      _
    $region3: #{tpu_custom_call.1} parent=1 // pred_check_branch
      %22 = sbr.rel (0) target = $region5
    $region4: #{tpu_custom_call.1} parent=1 // pred_region
      _
    $region5: #{tpu_custom_call.1} parent=1 // pred_fallthru
      _
    // Predicated region
    $region6: #{tpu_custom_call.1} parent=1 // pred_check
      _
    $region7: #{tpu_custom_call.1} parent=1 // pred_check_branch
      %24 = sbr.rel (0) target = $region9
    $region8: #{tpu_custom_call.1} parent=1 // pred_region
      %26 = vsyncadd [#allocation3], 0
      %s27 = sshll.u32 %s1, 4
      %s28 = int_to_ptr.hbm [resolvable:$true] %s27
      %s29 = sshll.u32 [#allocation2], 4
      %s30 = int_to_ptr.vmem [resolvable:$true] %s29
      %35 = dma.hbm_to_vmem [thread:$0]  %s28, 8192, %s30, [#allocation3], 256, 256, 16
    $region9: #{tpu_custom_call.1} parent=1 // pred_fallthru
      _
    // Predicated region
    $region10: #{tpu_custom_call.1} parent=1 // pred_check
      _
    $region11: #{tpu_custom_call.1} parent=1 // pred_check_branch
      %37 = sbr.rel (0) target = $region13
    $region12: #{tpu_custom_call.1} parent=1 // pred_region
      %39 = vsyncadd [#allocation6], 0
      %s40 = sshll.u32 %s2, 4
      %s41 = int_to_ptr.hbm [resolvable:$true] %s40
      %s42 = sshll.u32 [#allocation5], 4
      %s43 = int_to_ptr.vmem [resolvable:$true] %s42
      %48 = dma.hbm_to_vmem [thread:$0]  %s41, 8192, %s43, [#allocation6], 256, 256, 16
    $region13: #{tpu_custom_call.1} parent=1 // pred_fallthru
      _
    // Predicated region
    $region14: #{tpu_custom_call.1} parent=1 // pred_check
      _
    $region15: #{tpu_custom_call.1} parent=1 // pred_check_branch
      %50 = sbr.rel (0) target = $region17
    $region16: #{tpu_custom_call.1} parent=1 // pred_region
      _
    $region17: #{tpu_custom_call.1} parent=1 // pred_fallthru
      _
    // Predicated region
    $region18: #{tpu_custom_call.1} parent=1 // pred_check
      _
    $region19: #{tpu_custom_call.1} parent=1 // pred_check_branch
      %52 = sbr.rel (0) target = $region21
    $region20: #{tpu_custom_call.1} parent=1 // pred_region
      _
    $region21: #{tpu_custom_call.1} parent=1 // pred_fallthru
      _
    // Predicated region
    $region22: #{tpu_custom_call.1} parent=1 // pred_check
      _
    $region23: #{tpu_custom_call.1} parent=1 // pred_check_branch
      %54 = sbr.rel (0) target = $region25
    $region24: #{tpu_custom_call.1} parent=1 // pred_region
      _
    $region25: #{tpu_custom_call.1} parent=1 // pred_fallthru
      _
    // Predicated region
    $region26: #{tpu_custom_call.1} parent=1 // pred_check
      _
    $region27: #{tpu_custom_call.1} parent=1 // pred_check_branch
      %56 = sbr.rel (0) target = $region29
    $region28: #{tpu_custom_call.1} parent=1 // pred_region
      _
    $region29: #{tpu_custom_call.1} parent=1 // pred_fallthru
      _
    // Predicated region
    $region30: #{tpu_custom_call.1} parent=1 // pred_check
      _
    $region31: #{tpu_custom_call.1} parent=1 // pred_check_branch
      %58 = sbr.rel (0) target = $region33
    $region32: #{tpu_custom_call.1} parent=1 // pred_region
      _
    $region33: #{tpu_custom_call.1} parent=1 // pred_fallthru
      _
    // Predicated region
    $region34: #{tpu_custom_call.1} parent=1 // pred_check
      _
    $region35: #{tpu_custom_call.1} parent=1 // pred_check_branch
      %60 = sbr.rel (0) target = $region37
    $region36: #{tpu_custom_call.1} parent=1 // pred_region
      _
    $region37: #{tpu_custom_call.1} parent=1 // pred_fallthru
      _
    // Predicated region
    $region38: #{tpu_custom_call.1} parent=1 // pred_check
      _
    $region39: #{tpu_custom_call.1} parent=1 // pred_check_branch
      %62 = sbr.rel (0) target = $region41
    $region40: #{tpu_custom_call.1} parent=1 // pred_region
      _
    $region41: #{tpu_custom_call.1} parent=1 // pred_fallthru
      _
    // Predicated region
    $region42: #{tpu_custom_call.1} parent=1 // pred_check
      _
    $region43: #{tpu_custom_call.1} parent=1 // pred_check_branch
      %64 = sbr.rel (0) target = $region45
    $region44: #{tpu_custom_call.1} parent=1 // pred_region
      _
    $region45: #{tpu_custom_call.1} parent=1 // pred_fallthru
      _
    // Predicated region
    $region46: #{tpu_custom_call.1} parent=1 // pred_check
      _
    $region47: #{tpu_custom_call.1} parent=1 // pred_check_branch
      %66 = sbr.rel (0) target = $region49
    $region48: #{tpu_custom_call.1} parent=1 // pred_region
      _
    $region49: #{tpu_custom_call.1} parent=1 // pred_fallthru
      _
    // Predicated region
    $region50: #{tpu_custom_call.1} parent=1 // pred_check
      _
    $region51: #{tpu_custom_call.1} parent=1 // pred_check_branch
      %68 = sbr.rel (0) target = $region53
    $region52: #{tpu_custom_call.1} parent=1 // pred_region
      _
    $region53: #{tpu_custom_call.1} parent=1 // pred_fallthru
      _
    // Predicated region
    $region54: #{tpu_custom_call.1} parent=1 // pred_check
      _
    $region55: #{tpu_custom_call.1} parent=1 // pred_check_branch
      %70 = sbr.rel (0) target = $region57
    $region56: #{tpu_custom_call.1} parent=1 // pred_region
      %72 = dma.done [#allocation3], 8192
    $region57: #{tpu_custom_call.1} parent=1 // pred_fallthru
      _
    // Predicated region
    $region58: #{tpu_custom_call.1} parent=1 // pred_check
      _
    $region59: #{tpu_custom_call.1} parent=1 // pred_check_branch
      %74 = sbr.rel (0) target = $region61
    $region60: #{tpu_custom_call.1} parent=1 // pred_region
      %76 = dma.done [#allocation6], 8192
    $region61: #{tpu_custom_call.1} parent=1 // pred_fallthru
      _
    %v77 = vld [vmem:[%s0] sm:$0xff]
    %v78 = vld [vmem:[#allocation2] sm:$0xff]
    %v79 = vld [vmem:[#allocation2 + $0x8] sm:$0xff]
    %v80 = vld [vmem:[#allocation2 + $0x10] sm:$0xff]
    %v81 = vld [vmem:[#allocation2 + $0x18] sm:$0xff]
    %v82 = vld [vmem:[#allocation2 + $0x20] sm:$0xff]
    %v83 = vld [vmem:[#allocation2 + $0x28] sm:$0xff]
    %v84 = vld [vmem:[#allocation2 + $0x30] sm:$0xff]
    %v85 = vld [vmem:[#allocation2 + $0x38] sm:$0xff]
    %v86 = vld [vmem:[#allocation2 + $0x40] sm:$0xff]
    %v87 = vld [vmem:[#allocation2 + $0x48] sm:$0xff]
    %v88 = vld [vmem:[#allocation2 + $0x50] sm:$0xff]
    %v89 = vld [vmem:[#allocation2 + $0x58] sm:$0xff]
    %v90 = vld [vmem:[#allocation2 + $0x60] sm:$0xff]
    %v91 = vld [vmem:[#allocation2 + $0x68] sm:$0xff]
    %v92 = vld [vmem:[#allocation2 + $0x70] sm:$0xff]
    %v93 = vld [vmem:[#allocation2 + $0x78] sm:$0xff]
    %v94 = vld [vmem:[#allocation2 + $0x80] sm:$0xff]
    %v95 = vld [vmem:[#allocation2 + $0x88] sm:$0xff]
    %v96 = vld [vmem:[#allocation2 + $0x90] sm:$0xff]
    %v97 = vld [vmem:[#allocation2 + $0x98] sm:$0xff]
    %v98 = vld [vmem:[#allocation2 + $0xa0] sm:$0xff]
    %v99 = vld [vmem:[#allocation2 + $0xa8] sm:$0xff]
    %v100 = vld [vmem:[#allocation2 + $0xb0] sm:$0xff]
    %v101 = vld [vmem:[#allocation2 + $0xb8] sm:$0xff]
    %v102 = vld [vmem:[#allocation2 + $0xc0] sm:$0xff]
    %v103 = vld [vmem:[#allocation2 + $0xc8] sm:$0xff]
    %v104 = vld [vmem:[#allocation2 + $0xd0] sm:$0xff]
    %v105 = vld [vmem:[#allocation2 + $0xd8] sm:$0xff]
    %v106 = vld [vmem:[#allocation2 + $0xe0] sm:$0xff]
    %v107 = vld [vmem:[#allocation2 + $0xe8] sm:$0xff]
    %v108 = vld [vmem:[#allocation2 + $0xf0] sm:$0xff]
    %v109 = vld [vmem:[#allocation2 + $0xf8] sm:$0xff]
    %v110 = vld [vmem:[#allocation2 + $0x100] sm:$0xff]
    %v111 = vld [vmem:[#allocation2 + $0x108] sm:$0xff]
    %v112 = vld [vmem:[#allocation2 + $0x110] sm:$0xff]
    %v113 = vld [vmem:[#allocation2 + $0x118] sm:$0xff]
    %v114 = vld [vmem:[#allocation2 + $0x120] sm:$0xff]
    %v115 = vld [vmem:[#allocation2 + $0x128] sm:$0xff]
    %v116 = vld [vmem:[#allocation2 + $0x130] sm:$0xff]
    %v117 = vld [vmem:[#allocation2 + $0x138] sm:$0xff]
    %v118 = vld [vmem:[#allocation2 + $0x140] sm:$0xff]
    %v119 = vld [vmem:[#allocation2 + $0x148] sm:$0xff]
    %v120 = vld [vmem:[#allocation2 + $0x150] sm:$0xff]
    %v121 = vld [vmem:[#allocation2 + $0x158] sm:$0xff]
    %v122 = vld [vmem:[#allocation2 + $0x160] sm:$0xff]
    %v123 = vld [vmem:[#allocation2 + $0x168] sm:$0xff]
    %v124 = vld [vmem:[#allocation2 + $0x170] sm:$0xff]
    %v125 = vld [vmem:[#allocation2 + $0x178] sm:$0xff]
    %v126 = vld [vmem:[#allocation2 + $0x180] sm:$0xff]
    %v127 = vld [vmem:[#allocation2 + $0x188] sm:$0xff]
    %v128 = vld [vmem:[#allocation2 + $0x190] sm:$0xff]
    %v129 = vld [vmem:[#allocation2 + $0x198] sm:$0xff]
    %v130 = vld [vmem:[#allocation2 + $0x1a0] sm:$0xff]
    %v131 = vld [vmem:[#allocation2 + $0x1a8] sm:$0xff]
    %v132 = vld [vmem:[#allocation2 + $0x1b0] sm:$0xff]
    %v133 = vld [vmem:[#allocation2 + $0x1b8] sm:$0xff]
    %v134 = vld [vmem:[#allocation2 + $0x1c0] sm:$0xff]
    %v135 = vld [vmem:[#allocation2 + $0x1c8] sm:$0xff]
    %v136 = vld [vmem:[#allocation2 + $0x1d0] sm:$0xff]
    %v137 = vld [vmem:[#allocation2 + $0x1d8] sm:$0xff]
    %v138 = vld [vmem:[#allocation2 + $0x1e0] sm:$0xff]
    %v139 = vld [vmem:[#allocation2 + $0x1e8] sm:$0xff]
    %v140 = vld [vmem:[#allocation2 + $0x1f0] sm:$0xff]
    %v141 = vld [vmem:[#allocation2 + $0x1f8] sm:$0xff]
    %v143 = vunpack.c.l.b16 %v77
    %v144 = vunpack.c.h.b16 %v77
    %v145 = vpack.c.b16 %v143, %v143
    %v146 = vpack.c.b16 %v144, %v144
    %v213 = vunpack.c.l.b16 %v78
    %v214 = vunpack.c.h.b16 %v78
    %v215 = vunpack.c.l.b16 %v79
    %v216 = vunpack.c.h.b16 %v79
    %v217 = vunpack.c.l.b16 %v80
    %v218 = vunpack.c.h.b16 %v80
    %v219 = vunpack.c.l.b16 %v81
    %v220 = vunpack.c.h.b16 %v81
    %v221 = vunpack.c.l.b16 %v82
    %v222 = vunpack.c.h.b16 %v82
    %v223 = vunpack.c.l.b16 %v83
    %v224 = vunpack.c.h.b16 %v83
    %v225 = vunpack.c.l.b16 %v84
    %v226 = vunpack.c.h.b16 %v84
    %v227 = vunpack.c.l.b16 %v85
    %v228 = vunpack.c.h.b16 %v85
    %v229 = vunpack.c.l.b16 %v86
    %v230 = vunpack.c.h.b16 %v86
    %v231 = vunpack.c.l.b16 %v87
    %v232 = vunpack.c.h.b16 %v87
    %v233 = vunpack.c.l.b16 %v88
    %v234 = vunpack.c.h.b16 %v88
    %v235 = vunpack.c.l.b16 %v89
    %v236 = vunpack.c.h.b16 %v89
    %v237 = vunpack.c.l.b16 %v90
    %v238 = vunpack.c.h.b16 %v90
    %v239 = vunpack.c.l.b16 %v91
    %v240 = vunpack.c.h.b16 %v91
    %v241 = vunpack.c.l.b16 %v92
    %v242 = vunpack.c.h.b16 %v92
    %v243 = vunpack.c.l.b16 %v93
    %v244 = vunpack.c.h.b16 %v93
    %v245 = vunpack.c.l.b16 %v94
    %v246 = vunpack.c.h.b16 %v94
    %v247 = vunpack.c.l.b16 %v95
    %v248 = vunpack.c.h.b16 %v95
    %v249 = vunpack.c.l.b16 %v96
    %v250 = vunpack.c.h.b16 %v96
    %v251 = vunpack.c.l.b16 %v97
    %v252 = vunpack.c.h.b16 %v97
    %v253 = vunpack.c.l.b16 %v98
    %v254 = vunpack.c.h.b16 %v98
    %v255 = vunpack.c.l.b16 %v99
    %v256 = vunpack.c.h.b16 %v99
    %v257 = vunpack.c.l.b16 %v100
    %v258 = vunpack.c.h.b16 %v100
    %v259 = vunpack.c.l.b16 %v101
    %v260 = vunpack.c.h.b16 %v101
    %v261 = vunpack.c.l.b16 %v102
    %v262 = vunpack.c.h.b16 %v102
    %v263 = vunpack.c.l.b16 %v103
    %v264 = vunpack.c.h.b16 %v103
    %v265 = vunpack.c.l.b16 %v104
    %v266 = vunpack.c.h.b16 %v104
    %v267 = vunpack.c.l.b16 %v105
    %v268 = vunpack.c.h.b16 %v105
    %v269 = vunpack.c.l.b16 %v106
    %v270 = vunpack.c.h.b16 %v106
    %v271 = vunpack.c.l.b16 %v107
    %v272 = vunpack.c.h.b16 %v107
    %v273 = vunpack.c.l.b16 %v108
    %v274 = vunpack.c.h.b16 %v108
    %v275 = vunpack.c.l.b16 %v109
    %v276 = vunpack.c.h.b16 %v109
    %v277 = vunpack.c.l.b16 %v110
    %v278 = vunpack.c.h.b16 %v110
    %v279 = vunpack.c.l.b16 %v111
    %v280 = vunpack.c.h.b16 %v111
    %v281 = vunpack.c.l.b16 %v112
    %v282 = vunpack.c.h.b16 %v112
    %v283 = vunpack.c.l.b16 %v113
    %v284 = vunpack.c.h.b16 %v113
    %v285 = vunpack.c.l.b16 %v114
    %v286 = vunpack.c.h.b16 %v114
    %v287 = vunpack.c.l.b16 %v115
    %v288 = vunpack.c.h.b16 %v115
    %v289 = vunpack.c.l.b16 %v116
    %v290 = vunpack.c.h.b16 %v116
    %v291 = vunpack.c.l.b16 %v117
    %v292 = vunpack.c.h.b16 %v117
    %v293 = vunpack.c.l.b16 %v118
    %v294 = vunpack.c.h.b16 %v118
    %v295 = vunpack.c.l.b16 %v119
    %v296 = vunpack.c.h.b16 %v119
    %v297 = vunpack.c.l.b16 %v120
    %v298 = vunpack.c.h.b16 %v120
    %v299 = vunpack.c.l.b16 %v121
    %v300 = vunpack.c.h.b16 %v121
    %v301 = vunpack.c.l.b16 %v122
    %v302 = vunpack.c.h.b16 %v122
    %v303 = vunpack.c.l.b16 %v123
    %v304 = vunpack.c.h.b16 %v123
    %v305 = vunpack.c.l.b16 %v124
    %v306 = vunpack.c.h.b16 %v124
    %v307 = vunpack.c.l.b16 %v125
    %v308 = vunpack.c.h.b16 %v125
    %v309 = vunpack.c.l.b16 %v126
    %v310 = vunpack.c.h.b16 %v126
    %v311 = vunpack.c.l.b16 %v127
    %v312 = vunpack.c.h.b16 %v127
    %v313 = vunpack.c.l.b16 %v128
    %v314 = vunpack.c.h.b16 %v128
    %v315 = vunpack.c.l.b16 %v129
    %v316 = vunpack.c.h.b16 %v129
    %v317 = vunpack.c.l.b16 %v130
    %v318 = vunpack.c.h.b16 %v130
    %v319 = vunpack.c.l.b16 %v131
    %v320 = vunpack.c.h.b16 %v131
    %v321 = vunpack.c.l.b16 %v132
    %v322 = vunpack.c.h.b16 %v132
    %v323 = vunpack.c.l.b16 %v133
    %v324 = vunpack.c.h.b16 %v133
    %v325 = vunpack.c.l.b16 %v134
    %v326 = vunpack.c.h.b16 %v134
    %v327 = vunpack.c.l.b16 %v135
    %v328 = vunpack.c.h.b16 %v135
    %v329 = vunpack.c.l.b16 %v136
    %v330 = vunpack.c.h.b16 %v136
    %v331 = vunpack.c.l.b16 %v137
    %v332 = vunpack.c.h.b16 %v137
    %v333 = vunpack.c.l.b16 %v138
    %v334 = vunpack.c.h.b16 %v138
    %v335 = vunpack.c.l.b16 %v139
    %v336 = vunpack.c.h.b16 %v139
    %v337 = vunpack.c.l.b16 %v140
    %v338 = vunpack.c.h.b16 %v140
    %v339 = vunpack.c.l.b16 %v141
    %v340 = vunpack.c.h.b16 %v141
    %v341 = vpack.c.b16 %v217, %v213
    %v342 = vpack.c.b16 %v218, %v214
    %v343 = vpack.c.b16 %v219, %v215
    %v344 = vpack.c.b16 %v220, %v216
    %v345 = vpack.c.b16 %v225, %v221
    %v346 = vpack.c.b16 %v226, %v222
    %v347 = vpack.c.b16 %v227, %v223
    %v348 = vpack.c.b16 %v228, %v224
    %v349 = vpack.c.b16 %v233, %v229
    %v350 = vpack.c.b16 %v234, %v230
    %v351 = vpack.c.b16 %v235, %v231
    %v352 = vpack.c.b16 %v236, %v232
    %v353 = vpack.c.b16 %v241, %v237
    %v354 = vpack.c.b16 %v242, %v238
    %v355 = vpack.c.b16 %v243, %v239
    %v356 = vpack.c.b16 %v244, %v240
    %v357 = vpack.c.b16 %v249, %v245
    %v358 = vpack.c.b16 %v250, %v246
    %v359 = vpack.c.b16 %v251, %v247
    %v360 = vpack.c.b16 %v252, %v248
    %v361 = vpack.c.b16 %v257, %v253
    %v362 = vpack.c.b16 %v258, %v254
    %v363 = vpack.c.b16 %v259, %v255
    %v364 = vpack.c.b16 %v260, %v256
    %v365 = vpack.c.b16 %v265, %v261
    %v366 = vpack.c.b16 %v266, %v262
    %v367 = vpack.c.b16 %v267, %v263
    %v368 = vpack.c.b16 %v268, %v264
    %v369 = vpack.c.b16 %v273, %v269
    %v370 = vpack.c.b16 %v274, %v270
    %v371 = vpack.c.b16 %v275, %v271
    %v372 = vpack.c.b16 %v276, %v272
    %v373 = vpack.c.b16 %v281, %v277
    %v374 = vpack.c.b16 %v282, %v278
    %v375 = vpack.c.b16 %v283, %v279
    %v376 = vpack.c.b16 %v284, %v280
    %v377 = vpack.c.b16 %v289, %v285
    %v378 = vpack.c.b16 %v290, %v286
    %v379 = vpack.c.b16 %v291, %v287
    %v380 = vpack.c.b16 %v292, %v288
    %v381 = vpack.c.b16 %v297, %v293
    %v382 = vpack.c.b16 %v298, %v294
    %v383 = vpack.c.b16 %v299, %v295
    %v384 = vpack.c.b16 %v300, %v296
    %v385 = vpack.c.b16 %v305, %v301
    %v386 = vpack.c.b16 %v306, %v302
    %v387 = vpack.c.b16 %v307, %v303
    %v388 = vpack.c.b16 %v308, %v304
    %v389 = vpack.c.b16 %v313, %v309
    %v390 = vpack.c.b16 %v314, %v310
    %v391 = vpack.c.b16 %v315, %v311
    %v392 = vpack.c.b16 %v316, %v312
    %v393 = vpack.c.b16 %v321, %v317
    %v394 = vpack.c.b16 %v322, %v318
    %v395 = vpack.c.b16 %v323, %v319
    %v396 = vpack.c.b16 %v324, %v320
    %v397 = vpack.c.b16 %v329, %v325
    %v398 = vpack.c.b16 %v330, %v326
    %v399 = vpack.c.b16 %v331, %v327
    %v400 = vpack.c.b16 %v332, %v328
    %v401 = vpack.c.b16 %v337, %v333
    %v402 = vpack.c.b16 %v338, %v334
    %v403 = vpack.c.b16 %v339, %v335
    %v404 = vpack.c.b16 %v340, %v336
    %469 = vmatpush.bf16.msra.mxu0 %v369
    %470 = vmatpush.bf16.msra.mxu0 %v365
    %471 = vmatpush.bf16.msra.mxu0 %v361
    %472 = vmatpush.bf16.msra.mxu0 %v357
    %473 = vmatpush.bf16.msra.mxu0 %v353
    %474 = vmatpush.bf16.msra.mxu0 %v349
    %475 = vmatpush.bf16.msra.mxu0 %v345
    %476 = vmatpush.bf16.msra.mxu0 %v341
    %477 = vmatmul.bf16.gmra.mxu0 %v145
    %v478 = vpop.f32.mrf.mxu0
    %v479 = vadd.f32 0.0, %v478
    %v480 = vpop.f32.mrf.mxu0
    %481 = vdwg.mxu0
    %482 = vmatpush.bf16.msra.mxu0 %v401
    %483 = vmatpush.bf16.msra.mxu0 %v397
    %484 = vmatpush.bf16.msra.mxu0 %v393
    %485 = vmatpush.bf16.msra.mxu0 %v389
    %486 = vmatpush.bf16.msra.mxu0 %v385
    %487 = vmatpush.bf16.msra.mxu0 %v381
    %488 = vmatpush.bf16.msra.mxu0 %v377
    %489 = vmatpush.bf16.msra.mxu0 %v373
    %490 = vmatmul.bf16.gmra.mxu0 %v146
    %v491 = vpop.f32.mrf.mxu0
    %v492 = vadd.f32 %v479, %v491
    %v493 = vpop.f32.mrf.mxu0
    %494 = vdwg.mxu0
    %495 = vmatpush.bf16.msra.mxu0 %v370
    %496 = vmatpush.bf16.msra.mxu0 %v366
    %497 = vmatpush.bf16.msra.mxu0 %v362
    %498 = vmatpush.bf16.msra.mxu0 %v358
    %499 = vmatpush.bf16.msra.mxu0 %v354
    %500 = vmatpush.bf16.msra.mxu0 %v350
    %501 = vmatpush.bf16.msra.mxu0 %v346
    %502 = vmatpush.bf16.msra.mxu0 %v342
    %503 = vmatmul.bf16.gmra.mxu0 %v145
    %v504 = vpop.f32.mrf.mxu0
    %v505 = vadd.f32 0.0, %v504
    %v506 = vpop.f32.mrf.mxu0
    %507 = vdwg.mxu0
    %508 = vmatpush.bf16.msra.mxu0 %v402
    %509 = vmatpush.bf16.msra.mxu0 %v398
    %510 = vmatpush.bf16.msra.mxu0 %v394
    %511 = vmatpush.bf16.msra.mxu0 %v390
    %512 = vmatpush.bf16.msra.mxu0 %v386
    %513 = vmatpush.bf16.msra.mxu0 %v382
    %514 = vmatpush.bf16.msra.mxu0 %v378
    %515 = vmatpush.bf16.msra.mxu0 %v374
    %516 = vmatmul.bf16.gmra.mxu0 %v146
    %v517 = vpop.f32.mrf.mxu0
    %v518 = vadd.f32 %v505, %v517
    %v519 = vpop.f32.mrf.mxu0
    %520 = vdwg.mxu0
    %521 = vmatpush.bf16.msra.mxu0 %v371
    %522 = vmatpush.bf16.msra.mxu0 %v367
    %523 = vmatpush.bf16.msra.mxu0 %v363
    %524 = vmatpush.bf16.msra.mxu0 %v359
    %525 = vmatpush.bf16.msra.mxu0 %v355
    %526 = vmatpush.bf16.msra.mxu0 %v351
    %527 = vmatpush.bf16.msra.mxu0 %v347
    %528 = vmatpush.bf16.msra.mxu0 %v343
    %529 = vmatmul.bf16.gmra.mxu0 %v145
    %v530 = vpop.f32.mrf.mxu0
    %v531 = vadd.f32 0.0, %v530
    %v532 = vpop.f32.mrf.mxu0
    %533 = vdwg.mxu0
    %534 = vmatpush.bf16.msra.mxu0 %v403
    %535 = vmatpush.bf16.msra.mxu0 %v399
    %536 = vmatpush.bf16.msra.mxu0 %v395
    %537 = vmatpush.bf16.msra.mxu0 %v391
    %538 = vmatpush.bf16.msra.mxu0 %v387
    %539 = vmatpush.bf16.msra.mxu0 %v383
    %540 = vmatpush.bf16.msra.mxu0 %v379
    %541 = vmatpush.bf16.msra.mxu0 %v375
    %542 = vmatmul.bf16.gmra.mxu0 %v146
    %v543 = vpop.f32.mrf.mxu0
    %v544 = vadd.f32 %v531, %v543
    %v545 = vpop.f32.mrf.mxu0
    %546 = vdwg.mxu0
    %547 = vmatpush.bf16.msra.mxu0 %v372
    %548 = vmatpush.bf16.msra.mxu0 %v368
    %549 = vmatpush.bf16.msra.mxu0 %v364
    %550 = vmatpush.bf16.msra.mxu0 %v360
    %551 = vmatpush.bf16.msra.mxu0 %v356
    %552 = vmatpush.bf16.msra.mxu0 %v352
    %553 = vmatpush.bf16.msra.mxu0 %v348
    %554 = vmatpush.bf16.msra.mxu0 %v344
    %555 = vmatmul.bf16.gmra.mxu0 %v145
    %v556 = vpop.f32.mrf.mxu0
    %v557 = vadd.f32 0.0, %v556
    %v558 = vpop.f32.mrf.mxu0
    %559 = vdwg.mxu0
    %560 = vmatpush.bf16.msra.mxu0 %v404
    %561 = vmatpush.bf16.msra.mxu0 %v400
    %562 = vmatpush.bf16.msra.mxu0 %v396
    %563 = vmatpush.bf16.msra.mxu0 %v392
    %564 = vmatpush.bf16.msra.mxu0 %v388
    %565 = vmatpush.bf16.msra.mxu0 %v384
    %566 = vmatpush.bf16.msra.mxu0 %v380
    %567 = vmatpush.bf16.msra.mxu0 %v376
    %568 = vmatmul.bf16.gmra.mxu0 %v146
    %v569 = vpop.f32.mrf.mxu0
    %v570 = vadd.f32 %v557, %v569
    %v571 = vpop.f32.mrf.mxu0
    %572 = vdwg.mxu0
    %v573 = vmul.f32 %v492, %v492
    %v574 = vmul.f32 %v518, %v518
    %v575 = vmul.f32 %v544, %v544
    %v576 = vmul.f32 %v570, %v570
    %v577 = vadd.f32 %v573, %v575
    %v578 = vadd.f32 %v574, %v576
    %v579 = vrsqrt.pop %v577
    %v580 = vmul.f32 %v579, %v577
    %v581 = vmul.f32 %v580, %v579
    %v582 = vmul.f32 0.5, %v581
    %v583 = vsub.f32 1.5, %v582
    %v584 = vmul.f32 %v579, %v583
    %v585 = vmul.f32 %v577, %v584
    %vm586 = vcmp.eq.f32.partialorder %v577, inf
    %v587 = vsel %vm586, %v577, %v585
    %vm588 = vcmp.eq.f32.partialorder %v577, 0.0
    %v589 = vand.u32 %v577, 2147483648
    %v590 = vsel %vm588, %v589, %v587
    %v591 = vrsqrt.pop %v578
    %v592 = vmul.f32 %v591, %v578
    %v593 = vmul.f32 %v592, %v591
    %v594 = vmul.f32 0.5, %v593
    %v595 = vsub.f32 1.5, %v594
    %v596 = vmul.f32 %v591, %v595
    %v597 = vmul.f32 %v578, %v596
    %vm598 = vcmp.eq.f32.partialorder %v578, inf
    %v599 = vsel %vm598, %v578, %v597
    %vm600 = vcmp.eq.f32.partialorder %v578, 0.0
    %v601 = vand.u32 %v578, 2147483648
    %v602 = vsel %vm600, %v601, %v599
    %v603 = vand.u32 2147483647, %v492
    %v604 = vand.u32 2147483647, %v518
    %v605 = vand.u32 2147483647, %v544
    %v606 = vand.u32 2147483647, %v570
    %vm607 = vcmp.gt.f32.partialorder %v605, %v603
    %vm608 = vcmp.gt.f32.partialorder %v606, %v604
    %v609 = vsel %vm607, %v603, %v605
    %v610 = vsel %vm608, %v604, %v606
    %v611 = vsel %vm607, %v605, %v603
    %v612 = vsel %vm608, %v606, %v604
    %vm613 = vcmp.eq.f32.partialorder %v611, 0.0
    %vm614 = vcmp.eq.f32.partialorder %v612, 0.0
    %v615 = vsel %vm613, 1.0, %v611
    %v616 = vsel %vm614, 1.0, %v612
    %v617 = vrcp.pop %v615
    %v618 = vmul.f32 %v615, %v617
    %v619 = vsub.f32 1.0, %v618
    %v620 = vmul.f32 %v617, %v619
    %v621 = vadd.f32 %v617, %v620
    %vm622 = vweird.f32 %v615
    %vm623 = vweird.f32 %v617
    %vm624 = vmor %vm622, %vm623
    %v625 = vsel %vm624, %v617, %v621
    %v626 = vand.u32 2147483647, %v615
    %vm627 = vcmp.eq.f32.partialorder %v626, 8.507059e+37
    %v628 = vand.u32 %v615, 2147483648
    %v629 = vor.u32 1.1754944e-38, %v628
    %v630 = vsel %vm627, %v629, %v625
    %v631 = vmul.f32 %v609, %v630
    %v632 = vrcp.pop %v616
    %v633 = vmul.f32 %v616, %v632
    %v634 = vsub.f32 1.0, %v633
    %v635 = vmul.f32 %v632, %v634
    %v636 = vadd.f32 %v632, %v635
    %vm637 = vweird.f32 %v616
    %vm638 = vweird.f32 %v632
    %vm639 = vmor %vm637, %vm638
    %v640 = vsel %vm639, %v632, %v636
    %v641 = vand.u32 2147483647, %v616
    %vm642 = vcmp.eq.f32.partialorder %v641, 8.507059e+37
    %v643 = vand.u32 %v616, 2147483648
    %v644 = vor.u32 1.1754944e-38, %v643
    %v645 = vsel %vm642, %v644, %v640
    %v646 = vmul.f32 %v610, %v645
    %vm647 = vcmp.gt.f32.partialorder %v631, 0.41421357
    %vm648 = vcmp.gt.f32.partialorder %v646, 0.41421357
    %v649 = vsub.f32 %v631, 1.0
    %v650 = vsub.f32 %v646, 1.0
    %v651 = vadd.f32 %v631, 1.0
    %v652 = vadd.f32 %v646, 1.0
    %v653 = vrcp.pop %v651
    %v654 = vmul.f32 %v651, %v653
    %v655 = vsub.f32 1.0, %v654
    %v656 = vmul.f32 %v653, %v655
    %v657 = vadd.f32 %v653, %v656
    %vm658 = vweird.f32 %v651
    %vm659 = vweird.f32 %v653
    %vm660 = vmor %vm658, %vm659
    %v661 = vsel %vm660, %v653, %v657
    %v662 = vand.u32 2147483647, %v651
    %vm663 = vcmp.eq.f32.partialorder %v662, 8.507059e+37
    %v664 = vand.u32 %v651, 2147483648
    %v665 = vor.u32 1.1754944e-38, %v664
    %v666 = vsel %vm663, %v665, %v661
    %v667 = vmul.f32 %v649, %v666
    %v668 = vrcp.pop %v652
    %v669 = vmul.f32 %v652, %v668
    %v670 = vsub.f32 1.0, %v669
    %v671 = vmul.f32 %v668, %v670
    %v672 = vadd.f32 %v668, %v671
    %vm673 = vweird.f32 %v652
    %vm674 = vweird.f32 %v668
    %vm675 = vmor %vm673, %vm674
    %v676 = vsel %vm675, %v668, %v672
    %v677 = vand.u32 2147483647, %v652
    %vm678 = vcmp.eq.f32.partialorder %v677, 8.507059e+37
    %v679 = vand.u32 %v652, 2147483648
    %v680 = vor.u32 1.1754944e-38, %v679
    %v681 = vsel %vm678, %v680, %v676
    %v682 = vmul.f32 %v650, %v681
    %v683 = vsel %vm647, %v667, %v631
    %v684 = vsel %vm648, %v682, %v646
    %v685 = vsel %vm647, 0.7853982, 0.0
    %v686 = vsel %vm648, 0.7853982, 0.0
    %v687 = vmul.f32 %v683, %v683
    %v688 = vmul.f32 %v684, %v684
    %v689 = vmul.f32 %v687, 0.080537446
    %v690 = vmul.f32 %v688, 0.080537446
    %v691 = vsub.f32 %v689, 0.13877685
    %v692 = vsub.f32 %v690, 0.13877685
    %v693 = vmul.f32 %v691, %v687
    %v694 = vmul.f32 %v692, %v688
    %v695 = vadd.f32 %v693, 0.19977711
    %v696 = vadd.f32 %v694, 0.19977711
    %v697 = vmul.f32 %v695, %v687
    %v698 = vmul.f32 %v696, %v688
    %v699 = vsub.f32 %v697, 0.3333295
    %v700 = vsub.f32 %v698, 0.3333295
    %v701 = vadd.f32 %v685, %v683
    %v702 = vadd.f32 %v686, %v684
    %v703 = vmul.f32 %v683, %v687
    %v704 = vmul.f32 %v684, %v688
    %v705 = vmul.f32 %v703, %v699
    %v706 = vmul.f32 %v704, %v700
    %v707 = vadd.f32 %v701, %v705
    %v708 = vadd.f32 %v702, %v706
    %v709 = vsub.f32 1.5707964, %v707
    %v710 = vsub.f32 1.5707964, %v708
    %v711 = vsel %vm607, %v709, %v707
    %v712 = vsel %vm608, %v710, %v708
    %vm713 = vcmp.lt.f32.partialorder %v492, 0.0
    %vm714 = vcmp.lt.f32.partialorder %v518, 0.0
    %v715 = vsub.f32 3.1415927, %v711
    %v716 = vsub.f32 3.1415927, %v712
    %v717 = vsel %vm713, %v715, %v711
    %v718 = vsel %vm714, %v716, %v712
    %vm719 = vcmp.lt.f32.partialorder %v544, 0.0
    %vm720 = vcmp.lt.f32.partialorder %v570, 0.0
    %v721 = vsub.f32 0.0, %v717
    %v722 = vsub.f32 0.0, %v718
    %v723 = vsel %vm719, %v721, %v717
    %v724 = vsel %vm720, %v722, %v718
    %v725 = vld [vmem:[%s3] sm:$0xff]
    %v726 = vld [vmem:[%s4] sm:$0xff]
    %v727 = vld [vmem:[%s5] sm:$0xff]
    %v728 = vld [vmem:[%s6] sm:$0xff]
    %730 = vset.pattern.permute.xlu0 0
    %731 = vperm.xlu0 %730, %v726
    %v732 = vpop.permute.xlu0 %731
    %vm734 = vcmask 64512
    %v736 = vsel %vm734, %v725, 0
    %738 = vmatpush.msra.mxu0 0.0
    %739 = vmatpush.msra.mxu0 0.0
    %740 = vmatpush.msra.mxu0 0.0
    %741 = vmatpush.msra.mxu0 0.0
    %742 = vmatpush.msra.mxu0 0.0
    %743 = vmatpush.msra.mxu0 0.0
    %744 = vmatpush.msra.mxu0 0.0
    %745 = vmatpush.msra.mxu0 0.0
    %746 = vmatpush.msra.mxu0 0.0
    %747 = vmatpush.msra.mxu0 0.0
    %748 = vmatpush.msra.mxu0 0.0
    %749 = vmatpush.msra.mxu0 0.0
    %750 = vmatpush.msra.mxu0 0.0
    %751 = vmatpush.msra.mxu0 0.0
    %752 = vmatpush.msra.mxu0 0.0
    %v753 = vand.u32 %v590, 4294901760
    %754 = vmatpush.msra.mxu0 %v753
    %v755 = vand.u32 %v736, 4294901760
    %v756 = vsub.f32 %v736, %v755
    %v757 = vand.u32 %v756, 4294901760
    %v758 = vsub.f32 %v756, %v757
    %v759 = vand.u32 %v758, 4294901760
    %760 = vmatmul.f32.gmra.mxu0 %v759
    %v761 = vpop.f32.mrf.mxu0
    %v762 = vadd.f32 %v732, %v761
    %763 = vdwg.mxu0
    %764 = vmatpush.msra.mxu0 0.0
    %765 = vmatpush.msra.mxu0 0.0
    %766 = vmatpush.msra.mxu0 0.0
    %767 = vmatpush.msra.mxu0 0.0
    %768 = vmatpush.msra.mxu0 0.0
    %769 = vmatpush.msra.mxu0 0.0
    %770 = vmatpush.msra.mxu0 0.0
    %771 = vmatpush.msra.mxu0 0.0
    %772 = vmatpush.msra.mxu0 0.0
    %773 = vmatpush.msra.mxu0 0.0
    %774 = vmatpush.msra.mxu0 0.0
    %775 = vmatpush.msra.mxu0 0.0
    %776 = vmatpush.msra.mxu0 0.0
    %777 = vmatpush.msra.mxu0 0.0
    %778 = vmatpush.msra.mxu0 0.0
    %v779 = vand.u32 %v590, 4294901760
    %v780 = vsub.f32 %v590, %v779
    %v781 = vand.u32 %v780, 4294901760
    %v782 = vsub.f32 %v780, %v781
    %v783 = vand.u32 %v782, 4294901760
    %784 = vmatpush.msra.mxu0 %v783
    %v785 = vand.u32 %v736, 4294901760
    %786 = vmatmul.f32.gmra.mxu0 %v785
    %v787 = vpop.f32.mrf.mxu0
    %v788 = vadd.f32 %v762, %v787
    %789 = vdwg.mxu0
    %790 = vmatpush.msra.mxu0 0.0
    %791 = vmatpush.msra.mxu0 0.0
    %792 = vmatpush.msra.mxu0 0.0
    %793 = vmatpush.msra.mxu0 0.0
    %794 = vmatpush.msra.mxu0 0.0
    %795 = vmatpush.msra.mxu0 0.0
    %796 = vmatpush.msra.mxu0 0.0
    %797 = vmatpush.msra.mxu0 0.0
    %798 = vmatpush.msra.mxu0 0.0
    %799 = vmatpush.msra.mxu0 0.0
    %800 = vmatpush.msra.mxu0 0.0
    %801 = vmatpush.msra.mxu0 0.0
    %802 = vmatpush.msra.mxu0 0.0
    %803 = vmatpush.msra.mxu0 0.0
    %804 = vmatpush.msra.mxu0 0.0
    %v805 = vand.u32 %v590, 4294901760
    %v806 = vsub.f32 %v590, %v805
    %807 = vmatpush.msra.mxu0 %v806
    %v808 = vand.u32 %v736, 4294901760
    %v809 = vsub.f32 %v736, %v808
    %810 = vmatmul.f32.gmra.mxu0 %v809
    %v811 = vpop.f32.mrf.mxu0
    %v812 = vadd.f32 %v788, %v811
    %813 = vdwg.mxu0
    %814 = vmatpush.msra.mxu0 0.0
    %815 = vmatpush.msra.mxu0 0.0
    %816 = vmatpush.msra.mxu0 0.0
    %817 = vmatpush.msra.mxu0 0.0
    %818 = vmatpush.msra.mxu0 0.0
    %819 = vmatpush.msra.mxu0 0.0
    %820 = vmatpush.msra.mxu0 0.0
    %821 = vmatpush.msra.mxu0 0.0
    %822 = vmatpush.msra.mxu0 0.0
    %823 = vmatpush.msra.mxu0 0.0
    %824 = vmatpush.msra.mxu0 0.0
    %825 = vmatpush.msra.mxu0 0.0
    %826 = vmatpush.msra.mxu0 0.0
    %827 = vmatpush.msra.mxu0 0.0
    %828 = vmatpush.msra.mxu0 0.0
    %v829 = vand.u32 %v590, 4294901760
    %830 = vmatpush.msra.mxu0 %v829
    %v831 = vand.u32 %v736, 4294901760
    %v832 = vsub.f32 %v736, %v831
    %v833 = vand.u32 %v832, 4294901760
    %834 = vmatmul.f32.gmra.mxu0 %v833
    %v835 = vpop.f32.mrf.mxu0
    %v836 = vadd.f32 %v812, %v835
    %837 = vdwg.mxu0
    %838 = vmatpush.msra.mxu0 0.0
    %839 = vmatpush.msra.mxu0 0.0
    %840 = vmatpush.msra.mxu0 0.0
    %841 = vmatpush.msra.mxu0 0.0
    %842 = vmatpush.msra.mxu0 0.0
    %843 = vmatpush.msra.mxu0 0.0
    %844 = vmatpush.msra.mxu0 0.0
    %845 = vmatpush.msra.mxu0 0.0
    %846 = vmatpush.msra.mxu0 0.0
    %847 = vmatpush.msra.mxu0 0.0
    %848 = vmatpush.msra.mxu0 0.0
    %849 = vmatpush.msra.mxu0 0.0
    %850 = vmatpush.msra.mxu0 0.0
    %851 = vmatpush.msra.mxu0 0.0
    %852 = vmatpush.msra.mxu0 0.0
    %v853 = vand.u32 %v590, 4294901760
    %v854 = vsub.f32 %v590, %v853
    %v855 = vand.u32 %v854, 4294901760
    %856 = vmatpush.msra.mxu0 %v855
    %v857 = vand.u32 %v736, 4294901760
    %858 = vmatmul.f32.gmra.mxu0 %v857
    %v859 = vpop.f32.mrf.mxu0
    %v860 = vadd.f32 %v836, %v859
    %861 = vdwg.mxu0
    %862 = vmatpush.msra.mxu0 0.0
    %863 = vmatpush.msra.mxu0 0.0
    %864 = vmatpush.msra.mxu0 0.0
    %865 = vmatpush.msra.mxu0 0.0
    %866 = vmatpush.msra.mxu0 0.0
    %867 = vmatpush.msra.mxu0 0.0
    %868 = vmatpush.msra.mxu0 0.0
    %869 = vmatpush.msra.mxu0 0.0
    %870 = vmatpush.msra.mxu0 0.0
    %871 = vmatpush.msra.mxu0 0.0
    %872 = vmatpush.msra.mxu0 0.0
    %873 = vmatpush.msra.mxu0 0.0
    %874 = vmatpush.msra.mxu0 0.0
    %875 = vmatpush.msra.mxu0 0.0
    %876 = vmatpush.msra.mxu0 0.0
    %v877 = vand.u32 %v590, 4294901760
    %878 = vmatpush.msra.mxu0 %v877
    %v879 = vand.u32 %v736, 4294901760
    %880 = vmatmul.f32.gmra.mxu0 %v879
    %v881 = vpop.f32.mrf.mxu0
    %v882 = vadd.f32 %v860, %v881
    %883 = vdwg.mxu0
    %884 = vmatpush.msra.mxu0 0.0
    %885 = vmatpush.msra.mxu0 0.0
    %886 = vmatpush.msra.mxu0 0.0
    %887 = vmatpush.msra.mxu0 0.0
    %888 = vmatpush.msra.mxu0 0.0
    %889 = vmatpush.msra.mxu0 0.0
    %890 = vmatpush.msra.mxu0 0.0
    %891 = vmatpush.msra.mxu0 0.0
    %892 = vmatpush.msra.mxu0 0.0
    %893 = vmatpush.msra.mxu0 0.0
    %894 = vmatpush.msra.mxu0 0.0
    %895 = vmatpush.msra.mxu0 0.0
    %896 = vmatpush.msra.mxu0 0.0
    %897 = vmatpush.msra.mxu0 0.0
    %898 = vmatpush.msra.mxu0 0.0
    %v899 = vand.u32 %v602, 4294901760
    %900 = vmatpush.msra.mxu0 %v899
    %v901 = vand.u32 %v736, 4294901760
    %v902 = vsub.f32 %v736, %v901
    %v903 = vand.u32 %v902, 4294901760
    %v904 = vsub.f32 %v902, %v903
    %v905 = vand.u32 %v904, 4294901760
    %906 = vmatmul.f32.gmra.mxu0 %v905
    %v907 = vpop.f32.mrf.mxu0
    %v908 = vadd.f32 %v732, %v907
    %909 = vdwg.mxu0
    %910 = vmatpush.msra.mxu0 0.0
    %911 = vmatpush.msra.mxu0 0.0
    %912 = vmatpush.msra.mxu0 0.0
    %913 = vmatpush.msra.mxu0 0.0
    %914 = vmatpush.msra.mxu0 0.0
    %915 = vmatpush.msra.mxu0 0.0
    %916 = vmatpush.msra.mxu0 0.0
    %917 = vmatpush.msra.mxu0 0.0
    %918 = vmatpush.msra.mxu0 0.0
    %919 = vmatpush.msra.mxu0 0.0
    %920 = vmatpush.msra.mxu0 0.0
    %921 = vmatpush.msra.mxu0 0.0
    %922 = vmatpush.msra.mxu0 0.0
    %923 = vmatpush.msra.mxu0 0.0
    %924 = vmatpush.msra.mxu0 0.0
    %v925 = vand.u32 %v602, 4294901760
    %v926 = vsub.f32 %v602, %v925
    %v927 = vand.u32 %v926, 4294901760
    %v928 = vsub.f32 %v926, %v927
    %v929 = vand.u32 %v928, 4294901760
    %930 = vmatpush.msra.mxu0 %v929
    %v931 = vand.u32 %v736, 4294901760
    %932 = vmatmul.f32.gmra.mxu0 %v931
    %v933 = vpop.f32.mrf.mxu0
    %v934 = vadd.f32 %v908, %v933
    %935 = vdwg.mxu0
    %936 = vmatpush.msra.mxu0 0.0
    %937 = vmatpush.msra.mxu0 0.0
    %938 = vmatpush.msra.mxu0 0.0
    %939 = vmatpush.msra.mxu0 0.0
    %940 = vmatpush.msra.mxu0 0.0
    %941 = vmatpush.msra.mxu0 0.0
    %942 = vmatpush.msra.mxu0 0.0
    %943 = vmatpush.msra.mxu0 0.0
    %944 = vmatpush.msra.mxu0 0.0
    %945 = vmatpush.msra.mxu0 0.0
    %946 = vmatpush.msra.mxu0 0.0
    %947 = vmatpush.msra.mxu0 0.0
    %948 = vmatpush.msra.mxu0 0.0
    %949 = vmatpush.msra.mxu0 0.0
    %950 = vmatpush.msra.mxu0 0.0
    %v951 = vand.u32 %v602, 4294901760
    %v952 = vsub.f32 %v602, %v951
    %953 = vmatpush.msra.mxu0 %v952
    %v954 = vand.u32 %v736, 4294901760
    %v955 = vsub.f32 %v736, %v954
    %956 = vmatmul.f32.gmra.mxu0 %v955
    %v957 = vpop.f32.mrf.mxu0
    %v958 = vadd.f32 %v934, %v957
    %959 = vdwg.mxu0
    %960 = vmatpush.msra.mxu0 0.0
    %961 = vmatpush.msra.mxu0 0.0
    %962 = vmatpush.msra.mxu0 0.0
    %963 = vmatpush.msra.mxu0 0.0
    %964 = vmatpush.msra.mxu0 0.0
    %965 = vmatpush.msra.mxu0 0.0
    %966 = vmatpush.msra.mxu0 0.0
    %967 = vmatpush.msra.mxu0 0.0
    %968 = vmatpush.msra.mxu0 0.0
    %969 = vmatpush.msra.mxu0 0.0
    %970 = vmatpush.msra.mxu0 0.0
    %971 = vmatpush.msra.mxu0 0.0
    %972 = vmatpush.msra.mxu0 0.0
    %973 = vmatpush.msra.mxu0 0.0
    %974 = vmatpush.msra.mxu0 0.0
    %v975 = vand.u32 %v602, 4294901760
    %976 = vmatpush.msra.mxu0 %v975
    %v977 = vand.u32 %v736, 4294901760
    %v978 = vsub.f32 %v736, %v977
    %v979 = vand.u32 %v978, 4294901760
    %980 = vmatmul.f32.gmra.mxu0 %v979
    %v981 = vpop.f32.mrf.mxu0
    %v982 = vadd.f32 %v958, %v981
    %983 = vdwg.mxu0
    %984 = vmatpush.msra.mxu0 0.0
    %985 = vmatpush.msra.mxu0 0.0
    %986 = vmatpush.msra.mxu0 0.0
    %987 = vmatpush.msra.mxu0 0.0
    %988 = vmatpush.msra.mxu0 0.0
    %989 = vmatpush.msra.mxu0 0.0
    %990 = vmatpush.msra.mxu0 0.0
    %991 = vmatpush.msra.mxu0 0.0
    %992 = vmatpush.msra.mxu0 0.0
    %993 = vmatpush.msra.mxu0 0.0
    %994 = vmatpush.msra.mxu0 0.0
    %995 = vmatpush.msra.mxu0 0.0
    %996 = vmatpush.msra.mxu0 0.0
    %997 = vmatpush.msra.mxu0 0.0
    %998 = vmatpush.msra.mxu0 0.0
    %v999 = vand.u32 %v602, 4294901760
    %v1000 = vsub.f32 %v602, %v999
    %v1001 = vand.u32 %v1000, 4294901760
    %1002 = vmatpush.msra.mxu0 %v1001
    %v1003 = vand.u32 %v736, 4294901760
    %1004 = vmatmul.f32.gmra.mxu0 %v1003
    %v1005 = vpop.f32.mrf.mxu0
    %v1006 = vadd.f32 %v982, %v1005
    %1007 = vdwg.mxu0
    %1008 = vmatpush.msra.mxu0 0.0
    %1009 = vmatpush.msra.mxu0 0.0
    %1010 = vmatpush.msra.mxu0 0.0
    %1011 = vmatpush.msra.mxu0 0.0
    %1012 = vmatpush.msra.mxu0 0.0
    %1013 = vmatpush.msra.mxu0 0.0
    %1014 = vmatpush.msra.mxu0 0.0
    %1015 = vmatpush.msra.mxu0 0.0
    %1016 = vmatpush.msra.mxu0 0.0
    %1017 = vmatpush.msra.mxu0 0.0
    %1018 = vmatpush.msra.mxu0 0.0
    %1019 = vmatpush.msra.mxu0 0.0
    %1020 = vmatpush.msra.mxu0 0.0
    %1021 = vmatpush.msra.mxu0 0.0
    %1022 = vmatpush.msra.mxu0 0.0
    %v1023 = vand.u32 %v602, 4294901760
    %1024 = vmatpush.msra.mxu0 %v1023
    %v1025 = vand.u32 %v736, 4294901760
    %1026 = vmatmul.f32.gmra.mxu0 %v1025
    %v1027 = vpop.f32.mrf.mxu0
    %v1028 = vadd.f32 %v1006, %v1027
    %1029 = vdwg.mxu0
    %vm1030 = vcmp.ge.f32.partialorder %v882, 0.0
    %vm1031 = vcmp.ge.f32.partialorder %v1028, 0.0
    %v1032 = vmul.f32 %v882, 0.1
    %v1033 = vmul.f32 %v1028, 0.1
    %v1034 = vsel %vm1030, %v882, %v1032
    %v1035 = vsel %vm1031, %v1028, %v1033
    %1037 = vset.pattern.permute.xlu0 0
    %1038 = vperm.xlu0 %1037, %v728
    %v1039 = vpop.permute.xlu0 %1038
    %v1042 = vsel %vm734, %v727, 0
    %1044 = vmatpush.msra.mxu0 0.0
    %1045 = vmatpush.msra.mxu0 0.0
    %1046 = vmatpush.msra.mxu0 0.0
    %1047 = vmatpush.msra.mxu0 0.0
    %1048 = vmatpush.msra.mxu0 0.0
    %1049 = vmatpush.msra.mxu0 0.0
    %1050 = vmatpush.msra.mxu0 0.0
    %1051 = vmatpush.msra.mxu0 0.0
    %1052 = vmatpush.msra.mxu0 0.0
    %1053 = vmatpush.msra.mxu0 0.0
    %1054 = vmatpush.msra.mxu0 0.0
    %1055 = vmatpush.msra.mxu0 0.0
    %1056 = vmatpush.msra.mxu0 0.0
    %1057 = vmatpush.msra.mxu0 0.0
    %1058 = vmatpush.msra.mxu0 0.0
    %v1059 = vand.u32 %v1034, 4294901760
    %1060 = vmatpush.msra.mxu0 %v1059
    %v1061 = vand.u32 %v1042, 4294901760
    %v1062 = vsub.f32 %v1042, %v1061
    %v1063 = vand.u32 %v1062, 4294901760
    %v1064 = vsub.f32 %v1062, %v1063
    %v1065 = vand.u32 %v1064, 4294901760
    %1066 = vmatmul.f32.gmra.mxu0 %v1065
    %v1067 = vpop.f32.mrf.mxu0
    %v1068 = vadd.f32 %v1039, %v1067
    %1069 = vdwg.mxu0
    %1070 = vmatpush.msra.mxu0 0.0
    %1071 = vmatpush.msra.mxu0 0.0
    %1072 = vmatpush.msra.mxu0 0.0
    %1073 = vmatpush.msra.mxu0 0.0
    %1074 = vmatpush.msra.mxu0 0.0
    %1075 = vmatpush.msra.mxu0 0.0
    %1076 = vmatpush.msra.mxu0 0.0
    %1077 = vmatpush.msra.mxu0 0.0
    %1078 = vmatpush.msra.mxu0 0.0
    %1079 = vmatpush.msra.mxu0 0.0
    %1080 = vmatpush.msra.mxu0 0.0
    %1081 = vmatpush.msra.mxu0 0.0
    %1082 = vmatpush.msra.mxu0 0.0
    %1083 = vmatpush.msra.mxu0 0.0
    %1084 = vmatpush.msra.mxu0 0.0
    %v1085 = vand.u32 %v1034, 4294901760
    %v1086 = vsub.f32 %v1034, %v1085
    %v1087 = vand.u32 %v1086, 4294901760
    %v1088 = vsub.f32 %v1086, %v1087
    %v1089 = vand.u32 %v1088, 4294901760
    %1090 = vmatpush.msra.mxu0 %v1089
    %v1091 = vand.u32 %v1042, 4294901760
    %1092 = vmatmul.f32.gmra.mxu0 %v1091
    %v1093 = vpop.f32.mrf.mxu0
    %v1094 = vadd.f32 %v1068, %v1093
    %1095 = vdwg.mxu0
    %1096 = vmatpush.msra.mxu0 0.0
    %1097 = vmatpush.msra.mxu0 0.0
    %1098 = vmatpush.msra.mxu0 0.0
    %1099 = vmatpush.msra.mxu0 0.0
    %1100 = vmatpush.msra.mxu0 0.0
    %1101 = vmatpush.msra.mxu0 0.0
    %1102 = vmatpush.msra.mxu0 0.0
    %1103 = vmatpush.msra.mxu0 0.0
    %1104 = vmatpush.msra.mxu0 0.0
    %1105 = vmatpush.msra.mxu0 0.0
    %1106 = vmatpush.msra.mxu0 0.0
    %1107 = vmatpush.msra.mxu0 0.0
    %1108 = vmatpush.msra.mxu0 0.0
    %1109 = vmatpush.msra.mxu0 0.0
    %1110 = vmatpush.msra.mxu0 0.0
    %v1111 = vand.u32 %v1034, 4294901760
    %v1112 = vsub.f32 %v1034, %v1111
    %1113 = vmatpush.msra.mxu0 %v1112
    %v1114 = vand.u32 %v1042, 4294901760
    %v1115 = vsub.f32 %v1042, %v1114
    %1116 = vmatmul.f32.gmra.mxu0 %v1115
    %v1117 = vpop.f32.mrf.mxu0
    %v1118 = vadd.f32 %v1094, %v1117
    %1119 = vdwg.mxu0
    %1120 = vmatpush.msra.mxu0 0.0
    %1121 = vmatpush.msra.mxu0 0.0
    %1122 = vmatpush.msra.mxu0 0.0
    %1123 = vmatpush.msra.mxu0 0.0
    %1124 = vmatpush.msra.mxu0 0.0
    %1125 = vmatpush.msra.mxu0 0.0
    %1126 = vmatpush.msra.mxu0 0.0
    %1127 = vmatpush.msra.mxu0 0.0
    %1128 = vmatpush.msra.mxu0 0.0
    %1129 = vmatpush.msra.mxu0 0.0
    %1130 = vmatpush.msra.mxu0 0.0
    %1131 = vmatpush.msra.mxu0 0.0
    %1132 = vmatpush.msra.mxu0 0.0
    %1133 = vmatpush.msra.mxu0 0.0
    %1134 = vmatpush.msra.mxu0 0.0
    %v1135 = vand.u32 %v1034, 4294901760
    %1136 = vmatpush.msra.mxu0 %v1135
    %v1137 = vand.u32 %v1042, 4294901760
    %v1138 = vsub.f32 %v1042, %v1137
    %v1139 = vand.u32 %v1138, 4294901760
    %1140 = vmatmul.f32.gmra.mxu0 %v1139
    %v1141 = vpop.f32.mrf.mxu0
    %v1142 = vadd.f32 %v1118, %v1141
    %1143 = vdwg.mxu0
    %1144 = vmatpush.msra.mxu0 0.0
    %1145 = vmatpush.msra.mxu0 0.0
    %1146 = vmatpush.msra.mxu0 0.0
    %1147 = vmatpush.msra.mxu0 0.0
    %1148 = vmatpush.msra.mxu0 0.0
    %1149 = vmatpush.msra.mxu0 0.0
    %1150 = vmatpush.msra.mxu0 0.0
    %1151 = vmatpush.msra.mxu0 0.0
    %1152 = vmatpush.msra.mxu0 0.0
    %1153 = vmatpush.msra.mxu0 0.0
    %1154 = vmatpush.msra.mxu0 0.0
    %1155 = vmatpush.msra.mxu0 0.0
    %1156 = vmatpush.msra.mxu0 0.0
    %1157 = vmatpush.msra.mxu0 0.0
    %1158 = vmatpush.msra.mxu0 0.0
    %v1159 = vand.u32 %v1034, 4294901760
    %v1160 = vsub.f32 %v1034, %v1159
    %v1161 = vand.u32 %v1160, 4294901760
    %1162 = vmatpush.msra.mxu0 %v1161
    %v1163 = vand.u32 %v1042, 4294901760
    %1164 = vmatmul.f32.gmra.mxu0 %v1163
    %v1165 = vpop.f32.mrf.mxu0
    %v1166 = vadd.f32 %v1142, %v1165
    %1167 = vdwg.mxu0
    %1168 = vmatpush.msra.mxu0 0.0
    %1169 = vmatpush.msra.mxu0 0.0
    %1170 = vmatpush.msra.mxu0 0.0
    %1171 = vmatpush.msra.mxu0 0.0
    %1172 = vmatpush.msra.mxu0 0.0
    %1173 = vmatpush.msra.mxu0 0.0
    %1174 = vmatpush.msra.mxu0 0.0
    %1175 = vmatpush.msra.mxu0 0.0
    %1176 = vmatpush.msra.mxu0 0.0
    %1177 = vmatpush.msra.mxu0 0.0
    %1178 = vmatpush.msra.mxu0 0.0
    %1179 = vmatpush.msra.mxu0 0.0
    %1180 = vmatpush.msra.mxu0 0.0
    %1181 = vmatpush.msra.mxu0 0.0
    %1182 = vmatpush.msra.mxu0 0.0
    %v1183 = vand.u32 %v1034, 4294901760
    %1184 = vmatpush.msra.mxu0 %v1183
    %v1185 = vand.u32 %v1042, 4294901760
    %1186 = vmatmul.f32.gmra.mxu0 %v1185
    %v1187 = vpop.f32.mrf.mxu0
    %v1188 = vadd.f32 %v1166, %v1187
    %1189 = vdwg.mxu0
    %1190 = vmatpush.msra.mxu0 0.0
    %1191 = vmatpush.msra.mxu0 0.0
    %1192 = vmatpush.msra.mxu0 0.0
    %1193 = vmatpush.msra.mxu0 0.0
    %1194 = vmatpush.msra.mxu0 0.0
    %1195 = vmatpush.msra.mxu0 0.0
    %1196 = vmatpush.msra.mxu0 0.0
    %1197 = vmatpush.msra.mxu0 0.0
    %1198 = vmatpush.msra.mxu0 0.0
    %1199 = vmatpush.msra.mxu0 0.0
    %1200 = vmatpush.msra.mxu0 0.0
    %1201 = vmatpush.msra.mxu0 0.0
    %1202 = vmatpush.msra.mxu0 0.0
    %1203 = vmatpush.msra.mxu0 0.0
    %1204 = vmatpush.msra.mxu0 0.0
    %v1205 = vand.u32 %v1035, 4294901760
    %1206 = vmatpush.msra.mxu0 %v1205
    %v1207 = vand.u32 %v1042, 4294901760
    %v1208 = vsub.f32 %v1042, %v1207
    %v1209 = vand.u32 %v1208, 4294901760
    %v1210 = vsub.f32 %v1208, %v1209
    %v1211 = vand.u32 %v1210, 4294901760
    %1212 = vmatmul.f32.gmra.mxu0 %v1211
    %v1213 = vpop.f32.mrf.mxu0
    %v1214 = vadd.f32 %v1039, %v1213
    %1215 = vdwg.mxu0
    %1216 = vmatpush.msra.mxu0 0.0
    %1217 = vmatpush.msra.mxu0 0.0
    %1218 = vmatpush.msra.mxu0 0.0
    %1219 = vmatpush.msra.mxu0 0.0
    %1220 = vmatpush.msra.mxu0 0.0
    %1221 = vmatpush.msra.mxu0 0.0
    %1222 = vmatpush.msra.mxu0 0.0
    %1223 = vmatpush.msra.mxu0 0.0
    %1224 = vmatpush.msra.mxu0 0.0
    %1225 = vmatpush.msra.mxu0 0.0
    %1226 = vmatpush.msra.mxu0 0.0
    %1227 = vmatpush.msra.mxu0 0.0
    %1228 = vmatpush.msra.mxu0 0.0
    %1229 = vmatpush.msra.mxu0 0.0
    %1230 = vmatpush.msra.mxu0 0.0
    %v1231 = vand.u32 %v1035, 4294901760
    %v1232 = vsub.f32 %v1035, %v1231
    %v1233 = vand.u32 %v1232, 4294901760
    %v1234 = vsub.f32 %v1232, %v1233
    %v1235 = vand.u32 %v1234, 4294901760
    %1236 = vmatpush.msra.mxu0 %v1235
    %v1237 = vand.u32 %v1042, 4294901760
    %1238 = vmatmul.f32.gmra.mxu0 %v1237
    %v1239 = vpop.f32.mrf.mxu0
    %v1240 = vadd.f32 %v1214, %v1239
    %1241 = vdwg.mxu0
    %1242 = vmatpush.msra.mxu0 0.0
    %1243 = vmatpush.msra.mxu0 0.0
    %1244 = vmatpush.msra.mxu0 0.0
    %1245 = vmatpush.msra.mxu0 0.0
    %1246 = vmatpush.msra.mxu0 0.0
    %1247 = vmatpush.msra.mxu0 0.0
    %1248 = vmatpush.msra.mxu0 0.0
    %1249 = vmatpush.msra.mxu0 0.0
    %1250 = vmatpush.msra.mxu0 0.0
    %1251 = vmatpush.msra.mxu0 0.0
    %1252 = vmatpush.msra.mxu0 0.0
    %1253 = vmatpush.msra.mxu0 0.0
    %1254 = vmatpush.msra.mxu0 0.0
    %1255 = vmatpush.msra.mxu0 0.0
    %1256 = vmatpush.msra.mxu0 0.0
    %v1257 = vand.u32 %v1035, 4294901760
    %v1258 = vsub.f32 %v1035, %v1257
    %1259 = vmatpush.msra.mxu0 %v1258
    %v1260 = vand.u32 %v1042, 4294901760
    %v1261 = vsub.f32 %v1042, %v1260
    %1262 = vmatmul.f32.gmra.mxu0 %v1261
    %v1263 = vpop.f32.mrf.mxu0
    %v1264 = vadd.f32 %v1240, %v1263
    %1265 = vdwg.mxu0
    %1266 = vmatpush.msra.mxu0 0.0
    %1267 = vmatpush.msra.mxu0 0.0
    %1268 = vmatpush.msra.mxu0 0.0
    %1269 = vmatpush.msra.mxu0 0.0
    %1270 = vmatpush.msra.mxu0 0.0
    %1271 = vmatpush.msra.mxu0 0.0
    %1272 = vmatpush.msra.mxu0 0.0
    %1273 = vmatpush.msra.mxu0 0.0
    %1274 = vmatpush.msra.mxu0 0.0
    %1275 = vmatpush.msra.mxu0 0.0
    %1276 = vmatpush.msra.mxu0 0.0
    %1277 = vmatpush.msra.mxu0 0.0
    %1278 = vmatpush.msra.mxu0 0.0
    %1279 = vmatpush.msra.mxu0 0.0
    %1280 = vmatpush.msra.mxu0 0.0
    %v1281 = vand.u32 %v1035, 4294901760
    %1282 = vmatpush.msra.mxu0 %v1281
    %v1283 = vand.u32 %v1042, 4294901760
    %v1284 = vsub.f32 %v1042, %v1283
    %v1285 = vand.u32 %v1284, 4294901760
    %1286 = vmatmul.f32.gmra.mxu0 %v1285
    %v1287 = vpop.f32.mrf.mxu0
    %v1288 = vadd.f32 %v1264, %v1287
    %1289 = vdwg.mxu0
    %1290 = vmatpush.msra.mxu0 0.0
    %1291 = vmatpush.msra.mxu0 0.0
    %1292 = vmatpush.msra.mxu0 0.0
    %1293 = vmatpush.msra.mxu0 0.0
    %1294 = vmatpush.msra.mxu0 0.0
    %1295 = vmatpush.msra.mxu0 0.0
    %1296 = vmatpush.msra.mxu0 0.0
    %1297 = vmatpush.msra.mxu0 0.0
    %1298 = vmatpush.msra.mxu0 0.0
    %1299 = vmatpush.msra.mxu0 0.0
    %1300 = vmatpush.msra.mxu0 0.0
    %1301 = vmatpush.msra.mxu0 0.0
    %1302 = vmatpush.msra.mxu0 0.0
    %1303 = vmatpush.msra.mxu0 0.0
    %1304 = vmatpush.msra.mxu0 0.0
    %v1305 = vand.u32 %v1035, 4294901760
    %v1306 = vsub.f32 %v1035, %v1305
    %v1307 = vand.u32 %v1306, 4294901760
    %1308 = vmatpush.msra.mxu0 %v1307
    %v1309 = vand.u32 %v1042, 4294901760
    %1310 = vmatmul.f32.gmra.mxu0 %v1309
    %v1311 = vpop.f32.mrf.mxu0
    %v1312 = vadd.f32 %v1288, %v1311
    %1313 = vdwg.mxu0
    %1314 = vmatpush.msra.mxu0 0.0
    %1315 = vmatpush.msra.mxu0 0.0
    %1316 = vmatpush.msra.mxu0 0.0
    %1317 = vmatpush.msra.mxu0 0.0
    %1318 = vmatpush.msra.mxu0 0.0
    %1319 = vmatpush.msra.mxu0 0.0
    %1320 = vmatpush.msra.mxu0 0.0
    %1321 = vmatpush.msra.mxu0 0.0
    %1322 = vmatpush.msra.mxu0 0.0
    %1323 = vmatpush.msra.mxu0 0.0
    %1324 = vmatpush.msra.mxu0 0.0
    %1325 = vmatpush.msra.mxu0 0.0
    %1326 = vmatpush.msra.mxu0 0.0
    %1327 = vmatpush.msra.mxu0 0.0
    %1328 = vmatpush.msra.mxu0 0.0
    %v1329 = vand.u32 %v1035, 4294901760
    %1330 = vmatpush.msra.mxu0 %v1329
    %v1331 = vand.u32 %v1042, 4294901760
    %1332 = vmatmul.f32.gmra.mxu0 %v1331
    %v1333 = vpop.f32.mrf.mxu0
    %v1334 = vadd.f32 %v1312, %v1333
    %1335 = vdwg.mxu0
    %v1336 = vld [vmem:[%s7] sm:$0xff]
    %v1337 = vld [vmem:[%s8] sm:$0xff]
    %v1338 = vld [vmem:[%s9] sm:$0xff]
    %v1339 = vld [vmem:[%s10] sm:$0xff]
    %1341 = vset.pattern.permute.xlu0 0
    %1342 = vperm.xlu0 %1341, %v1337
    %v1343 = vpop.permute.xlu0 %1342
    %v1346 = vsel %vm734, %v1336, 0
    %1348 = vmatpush.msra.mxu0 0.0
    %1349 = vmatpush.msra.mxu0 0.0
    %1350 = vmatpush.msra.mxu0 0.0
    %1351 = vmatpush.msra.mxu0 0.0
    %1352 = vmatpush.msra.mxu0 0.0
    %1353 = vmatpush.msra.mxu0 0.0
    %1354 = vmatpush.msra.mxu0 0.0
    %1355 = vmatpush.msra.mxu0 0.0
    %1356 = vmatpush.msra.mxu0 0.0
    %1357 = vmatpush.msra.mxu0 0.0
    %1358 = vmatpush.msra.mxu0 0.0
    %1359 = vmatpush.msra.mxu0 0.0
    %1360 = vmatpush.msra.mxu0 0.0
    %1361 = vmatpush.msra.mxu0 0.0
    %1362 = vmatpush.msra.mxu0 0.0
    %v1363 = vand.u32 %v723, 4294901760
    %1364 = vmatpush.msra.mxu0 %v1363
    %v1365 = vand.u32 %v1346, 4294901760
    %v1366 = vsub.f32 %v1346, %v1365
    %v1367 = vand.u32 %v1366, 4294901760
    %v1368 = vsub.f32 %v1366, %v1367
    %v1369 = vand.u32 %v1368, 4294901760
    %1370 = vmatmul.f32.gmra.mxu0 %v1369
    %v1371 = vpop.f32.mrf.mxu0
    %v1372 = vadd.f32 %v1343, %v1371
    %1373 = vdwg.mxu0
    %1374 = vmatpush.msra.mxu0 0.0
    %1375 = vmatpush.msra.mxu0 0.0
    %1376 = vmatpush.msra.mxu0 0.0
    %1377 = vmatpush.msra.mxu0 0.0
    %1378 = vmatpush.msra.mxu0 0.0
    %1379 = vmatpush.msra.mxu0 0.0
    %1380 = vmatpush.msra.mxu0 0.0
    %1381 = vmatpush.msra.mxu0 0.0
    %1382 = vmatpush.msra.mxu0 0.0
    %1383 = vmatpush.msra.mxu0 0.0
    %1384 = vmatpush.msra.mxu0 0.0
    %1385 = vmatpush.msra.mxu0 0.0
    %1386 = vmatpush.msra.mxu0 0.0
    %1387 = vmatpush.msra.mxu0 0.0
    %1388 = vmatpush.msra.mxu0 0.0
    %v1389 = vand.u32 %v723, 4294901760
    %v1390 = vsub.f32 %v723, %v1389
    %v1391 = vand.u32 %v1390, 4294901760
    %v1392 = vsub.f32 %v1390, %v1391
    %v1393 = vand.u32 %v1392, 4294901760
    %1394 = vmatpush.msra.mxu0 %v1393
    %v1395 = vand.u32 %v1346, 4294901760
    %1396 = vmatmul.f32.gmra.mxu0 %v1395
    %v1397 = vpop.f32.mrf.mxu0
    %v1398 = vadd.f32 %v1372, %v1397
    %1399 = vdwg.mxu0
    %1400 = vmatpush.msra.mxu0 0.0
    %1401 = vmatpush.msra.mxu0 0.0
    %1402 = vmatpush.msra.mxu0 0.0
    %1403 = vmatpush.msra.mxu0 0.0
    %1404 = vmatpush.msra.mxu0 0.0
    %1405 = vmatpush.msra.mxu0 0.0
    %1406 = vmatpush.msra.mxu0 0.0
    %1407 = vmatpush.msra.mxu0 0.0
    %1408 = vmatpush.msra.mxu0 0.0
    %1409 = vmatpush.msra.mxu0 0.0
    %1410 = vmatpush.msra.mxu0 0.0
    %1411 = vmatpush.msra.mxu0 0.0
    %1412 = vmatpush.msra.mxu0 0.0
    %1413 = vmatpush.msra.mxu0 0.0
    %1414 = vmatpush.msra.mxu0 0.0
    %v1415 = vand.u32 %v723, 4294901760
    %v1416 = vsub.f32 %v723, %v1415
    %1417 = vmatpush.msra.mxu0 %v1416
    %v1418 = vand.u32 %v1346, 4294901760
    %v1419 = vsub.f32 %v1346, %v1418
    %1420 = vmatmul.f32.gmra.mxu0 %v1419
    %v1421 = vpop.f32.mrf.mxu0
    %v1422 = vadd.f32 %v1398, %v1421
    %1423 = vdwg.mxu0
    %1424 = vmatpush.msra.mxu0 0.0
    %1425 = vmatpush.msra.mxu0 0.0
    %1426 = vmatpush.msra.mxu0 0.0
    %1427 = vmatpush.msra.mxu0 0.0
    %1428 = vmatpush.msra.mxu0 0.0
    %1429 = vmatpush.msra.mxu0 0.0
    %1430 = vmatpush.msra.mxu0 0.0
    %1431 = vmatpush.msra.mxu0 0.0
    %1432 = vmatpush.msra.mxu0 0.0
    %1433 = vmatpush.msra.mxu0 0.0
    %1434 = vmatpush.msra.mxu0 0.0
    %1435 = vmatpush.msra.mxu0 0.0
    %1436 = vmatpush.msra.mxu0 0.0
    %1437 = vmatpush.msra.mxu0 0.0
    %1438 = vmatpush.msra.mxu0 0.0
    %v1439 = vand.u32 %v723, 4294901760
    %1440 = vmatpush.msra.mxu0 %v1439
    %v1441 = vand.u32 %v1346, 4294901760
    %v1442 = vsub.f32 %v1346, %v1441
    %v1443 = vand.u32 %v1442, 4294901760
    %1444 = vmatmul.f32.gmra.mxu0 %v1443
    %v1445 = vpop.f32.mrf.mxu0
    %v1446 = vadd.f32 %v1422, %v1445
    %1447 = vdwg.mxu0
    %1448 = vmatpush.msra.mxu0 0.0
    %1449 = vmatpush.msra.mxu0 0.0
    %1450 = vmatpush.msra.mxu0 0.0
    %1451 = vmatpush.msra.mxu0 0.0
    %1452 = vmatpush.msra.mxu0 0.0
    %1453 = vmatpush.msra.mxu0 0.0
    %1454 = vmatpush.msra.mxu0 0.0
    %1455 = vmatpush.msra.mxu0 0.0
    %1456 = vmatpush.msra.mxu0 0.0
    %1457 = vmatpush.msra.mxu0 0.0
    %1458 = vmatpush.msra.mxu0 0.0
    %1459 = vmatpush.msra.mxu0 0.0
    %1460 = vmatpush.msra.mxu0 0.0
    %1461 = vmatpush.msra.mxu0 0.0
    %1462 = vmatpush.msra.mxu0 0.0
    %v1463 = vand.u32 %v723, 4294901760
    %v1464 = vsub.f32 %v723, %v1463
    %v1465 = vand.u32 %v1464, 4294901760
    %1466 = vmatpush.msra.mxu0 %v1465
    %v1467 = vand.u32 %v1346, 4294901760
    %1468 = vmatmul.f32.gmra.mxu0 %v1467
    %v1469 = vpop.f32.mrf.mxu0
    %v1470 = vadd.f32 %v1446, %v1469
    %1471 = vdwg.mxu0
    %1472 = vmatpush.msra.mxu0 0.0
    %1473 = vmatpush.msra.mxu0 0.0
    %1474 = vmatpush.msra.mxu0 0.0
    %1475 = vmatpush.msra.mxu0 0.0
    %1476 = vmatpush.msra.mxu0 0.0
    %1477 = vmatpush.msra.mxu0 0.0
    %1478 = vmatpush.msra.mxu0 0.0
    %1479 = vmatpush.msra.mxu0 0.0
    %1480 = vmatpush.msra.mxu0 0.0
    %1481 = vmatpush.msra.mxu0 0.0
    %1482 = vmatpush.msra.mxu0 0.0
    %1483 = vmatpush.msra.mxu0 0.0
    %1484 = vmatpush.msra.mxu0 0.0
    %1485 = vmatpush.msra.mxu0 0.0
    %1486 = vmatpush.msra.mxu0 0.0
    %v1487 = vand.u32 %v723, 4294901760
    %1488 = vmatpush.msra.mxu0 %v1487
    %v1489 = vand.u32 %v1346, 4294901760
    %1490 = vmatmul.f32.gmra.mxu0 %v1489
    %v1491 = vpop.f32.mrf.mxu0
    %v1492 = vadd.f32 %v1470, %v1491
    %1493 = vdwg.mxu0
    %1494 = vmatpush.msra.mxu0 0.0
    %1495 = vmatpush.msra.mxu0 0.0
    %1496 = vmatpush.msra.mxu0 0.0
    %1497 = vmatpush.msra.mxu0 0.0
    %1498 = vmatpush.msra.mxu0 0.0
    %1499 = vmatpush.msra.mxu0 0.0
    %1500 = vmatpush.msra.mxu0 0.0
    %1501 = vmatpush.msra.mxu0 0.0
    %1502 = vmatpush.msra.mxu0 0.0
    %1503 = vmatpush.msra.mxu0 0.0
    %1504 = vmatpush.msra.mxu0 0.0
    %1505 = vmatpush.msra.mxu0 0.0
    %1506 = vmatpush.msra.mxu0 0.0
    %1507 = vmatpush.msra.mxu0 0.0
    %1508 = vmatpush.msra.mxu0 0.0
    %v1509 = vand.u32 %v724, 4294901760
    %1510 = vmatpush.msra.mxu0 %v1509
    %v1511 = vand.u32 %v1346, 4294901760
    %v1512 = vsub.f32 %v1346, %v1511
    %v1513 = vand.u32 %v1512, 4294901760
    %v1514 = vsub.f32 %v1512, %v1513
    %v1515 = vand.u32 %v1514, 4294901760
    %1516 = vmatmul.f32.gmra.mxu0 %v1515
    %v1517 = vpop.f32.mrf.mxu0
    %v1518 = vadd.f32 %v1343, %v1517
    %1519 = vdwg.mxu0
    %1520 = vmatpush.msra.mxu0 0.0
    %1521 = vmatpush.msra.mxu0 0.0
    %1522 = vmatpush.msra.mxu0 0.0
    %1523 = vmatpush.msra.mxu0 0.0
    %1524 = vmatpush.msra.mxu0 0.0
    %1525 = vmatpush.msra.mxu0 0.0
    %1526 = vmatpush.msra.mxu0 0.0
    %1527 = vmatpush.msra.mxu0 0.0
    %1528 = vmatpush.msra.mxu0 0.0
    %1529 = vmatpush.msra.mxu0 0.0
    %1530 = vmatpush.msra.mxu0 0.0
    %1531 = vmatpush.msra.mxu0 0.0
    %1532 = vmatpush.msra.mxu0 0.0
    %1533 = vmatpush.msra.mxu0 0.0
    %1534 = vmatpush.msra.mxu0 0.0
    %v1535 = vand.u32 %v724, 4294901760
    %v1536 = vsub.f32 %v724, %v1535
    %v1537 = vand.u32 %v1536, 4294901760
    %v1538 = vsub.f32 %v1536, %v1537
    %v1539 = vand.u32 %v1538, 4294901760
    %1540 = vmatpush.msra.mxu0 %v1539
    %v1541 = vand.u32 %v1346, 4294901760
    %1542 = vmatmul.f32.gmra.mxu0 %v1541
    %v1543 = vpop.f32.mrf.mxu0
    %v1544 = vadd.f32 %v1518, %v1543
    %1545 = vdwg.mxu0
    %1546 = vmatpush.msra.mxu0 0.0
    %1547 = vmatpush.msra.mxu0 0.0
    %1548 = vmatpush.msra.mxu0 0.0
    %1549 = vmatpush.msra.mxu0 0.0
    %1550 = vmatpush.msra.mxu0 0.0
    %1551 = vmatpush.msra.mxu0 0.0
    %1552 = vmatpush.msra.mxu0 0.0
    %1553 = vmatpush.msra.mxu0 0.0
    %1554 = vmatpush.msra.mxu0 0.0
    %1555 = vmatpush.msra.mxu0 0.0
    %1556 = vmatpush.msra.mxu0 0.0
    %1557 = vmatpush.msra.mxu0 0.0
    %1558 = vmatpush.msra.mxu0 0.0
    %1559 = vmatpush.msra.mxu0 0.0
    %1560 = vmatpush.msra.mxu0 0.0
    %v1561 = vand.u32 %v724, 4294901760
    %v1562 = vsub.f32 %v724, %v1561
    %1563 = vmatpush.msra.mxu0 %v1562
    %v1564 = vand.u32 %v1346, 4294901760
    %v1565 = vsub.f32 %v1346, %v1564
    %1566 = vmatmul.f32.gmra.mxu0 %v1565
    %v1567 = vpop.f32.mrf.mxu0
    %v1568 = vadd.f32 %v1544, %v1567
    %1569 = vdwg.mxu0
    %1570 = vmatpush.msra.mxu0 0.0
    %1571 = vmatpush.msra.mxu0 0.0
    %1572 = vmatpush.msra.mxu0 0.0
    %1573 = vmatpush.msra.mxu0 0.0
    %1574 = vmatpush.msra.mxu0 0.0
    %1575 = vmatpush.msra.mxu0 0.0
    %1576 = vmatpush.msra.mxu0 0.0
    %1577 = vmatpush.msra.mxu0 0.0
    %1578 = vmatpush.msra.mxu0 0.0
    %1579 = vmatpush.msra.mxu0 0.0
    %1580 = vmatpush.msra.mxu0 0.0
    %1581 = vmatpush.msra.mxu0 0.0
    %1582 = vmatpush.msra.mxu0 0.0
    %1583 = vmatpush.msra.mxu0 0.0
    %1584 = vmatpush.msra.mxu0 0.0
    %v1585 = vand.u32 %v724, 4294901760
    %1586 = vmatpush.msra.mxu0 %v1585
    %v1587 = vand.u32 %v1346, 4294901760
    %v1588 = vsub.f32 %v1346, %v1587
    %v1589 = vand.u32 %v1588, 4294901760
    %1590 = vmatmul.f32.gmra.mxu0 %v1589
    %v1591 = vpop.f32.mrf.mxu0
    %v1592 = vadd.f32 %v1568, %v1591
    %1593 = vdwg.mxu0
    %1594 = vmatpush.msra.mxu0 0.0
    %1595 = vmatpush.msra.mxu0 0.0
    %1596 = vmatpush.msra.mxu0 0.0
    %1597 = vmatpush.msra.mxu0 0.0
    %1598 = vmatpush.msra.mxu0 0.0
    %1599 = vmatpush.msra.mxu0 0.0
    %1600 = vmatpush.msra.mxu0 0.0
    %1601 = vmatpush.msra.mxu0 0.0
    %1602 = vmatpush.msra.mxu0 0.0
    %1603 = vmatpush.msra.mxu0 0.0
    %1604 = vmatpush.msra.mxu0 0.0
    %1605 = vmatpush.msra.mxu0 0.0
    %1606 = vmatpush.msra.mxu0 0.0
    %1607 = vmatpush.msra.mxu0 0.0
    %1608 = vmatpush.msra.mxu0 0.0
    %v1609 = vand.u32 %v724, 4294901760
    %v1610 = vsub.f32 %v724, %v1609
    %v1611 = vand.u32 %v1610, 4294901760
    %1612 = vmatpush.msra.mxu0 %v1611
    %v1613 = vand.u32 %v1346, 4294901760
    %1614 = vmatmul.f32.gmra.mxu0 %v1613
    %v1615 = vpop.f32.mrf.mxu0
    %v1616 = vadd.f32 %v1592, %v1615
    %1617 = vdwg.mxu0
    %1618 = vmatpush.msra.mxu0 0.0
    %1619 = vmatpush.msra.mxu0 0.0
    %1620 = vmatpush.msra.mxu0 0.0
    %1621 = vmatpush.msra.mxu0 0.0
    %1622 = vmatpush.msra.mxu0 0.0
    %1623 = vmatpush.msra.mxu0 0.0
    %1624 = vmatpush.msra.mxu0 0.0
    %1625 = vmatpush.msra.mxu0 0.0
    %1626 = vmatpush.msra.mxu0 0.0
    %1627 = vmatpush.msra.mxu0 0.0
    %1628 = vmatpush.msra.mxu0 0.0
    %1629 = vmatpush.msra.mxu0 0.0
    %1630 = vmatpush.msra.mxu0 0.0
    %1631 = vmatpush.msra.mxu0 0.0
    %1632 = vmatpush.msra.mxu0 0.0
    %v1633 = vand.u32 %v724, 4294901760
    %1634 = vmatpush.msra.mxu0 %v1633
    %v1635 = vand.u32 %v1346, 4294901760
    %1636 = vmatmul.f32.gmra.mxu0 %v1635
    %v1637 = vpop.f32.mrf.mxu0
    %v1638 = vadd.f32 %v1616, %v1637
    %1639 = vdwg.mxu0
    %vm1640 = vcmp.ge.f32.partialorder %v1492, 0.0
    %vm1641 = vcmp.ge.f32.partialorder %v1638, 0.0
    %v1642 = vmul.f32 %v1492, 0.1
    %v1643 = vmul.f32 %v1638, 0.1
    %v1644 = vsel %vm1640, %v1492, %v1642
    %v1645 = vsel %vm1641, %v1638, %v1643
    %1647 = vset.pattern.permute.xlu0 0
    %1648 = vperm.xlu0 %1647, %v1339
    %v1649 = vpop.permute.xlu0 %1648
    %v1652 = vsel %vm734, %v1338, 0
    %1654 = vmatpush.msra.mxu0 0.0
    %1655 = vmatpush.msra.mxu0 0.0
    %1656 = vmatpush.msra.mxu0 0.0
    %1657 = vmatpush.msra.mxu0 0.0
    %1658 = vmatpush.msra.mxu0 0.0
    %1659 = vmatpush.msra.mxu0 0.0
    %1660 = vmatpush.msra.mxu0 0.0
    %1661 = vmatpush.msra.mxu0 0.0
    %1662 = vmatpush.msra.mxu0 0.0
    %1663 = vmatpush.msra.mxu0 0.0
    %1664 = vmatpush.msra.mxu0 0.0
    %1665 = vmatpush.msra.mxu0 0.0
    %1666 = vmatpush.msra.mxu0 0.0
    %1667 = vmatpush.msra.mxu0 0.0
    %1668 = vmatpush.msra.mxu0 0.0
    %v1669 = vand.u32 %v1644, 4294901760
    %1670 = vmatpush.msra.mxu0 %v1669
    %v1671 = vand.u32 %v1652, 4294901760
    %v1672 = vsub.f32 %v1652, %v1671
    %v1673 = vand.u32 %v1672, 4294901760
    %v1674 = vsub.f32 %v1672, %v1673
    %v1675 = vand.u32 %v1674, 4294901760
    %1676 = vmatmul.f32.gmra.mxu0 %v1675
    %v1677 = vpop.f32.mrf.mxu0
    %v1678 = vadd.f32 %v1649, %v1677
    %1679 = vdwg.mxu0
    %1680 = vmatpush.msra.mxu0 0.0
    %1681 = vmatpush.msra.mxu0 0.0
    %1682 = vmatpush.msra.mxu0 0.0
    %1683 = vmatpush.msra.mxu0 0.0
    %1684 = vmatpush.msra.mxu0 0.0
    %1685 = vmatpush.msra.mxu0 0.0
    %1686 = vmatpush.msra.mxu0 0.0
    %1687 = vmatpush.msra.mxu0 0.0
    %1688 = vmatpush.msra.mxu0 0.0
    %1689 = vmatpush.msra.mxu0 0.0
    %1690 = vmatpush.msra.mxu0 0.0
    %1691 = vmatpush.msra.mxu0 0.0
    %1692 = vmatpush.msra.mxu0 0.0
    %1693 = vmatpush.msra.mxu0 0.0
    %1694 = vmatpush.msra.mxu0 0.0
    %v1695 = vand.u32 %v1644, 4294901760
    %v1696 = vsub.f32 %v1644, %v1695
    %v1697 = vand.u32 %v1696, 4294901760
    %v1698 = vsub.f32 %v1696, %v1697
    %v1699 = vand.u32 %v1698, 4294901760
    %1700 = vmatpush.msra.mxu0 %v1699
    %v1701 = vand.u32 %v1652, 4294901760
    %1702 = vmatmul.f32.gmra.mxu0 %v1701
    %v1703 = vpop.f32.mrf.mxu0
    %v1704 = vadd.f32 %v1678, %v1703
    %1705 = vdwg.mxu0
    %1706 = vmatpush.msra.mxu0 0.0
    %1707 = vmatpush.msra.mxu0 0.0
    %1708 = vmatpush.msra.mxu0 0.0
    %1709 = vmatpush.msra.mxu0 0.0
    %1710 = vmatpush.msra.mxu0 0.0
    %1711 = vmatpush.msra.mxu0 0.0
    %1712 = vmatpush.msra.mxu0 0.0
    %1713 = vmatpush.msra.mxu0 0.0
    %1714 = vmatpush.msra.mxu0 0.0
    %1715 = vmatpush.msra.mxu0 0.0
    %1716 = vmatpush.msra.mxu0 0.0
    %1717 = vmatpush.msra.mxu0 0.0
    %1718 = vmatpush.msra.mxu0 0.0
    %1719 = vmatpush.msra.mxu0 0.0
    %1720 = vmatpush.msra.mxu0 0.0
    %v1721 = vand.u32 %v1644, 4294901760
    %v1722 = vsub.f32 %v1644, %v1721
    %1723 = vmatpush.msra.mxu0 %v1722
    %v1724 = vand.u32 %v1652, 4294901760
    %v1725 = vsub.f32 %v1652, %v1724
    %1726 = vmatmul.f32.gmra.mxu0 %v1725
    %v1727 = vpop.f32.mrf.mxu0
    %v1728 = vadd.f32 %v1704, %v1727
    %1729 = vdwg.mxu0
    %1730 = vmatpush.msra.mxu0 0.0
    %1731 = vmatpush.msra.mxu0 0.0
    %1732 = vmatpush.msra.mxu0 0.0
    %1733 = vmatpush.msra.mxu0 0.0
    %1734 = vmatpush.msra.mxu0 0.0
    %1735 = vmatpush.msra.mxu0 0.0
    %1736 = vmatpush.msra.mxu0 0.0
    %1737 = vmatpush.msra.mxu0 0.0
    %1738 = vmatpush.msra.mxu0 0.0
    %1739 = vmatpush.msra.mxu0 0.0
    %1740 = vmatpush.msra.mxu0 0.0
    %1741 = vmatpush.msra.mxu0 0.0
    %1742 = vmatpush.msra.mxu0 0.0
    %1743 = vmatpush.msra.mxu0 0.0
    %1744 = vmatpush.msra.mxu0 0.0
    %v1745 = vand.u32 %v1644, 4294901760
    %1746 = vmatpush.msra.mxu0 %v1745
    %v1747 = vand.u32 %v1652, 4294901760
    %v1748 = vsub.f32 %v1652, %v1747
    %v1749 = vand.u32 %v1748, 4294901760
    %1750 = vmatmul.f32.gmra.mxu0 %v1749
    %v1751 = vpop.f32.mrf.mxu0
    %v1752 = vadd.f32 %v1728, %v1751
    %1753 = vdwg.mxu0
    %1754 = vmatpush.msra.mxu0 0.0
    %1755 = vmatpush.msra.mxu0 0.0
    %1756 = vmatpush.msra.mxu0 0.0
    %1757 = vmatpush.msra.mxu0 0.0
    %1758 = vmatpush.msra.mxu0 0.0
    %1759 = vmatpush.msra.mxu0 0.0
    %1760 = vmatpush.msra.mxu0 0.0
    %1761 = vmatpush.msra.mxu0 0.0
    %1762 = vmatpush.msra.mxu0 0.0
    %1763 = vmatpush.msra.mxu0 0.0
    %1764 = vmatpush.msra.mxu0 0.0
    %1765 = vmatpush.msra.mxu0 0.0
    %1766 = vmatpush.msra.mxu0 0.0
    %1767 = vmatpush.msra.mxu0 0.0
    %1768 = vmatpush.msra.mxu0 0.0
    %v1769 = vand.u32 %v1644, 4294901760
    %v1770 = vsub.f32 %v1644, %v1769
    %v1771 = vand.u32 %v1770, 4294901760
    %1772 = vmatpush.msra.mxu0 %v1771
    %v1773 = vand.u32 %v1652, 4294901760
    %1774 = vmatmul.f32.gmra.mxu0 %v1773
    %v1775 = vpop.f32.mrf.mxu0
    %v1776 = vadd.f32 %v1752, %v1775
    %1777 = vdwg.mxu0
    %1778 = vmatpush.msra.mxu0 0.0
    %1779 = vmatpush.msra.mxu0 0.0
    %1780 = vmatpush.msra.mxu0 0.0
    %1781 = vmatpush.msra.mxu0 0.0
    %1782 = vmatpush.msra.mxu0 0.0
    %1783 = vmatpush.msra.mxu0 0.0
    %1784 = vmatpush.msra.mxu0 0.0
    %1785 = vmatpush.msra.mxu0 0.0
    %1786 = vmatpush.msra.mxu0 0.0
    %1787 = vmatpush.msra.mxu0 0.0
    %1788 = vmatpush.msra.mxu0 0.0
    %1789 = vmatpush.msra.mxu0 0.0
    %1790 = vmatpush.msra.mxu0 0.0
    %1791 = vmatpush.msra.mxu0 0.0
    %1792 = vmatpush.msra.mxu0 0.0
    %v1793 = vand.u32 %v1644, 4294901760
    %1794 = vmatpush.msra.mxu0 %v1793
    %v1795 = vand.u32 %v1652, 4294901760
    %1796 = vmatmul.f32.gmra.mxu0 %v1795
    %v1797 = vpop.f32.mrf.mxu0
    %v1798 = vadd.f32 %v1776, %v1797
    %1799 = vdwg.mxu0
    %1800 = vmatpush.msra.mxu0 0.0
    %1801 = vmatpush.msra.mxu0 0.0
    %1802 = vmatpush.msra.mxu0 0.0
    %1803 = vmatpush.msra.mxu0 0.0
    %1804 = vmatpush.msra.mxu0 0.0
    %1805 = vmatpush.msra.mxu0 0.0
    %1806 = vmatpush.msra.mxu0 0.0
    %1807 = vmatpush.msra.mxu0 0.0
    %1808 = vmatpush.msra.mxu0 0.0
    %1809 = vmatpush.msra.mxu0 0.0
    %1810 = vmatpush.msra.mxu0 0.0
    %1811 = vmatpush.msra.mxu0 0.0
    %1812 = vmatpush.msra.mxu0 0.0
    %1813 = vmatpush.msra.mxu0 0.0
    %1814 = vmatpush.msra.mxu0 0.0
    %v1815 = vand.u32 %v1645, 4294901760
    %1816 = vmatpush.msra.mxu0 %v1815
    %v1817 = vand.u32 %v1652, 4294901760
    %v1818 = vsub.f32 %v1652, %v1817
    %v1819 = vand.u32 %v1818, 4294901760
    %v1820 = vsub.f32 %v1818, %v1819
    %v1821 = vand.u32 %v1820, 4294901760
    %1822 = vmatmul.f32.gmra.mxu0 %v1821
    %v1823 = vpop.f32.mrf.mxu0
    %v1824 = vadd.f32 %v1649, %v1823
    %1825 = vdwg.mxu0
    %1826 = vmatpush.msra.mxu0 0.0
    %1827 = vmatpush.msra.mxu0 0.0
    %1828 = vmatpush.msra.mxu0 0.0
    %1829 = vmatpush.msra.mxu0 0.0
    %1830 = vmatpush.msra.mxu0 0.0
    %1831 = vmatpush.msra.mxu0 0.0
    %1832 = vmatpush.msra.mxu0 0.0
    %1833 = vmatpush.msra.mxu0 0.0
    %1834 = vmatpush.msra.mxu0 0.0
    %1835 = vmatpush.msra.mxu0 0.0
    %1836 = vmatpush.msra.mxu0 0.0
    %1837 = vmatpush.msra.mxu0 0.0
    %1838 = vmatpush.msra.mxu0 0.0
    %1839 = vmatpush.msra.mxu0 0.0
    %1840 = vmatpush.msra.mxu0 0.0
    %v1841 = vand.u32 %v1645, 4294901760
    %v1842 = vsub.f32 %v1645, %v1841
    %v1843 = vand.u32 %v1842, 4294901760
    %v1844 = vsub.f32 %v1842, %v1843
    %v1845 = vand.u32 %v1844, 4294901760
    %1846 = vmatpush.msra.mxu0 %v1845
    %v1847 = vand.u32 %v1652, 4294901760
    %1848 = vmatmul.f32.gmra.mxu0 %v1847
    %v1849 = vpop.f32.mrf.mxu0
    %v1850 = vadd.f32 %v1824, %v1849
    %1851 = vdwg.mxu0
    %1852 = vmatpush.msra.mxu0 0.0
    %1853 = vmatpush.msra.mxu0 0.0
    %1854 = vmatpush.msra.mxu0 0.0
    %1855 = vmatpush.msra.mxu0 0.0
    %1856 = vmatpush.msra.mxu0 0.0
    %1857 = vmatpush.msra.mxu0 0.0
    %1858 = vmatpush.msra.mxu0 0.0
    %1859 = vmatpush.msra.mxu0 0.0
    %1860 = vmatpush.msra.mxu0 0.0
    %1861 = vmatpush.msra.mxu0 0.0
    %1862 = vmatpush.msra.mxu0 0.0
    %1863 = vmatpush.msra.mxu0 0.0
    %1864 = vmatpush.msra.mxu0 0.0
    %1865 = vmatpush.msra.mxu0 0.0
    %1866 = vmatpush.msra.mxu0 0.0
    %v1867 = vand.u32 %v1645, 4294901760
    %v1868 = vsub.f32 %v1645, %v1867
    %1869 = vmatpush.msra.mxu0 %v1868
    %v1870 = vand.u32 %v1652, 4294901760
    %v1871 = vsub.f32 %v1652, %v1870
    %1872 = vmatmul.f32.gmra.mxu0 %v1871
    %v1873 = vpop.f32.mrf.mxu0
    %v1874 = vadd.f32 %v1850, %v1873
    %1875 = vdwg.mxu0
    %1876 = vmatpush.msra.mxu0 0.0
    %1877 = vmatpush.msra.mxu0 0.0
    %1878 = vmatpush.msra.mxu0 0.0
    %1879 = vmatpush.msra.mxu0 0.0
    %1880 = vmatpush.msra.mxu0 0.0
    %1881 = vmatpush.msra.mxu0 0.0
    %1882 = vmatpush.msra.mxu0 0.0
    %1883 = vmatpush.msra.mxu0 0.0
    %1884 = vmatpush.msra.mxu0 0.0
    %1885 = vmatpush.msra.mxu0 0.0
    %1886 = vmatpush.msra.mxu0 0.0
    %1887 = vmatpush.msra.mxu0 0.0
    %1888 = vmatpush.msra.mxu0 0.0
    %1889 = vmatpush.msra.mxu0 0.0
    %1890 = vmatpush.msra.mxu0 0.0
    %v1891 = vand.u32 %v1645, 4294901760
    %1892 = vmatpush.msra.mxu0 %v1891
    %v1893 = vand.u32 %v1652, 4294901760
    %v1894 = vsub.f32 %v1652, %v1893
    %v1895 = vand.u32 %v1894, 4294901760
    %1896 = vmatmul.f32.gmra.mxu0 %v1895
    %v1897 = vpop.f32.mrf.mxu0
    %v1898 = vadd.f32 %v1874, %v1897
    %1899 = vdwg.mxu0
    %1900 = vmatpush.msra.mxu0 0.0
    %1901 = vmatpush.msra.mxu0 0.0
    %1902 = vmatpush.msra.mxu0 0.0
    %1903 = vmatpush.msra.mxu0 0.0
    %1904 = vmatpush.msra.mxu0 0.0
    %1905 = vmatpush.msra.mxu0 0.0
    %1906 = vmatpush.msra.mxu0 0.0
    %1907 = vmatpush.msra.mxu0 0.0
    %1908 = vmatpush.msra.mxu0 0.0
    %1909 = vmatpush.msra.mxu0 0.0
    %1910 = vmatpush.msra.mxu0 0.0
    %1911 = vmatpush.msra.mxu0 0.0
    %1912 = vmatpush.msra.mxu0 0.0
    %1913 = vmatpush.msra.mxu0 0.0
    %1914 = vmatpush.msra.mxu0 0.0
    %v1915 = vand.u32 %v1645, 4294901760
    %v1916 = vsub.f32 %v1645, %v1915
    %v1917 = vand.u32 %v1916, 4294901760
    %1918 = vmatpush.msra.mxu0 %v1917
    %v1919 = vand.u32 %v1652, 4294901760
    %1920 = vmatmul.f32.gmra.mxu0 %v1919
    %v1921 = vpop.f32.mrf.mxu0
    %v1922 = vadd.f32 %v1898, %v1921
    %1923 = vdwg.mxu0
    %1924 = vmatpush.msra.mxu0 0.0
    %1925 = vmatpush.msra.mxu0 0.0
    %1926 = vmatpush.msra.mxu0 0.0
    %1927 = vmatpush.msra.mxu0 0.0
    %1928 = vmatpush.msra.mxu0 0.0
    %1929 = vmatpush.msra.mxu0 0.0
    %1930 = vmatpush.msra.mxu0 0.0
    %1931 = vmatpush.msra.mxu0 0.0
    %1932 = vmatpush.msra.mxu0 0.0
    %1933 = vmatpush.msra.mxu0 0.0
    %1934 = vmatpush.msra.mxu0 0.0
    %1935 = vmatpush.msra.mxu0 0.0
    %1936 = vmatpush.msra.mxu0 0.0
    %1937 = vmatpush.msra.mxu0 0.0
    %1938 = vmatpush.msra.mxu0 0.0
    %v1939 = vand.u32 %v1645, 4294901760
    %1940 = vmatpush.msra.mxu0 %v1939
    %v1941 = vand.u32 %v1652, 4294901760
    %1942 = vmatmul.f32.gmra.mxu0 %v1941
    %v1943 = vpop.f32.mrf.mxu0
    %v1944 = vadd.f32 %v1922, %v1943
    %1945 = vdwg.mxu0
    %v1946 = vand.u32 2147483647, %v1798
    %vm1947 = vcmp.le.f32.partialorder %v1946, 0.7853982
    %vm1948 = vcmp.lt.s32.totalorder %v1798, 0
    %v1949 = vand.u32 %v1798, 2139095040
    %v1950 = vshrl.u32 %v1949, 23
    %v1951 = vsub.s32 %v1950, 127
    %v1952 = vand.u32 2147483647, %v1798
    %v1953 = vand.u32 %v1952, 8388607
    %v1954 = vor.u32 %v1953, 8388608
    %v1955 = vsub.s32 0, %v1954
    %v1956 = vadd.s32 %v1951, 1
    %vm1957 = vcmp.gt.s32.totalorder %v1956, 0
    %v1958 = vsel %vm1957, %v1956, 0
    %v1959 = vshrl.u32 %v1958, 5
    %v1960 = vand.u32 %v1958, 31
    %v1961 = vsub.s32 32, %v1960
    %v1962 = vshrl.u32 683565275, %v1961
    %v1963 = vshll.u32 683565275, %v1960
    %v1964 = vshrl.u32 2475754826, %v1961
    %v1965 = vor.u32 %v1963, %v1964
    %v1966 = vshll.u32 2475754826, %v1960
    %v1967 = vshrl.u32 2131351028, %v1961
    %v1968 = vor.u32 %v1966, %v1967
    %v1969 = vshll.u32 2131351028, %v1960
    %v1970 = vshrl.u32 2102212464, %v1961
    %v1971 = vor.u32 %v1969, %v1970
    %v1972 = vshll.u32 2102212464, %v1960
    %v1973 = vshrl.u32 920167782, %v1961
    %v1974 = vor.u32 %v1972, %v1973
    %v1975 = vshll.u32 920167782, %v1960
    %v1976 = vshrl.u32 1326507024, %v1961
    %v1977 = vor.u32 %v1975, %v1976
    %vm1978 = vcmp.lt.s32.totalorder %v1959, 1
    %vm1979 = vcmp.lt.s32.totalorder %v1959, 2
    %vm1980 = vcmp.lt.s32.totalorder %v1959, 3
    %vm1981 = vcmp.lt.s32.totalorder %v1959, 4
    %v1982 = vsel %vm1978, %v1962, %v1965
    %v1983 = vsel %vm1981, %v1971, 2102212464
    %v1984 = vsel %vm1980, %v1968, %v1983
    %v1985 = vsel %vm1979, %v1982, %v1984
    %v1986 = vsel %vm1978, %v1965, %v1968
    %v1987 = vsel %vm1981, %v1974, 920167782
    %v1988 = vsel %vm1980, %v1971, %v1987
    %v1989 = vsel %vm1979, %v1986, %v1988
    %v1990 = vsel %vm1978, %v1968, %v1971
    %v1991 = vsel %vm1981, %v1977, 1326507024
    %v1992 = vsel %vm1980, %v1974, %v1991
    %v1993 = vsel %vm1979, %v1990, %v1992
    %v1994 = vshll.u32 %v1954, 8
    %v1995 = vand.u32 %v1994, 65535
    %v1996 = vshrl.u32 %v1994, 16
    %v1997 = vand.u32 %v1993, 65535
    %v1998 = vshrl.u32 %v1993, 16
    %v1999 = vmul.u32 %v1995, %v1997
    %v2000 = vmul.u32 %v1995, %v1998
    %v2001 = vmul.u32 %v1996, %v1997
    %v2002 = vmul.u32 %v1996, %v1998
    %v2003 = vshll.u32 %v2000, 16
    %v2004 = vshrl.u32 %v2000, 16
    %v2005 = vshll.u32 %v2001, 16
    %v2006 = vshrl.u32 %v2001, 16
    %vm2007 = vc.u32 %v1999, %v2003
    %v2008 = vsel %vm2007, 1, 0
    %v2009 = vadd.s32 %v1999, %v2003
    %v2010 = vadd.s32 %v2002, %v2008
    %vm2011 = vc.u32 %v2009, %v2005
    %v2012 = vsel %vm2011, 1, 0
    %v2013 = vadd.s32 %v2009, %v2005
    %v2014 = vadd.s32 %v2010, %v2012
    %v2015 = vadd.s32 %v2014, %v2004
    %v2016 = vadd.s32 %v2015, %v2006
    %v2017 = vand.u32 %v1994, 65535
    %v2018 = vshrl.u32 %v1994, 16
    %v2019 = vand.u32 %v1989, 65535
    %v2020 = vshrl.u32 %v1989, 16
    %v2021 = vmul.u32 %v2017, %v2019
    %v2022 = vmul.u32 %v2017, %v2020
    %v2023 = vmul.u32 %v2018, %v2019
    %v2024 = vmul.u32 %v2018, %v2020
    %v2025 = vshll.u32 %v2022, 16
    %v2026 = vshrl.u32 %v2022, 16
    %v2027 = vshll.u32 %v2023, 16
    %v2028 = vshrl.u32 %v2023, 16
    %vm2029 = vc.u32 %v2021, %v2025
    %v2030 = vsel %vm2029, 1, 0
    %v2031 = vadd.s32 %v2021, %v2025
    %v2032 = vadd.s32 %v2024, %v2030
    %vm2033 = vc.u32 %v2031, %v2027
    %v2034 = vsel %vm2033, 1, 0
    %v2035 = vadd.s32 %v2031, %v2027
    %v2036 = vadd.s32 %v2032, %v2034
    %v2037 = vadd.s32 %v2036, %v2026
    %v2038 = vadd.s32 %v2037, %v2028
    %v2039 = vmul.u32 %v1994, %v1985
    %v2040 = vadd.s32 %v2016, %v2035
    %vm2041 = vc.u32 %v2016, %v2035
    %v2042 = vadd.s32 %v2038, 1
    %v2043 = vsel %vm2041, %v2042, %v2038
    %v2044 = vadd.s32 %v2039, %v2043
    %v2045 = vadd.s32 %v2044, 536870912
    %v2046 = vshrl.u32 %v2045, 30
    %v2047 = vshll.u32 %v2046, 30
    %v2048 = vsub.s32 %v2044, %v2047
    %vm2049 = vcmp.lt.s32.totalorder %v2048, 0
    %v2050 = vsub.s32 0, %v2048
    %v2051 = vsel %vm2049, %v2050, %v2048
    %v2052 = vclz %v2051
    %v2053 = vsub.s32 %v2052, 2
    %vm2054 = vcmp.gt.s32.totalorder 0, %v2053
    %v2055 = vsel %vm2054, 0, %v2053
    %v2056 = vsub.s32 32, %v2055
    %v2057 = vshll.u32 %v2048, %v2055
    %v2058 = vshrl.u32 %v2040, %v2056
    %v2059 = vor.u32 %v2057, %v2058
    %v2060 = vsub.s32 4294967266, %v2055
    %v2061 = vadd.s32 %v2060, 127
    %v2062 = vshll.u32 %v2061, 23
    %v2063 = vor.u32 4788187, %v2062
    %v2064 = vand.u32 2147483647, %v2063
    %v2066 = vcvt.s32.f32 %v2059
    %v2067 = vmul.f32 %v2066, %v2064
    %v2068 = vxor.u32 %v2067, 2147483648
    %v2069 = vsel %vm1948, %v2068, %v2067
    %v2070 = vsub.s32 4, %v2046
    %v2071 = vsel %vm1948, %v2070, %v2046
    %v2072 = vsel %vm1947, %v1798, %v2069
    %v2073 = vsel %vm1947, 0, %v2071
    %v2074 = vmul.f32 %v2072, %v2072
    %v2075 = vmul.f32 %v2074, -0.001358992
    %v2076 = vadd.f32 %v2075, 0.041655596
    %v2077 = vmul.f32 %v2074, %v2076
    %v2078 = vadd.f32 %v2077, -0.4999988
    %v2079 = vmul.f32 %v2074, %v2078
    %v2080 = vadd.f32 1.0, %v2079
    %v2081 = vmul.f32 %v2072, %v2072
    %v2082 = vmul.f32 %v2081, -0.00019511016
    %v2083 = vadd.f32 %v2082, 0.008332121
    %v2084 = vmul.f32 %v2081, %v2083
    %v2085 = vadd.f32 %v2084, -0.16666654
    %v2086 = vmul.f32 %v2081, %v2085
    %v2087 = vadd.f32 %v2086, 1.0
    %v2088 = vmul.f32 %v2087, %v2072
    %vm2089 = vweird.f32 %v1798
    %v2090 = vand.u32 %v2073, 3
    %vm2091 = vcmp.lt.s32.totalorder %v2090, 2
    %vm2092 = vcmp.eq.s32.totalorder %v2090, 0
    %v2093 = vxor.u32 %v2088, 2147483648
    %v2094 = vsel %vm2092, %v2080, %v2093
    %vm2095 = vcmp.eq.s32.totalorder %v2090, 2
    %v2096 = vxor.u32 %v2080, 2147483648
    %v2097 = vsel %vm2095, %v2096, %v2088
    %v2098 = vsel %vm2091, %v2094, %v2097
    %v2099 = vsel %vm2089, nan, %v2098
    %v2100 = vand.u32 2147483647, %v1944
    %vm2101 = vcmp.le.f32.partialorder %v2100, 0.7853982
    %vm2102 = vcmp.lt.s32.totalorder %v1944, 0
    %v2103 = vand.u32 %v1944, 2139095040
    %v2104 = vshrl.u32 %v2103, 23
    %v2105 = vsub.s32 %v2104, 127
    %v2106 = vand.u32 2147483647, %v1944
    %v2107 = vand.u32 %v2106, 8388607
    %v2108 = vor.u32 %v2107, 8388608
    %v2109 = vsub.s32 0, %v2108
    %v2110 = vadd.s32 %v2105, 1
    %vm2111 = vcmp.gt.s32.totalorder %v2110, 0
    %v2112 = vsel %vm2111, %v2110, 0
    %v2113 = vshrl.u32 %v2112, 5
    %v2114 = vand.u32 %v2112, 31
    %v2115 = vsub.s32 32, %v2114
    %v2116 = vshrl.u32 683565275, %v2115
    %v2117 = vshll.u32 683565275, %v2114
    %v2118 = vshrl.u32 2475754826, %v2115
    %v2119 = vor.u32 %v2117, %v2118
    %v2120 = vshll.u32 2475754826, %v2114
    %v2121 = vshrl.u32 2131351028, %v2115
    %v2122 = vor.u32 %v2120, %v2121
    %v2123 = vshll.u32 2131351028, %v2114
    %v2124 = vshrl.u32 2102212464, %v2115
    %v2125 = vor.u32 %v2123, %v2124
    %v2126 = vshll.u32 2102212464, %v2114
    %v2127 = vshrl.u32 920167782, %v2115
    %v2128 = vor.u32 %v2126, %v2127
    %v2129 = vshll.u32 920167782, %v2114
    %v2130 = vshrl.u32 1326507024, %v2115
    %v2131 = vor.u32 %v2129, %v2130
    %vm2132 = vcmp.lt.s32.totalorder %v2113, 1
    %vm2133 = vcmp.lt.s32.totalorder %v2113, 2
    %vm2134 = vcmp.lt.s32.totalorder %v2113, 3
    %vm2135 = vcmp.lt.s32.totalorder %v2113, 4
    %v2136 = vsel %vm2132, %v2116, %v2119
    %v2137 = vsel %vm2135, %v2125, 2102212464
    %v2138 = vsel %vm2134, %v2122, %v2137
    %v2139 = vsel %vm2133, %v2136, %v2138
    %v2140 = vsel %vm2132, %v2119, %v2122
    %v2141 = vsel %vm2135, %v2128, 920167782
    %v2142 = vsel %vm2134, %v2125, %v2141
    %v2143 = vsel %vm2133, %v2140, %v2142
    %v2144 = vsel %vm2132, %v2122, %v2125
    %v2145 = vsel %vm2135, %v2131, 1326507024
    %v2146 = vsel %vm2134, %v2128, %v2145
    %v2147 = vsel %vm2133, %v2144, %v2146
    %v2148 = vshll.u32 %v2108, 8
    %v2149 = vand.u32 %v2148, 65535
    %v2150 = vshrl.u32 %v2148, 16
    %v2151 = vand.u32 %v2147, 65535
    %v2152 = vshrl.u32 %v2147, 16
    %v2153 = vmul.u32 %v2149, %v2151
    %v2154 = vmul.u32 %v2149, %v2152
    %v2155 = vmul.u32 %v2150, %v2151
    %v2156 = vmul.u32 %v2150, %v2152
    %v2157 = vshll.u32 %v2154, 16
    %v2158 = vshrl.u32 %v2154, 16
    %v2159 = vshll.u32 %v2155, 16
    %v2160 = vshrl.u32 %v2155, 16
    %vm2161 = vc.u32 %v2153, %v2157
    %v2162 = vsel %vm2161, 1, 0
    %v2163 = vadd.s32 %v2153, %v2157
    %v2164 = vadd.s32 %v2156, %v2162
    %vm2165 = vc.u32 %v2163, %v2159
    %v2166 = vsel %vm2165, 1, 0
    %v2167 = vadd.s32 %v2163, %v2159
    %v2168 = vadd.s32 %v2164, %v2166
    %v2169 = vadd.s32 %v2168, %v2158
    %v2170 = vadd.s32 %v2169, %v2160
    %v2171 = vand.u32 %v2148, 65535
    %v2172 = vshrl.u32 %v2148, 16
    %v2173 = vand.u32 %v2143, 65535
    %v2174 = vshrl.u32 %v2143, 16
    %v2175 = vmul.u32 %v2171, %v2173
    %v2176 = vmul.u32 %v2171, %v2174
    %v2177 = vmul.u32 %v2172, %v2173
    %v2178 = vmul.u32 %v2172, %v2174
    %v2179 = vshll.u32 %v2176, 16
    %v2180 = vshrl.u32 %v2176, 16
    %v2181 = vshll.u32 %v2177, 16
    %v2182 = vshrl.u32 %v2177, 16
    %vm2183 = vc.u32 %v2175, %v2179
    %v2184 = vsel %vm2183, 1, 0
    %v2185 = vadd.s32 %v2175, %v2179
    %v2186 = vadd.s32 %v2178, %v2184
    %vm2187 = vc.u32 %v2185, %v2181
    %v2188 = vsel %vm2187, 1, 0
    %v2189 = vadd.s32 %v2185, %v2181
    %v2190 = vadd.s32 %v2186, %v2188
    %v2191 = vadd.s32 %v2190, %v2180
    %v2192 = vadd.s32 %v2191, %v2182
    %v2193 = vmul.u32 %v2148, %v2139
    %v2194 = vadd.s32 %v2170, %v2189
    %vm2195 = vc.u32 %v2170, %v2189
    %v2196 = vadd.s32 %v2192, 1
    %v2197 = vsel %vm2195, %v2196, %v2192
    %v2198 = vadd.s32 %v2193, %v2197
    %v2199 = vadd.s32 %v2198, 536870912
    %v2200 = vshrl.u32 %v2199, 30
    %v2201 = vshll.u32 %v2200, 30
    %v2202 = vsub.s32 %v2198, %v2201
    %vm2203 = vcmp.lt.s32.totalorder %v2202, 0
    %v2204 = vsub.s32 0, %v2202
    %v2205 = vsel %vm2203, %v2204, %v2202
    %v2206 = vclz %v2205
    %v2207 = vsub.s32 %v2206, 2
    %vm2208 = vcmp.gt.s32.totalorder 0, %v2207
    %v2209 = vsel %vm2208, 0, %v2207
    %v2210 = vsub.s32 32, %v2209
    %v2211 = vshll.u32 %v2202, %v2209
    %v2212 = vshrl.u32 %v2194, %v2210
    %v2213 = vor.u32 %v2211, %v2212
    %v2214 = vsub.s32 4294967266, %v2209
    %v2215 = vadd.s32 %v2214, 127
    %v2216 = vshll.u32 %v2215, 23
    %v2217 = vor.u32 4788187, %v2216
    %v2218 = vand.u32 2147483647, %v2217
    %v2220 = vcvt.s32.f32 %v2213
    %v2221 = vmul.f32 %v2220, %v2218
    %v2222 = vxor.u32 %v2221, 2147483648
    %v2223 = vsel %vm2102, %v2222, %v2221
    %v2224 = vsub.s32 4, %v2200
    %v2225 = vsel %vm2102, %v2224, %v2200
    %v2226 = vsel %vm2101, %v1944, %v2223
    %v2227 = vsel %vm2101, 0, %v2225
    %v2228 = vmul.f32 %v2226, %v2226
    %v2229 = vmul.f32 %v2228, -0.001358992
    %v2230 = vadd.f32 %v2229, 0.041655596
    %v2231 = vmul.f32 %v2228, %v2230
    %v2232 = vadd.f32 %v2231, -0.4999988
    %v2233 = vmul.f32 %v2228, %v2232
    %v2234 = vadd.f32 1.0, %v2233
    %v2235 = vmul.f32 %v2226, %v2226
    %v2236 = vmul.f32 %v2235, -0.00019511016
    %v2237 = vadd.f32 %v2236, 0.008332121
    %v2238 = vmul.f32 %v2235, %v2237
    %v2239 = vadd.f32 %v2238, -0.16666654
    %v2240 = vmul.f32 %v2235, %v2239
    %v2241 = vadd.f32 %v2240, 1.0
    %v2242 = vmul.f32 %v2241, %v2226
    %vm2243 = vweird.f32 %v1944
    %v2244 = vand.u32 %v2227, 3
    %vm2245 = vcmp.lt.s32.totalorder %v2244, 2
    %vm2246 = vcmp.eq.s32.totalorder %v2244, 0
    %v2247 = vxor.u32 %v2242, 2147483648
    %v2248 = vsel %vm2246, %v2234, %v2247
    %vm2249 = vcmp.eq.s32.totalorder %v2244, 2
    %v2250 = vxor.u32 %v2234, 2147483648
    %v2251 = vsel %vm2249, %v2250, %v2242
    %v2252 = vsel %vm2245, %v2248, %v2251
    %v2253 = vsel %vm2243, nan, %v2252
    %v2254 = vmul.f32 %v1188, %v2099
    %v2255 = vmul.f32 %v1334, %v2253
    %v2256 = vpack.c.bf16 %v2254, %v2254
    %v2257 = vpack.c.bf16 %v2255, %v2255
    %v2258 = vand.u32 2147483647, %v1798
    %vm2259 = vcmp.le.f32.partialorder %v2258, 0.7853982
    %vm2260 = vcmp.lt.s32.totalorder %v1798, 0
    %v2261 = vand.u32 %v1798, 2139095040
    %v2262 = vshrl.u32 %v2261, 23
    %v2263 = vsub.s32 %v2262, 127
    %v2264 = vand.u32 2147483647, %v1798
    %v2265 = vand.u32 %v2264, 8388607
    %v2266 = vor.u32 %v2265, 8388608
    %v2267 = vsub.s32 0, %v2266
    %v2268 = vadd.s32 %v2263, 1
    %vm2269 = vcmp.gt.s32.totalorder %v2268, 0
    %v2270 = vsel %vm2269, %v2268, 0
    %v2271 = vshrl.u32 %v2270, 5
    %v2272 = vand.u32 %v2270, 31
    %v2273 = vsub.s32 32, %v2272
    %v2274 = vshrl.u32 683565275, %v2273
    %v2275 = vshll.u32 683565275, %v2272
    %v2276 = vshrl.u32 2475754826, %v2273
    %v2277 = vor.u32 %v2275, %v2276
    %v2278 = vshll.u32 2475754826, %v2272
    %v2279 = vshrl.u32 2131351028, %v2273
    %v2280 = vor.u32 %v2278, %v2279
    %v2281 = vshll.u32 2131351028, %v2272
    %v2282 = vshrl.u32 2102212464, %v2273
    %v2283 = vor.u32 %v2281, %v2282
    %v2284 = vshll.u32 2102212464, %v2272
    %v2285 = vshrl.u32 920167782, %v2273
    %v2286 = vor.u32 %v2284, %v2285
    %v2287 = vshll.u32 920167782, %v2272
    %v2288 = vshrl.u32 1326507024, %v2273
    %v2289 = vor.u32 %v2287, %v2288
    %vm2290 = vcmp.lt.s32.totalorder %v2271, 1
    %vm2291 = vcmp.lt.s32.totalorder %v2271, 2
    %vm2292 = vcmp.lt.s32.totalorder %v2271, 3
    %vm2293 = vcmp.lt.s32.totalorder %v2271, 4
    %v2294 = vsel %vm2290, %v2274, %v2277
    %v2295 = vsel %vm2293, %v2283, 2102212464
    %v2296 = vsel %vm2292, %v2280, %v2295
    %v2297 = vsel %vm2291, %v2294, %v2296
    %v2298 = vsel %vm2290, %v2277, %v2280
    %v2299 = vsel %vm2293, %v2286, 920167782
    %v2300 = vsel %vm2292, %v2283, %v2299
    %v2301 = vsel %vm2291, %v2298, %v2300
    %v2302 = vsel %vm2290, %v2280, %v2283
    %v2303 = vsel %vm2293, %v2289, 1326507024
    %v2304 = vsel %vm2292, %v2286, %v2303
    %v2305 = vsel %vm2291, %v2302, %v2304
    %v2306 = vshll.u32 %v2266, 8
    %v2307 = vand.u32 %v2306, 65535
    %v2308 = vshrl.u32 %v2306, 16
    %v2309 = vand.u32 %v2305, 65535
    %v2310 = vshrl.u32 %v2305, 16
    %v2311 = vmul.u32 %v2307, %v2309
    %v2312 = vmul.u32 %v2307, %v2310
    %v2313 = vmul.u32 %v2308, %v2309
    %v2314 = vmul.u32 %v2308, %v2310
    %v2315 = vshll.u32 %v2312, 16
    %v2316 = vshrl.u32 %v2312, 16
    %v2317 = vshll.u32 %v2313, 16
    %v2318 = vshrl.u32 %v2313, 16
    %vm2319 = vc.u32 %v2311, %v2315
    %v2320 = vsel %vm2319, 1, 0
    %v2321 = vadd.s32 %v2311, %v2315
    %v2322 = vadd.s32 %v2314, %v2320
    %vm2323 = vc.u32 %v2321, %v2317
    %v2324 = vsel %vm2323, 1, 0
    %v2325 = vadd.s32 %v2321, %v2317
    %v2326 = vadd.s32 %v2322, %v2324
    %v2327 = vadd.s32 %v2326, %v2316
    %v2328 = vadd.s32 %v2327, %v2318
    %v2329 = vand.u32 %v2306, 65535
    %v2330 = vshrl.u32 %v2306, 16
    %v2331 = vand.u32 %v2301, 65535
    %v2332 = vshrl.u32 %v2301, 16
    %v2333 = vmul.u32 %v2329, %v2331
    %v2334 = vmul.u32 %v2329, %v2332
    %v2335 = vmul.u32 %v2330, %v2331
    %v2336 = vmul.u32 %v2330, %v2332
    %v2337 = vshll.u32 %v2334, 16
    %v2338 = vshrl.u32 %v2334, 16
    %v2339 = vshll.u32 %v2335, 16
    %v2340 = vshrl.u32 %v2335, 16
    %vm2341 = vc.u32 %v2333, %v2337
    %v2342 = vsel %vm2341, 1, 0
    %v2343 = vadd.s32 %v2333, %v2337
    %v2344 = vadd.s32 %v2336, %v2342
    %vm2345 = vc.u32 %v2343, %v2339
    %v2346 = vsel %vm2345, 1, 0
    %v2347 = vadd.s32 %v2343, %v2339
    %v2348 = vadd.s32 %v2344, %v2346
    %v2349 = vadd.s32 %v2348, %v2338
    %v2350 = vadd.s32 %v2349, %v2340
    %v2351 = vmul.u32 %v2306, %v2297
    %v2352 = vadd.s32 %v2328, %v2347
    %vm2353 = vc.u32 %v2328, %v2347
    %v2354 = vadd.s32 %v2350, 1
    %v2355 = vsel %vm2353, %v2354, %v2350
    %v2356 = vadd.s32 %v2351, %v2355
    %v2357 = vadd.s32 %v2356, 536870912
    %v2358 = vshrl.u32 %v2357, 30
    %v2359 = vshll.u32 %v2358, 30
    %v2360 = vsub.s32 %v2356, %v2359
    %vm2361 = vcmp.lt.s32.totalorder %v2360, 0
    %v2362 = vsub.s32 0, %v2360
    %v2363 = vsel %vm2361, %v2362, %v2360
    %v2364 = vclz %v2363
    %v2365 = vsub.s32 %v2364, 2
    %vm2366 = vcmp.gt.s32.totalorder 0, %v2365
    %v2367 = vsel %vm2366, 0, %v2365
    %v2368 = vsub.s32 32, %v2367
    %v2369 = vshll.u32 %v2360, %v2367
    %v2370 = vshrl.u32 %v2352, %v2368
    %v2371 = vor.u32 %v2369, %v2370
    %v2372 = vsub.s32 4294967266, %v2367
    %v2373 = vadd.s32 %v2372, 127
    %v2374 = vshll.u32 %v2373, 23
    %v2375 = vor.u32 4788187, %v2374
    %v2376 = vand.u32 2147483647, %v2375
    %v2378 = vcvt.s32.f32 %v2371
    %v2379 = vmul.f32 %v2378, %v2376
    %v2380 = vxor.u32 %v2379, 2147483648
    %v2381 = vsel %vm2260, %v2380, %v2379
    %v2382 = vsub.s32 4, %v2358
    %v2383 = vsel %vm2260, %v2382, %v2358
    %v2384 = vsel %vm2259, %v1798, %v2381
    %v2385 = vsel %vm2259, 0, %v2383
    %v2386 = vmul.f32 %v2384, %v2384
    %v2387 = vmul.f32 %v2386, -0.001358992
    %v2388 = vadd.f32 %v2387, 0.041655596
    %v2389 = vmul.f32 %v2386, %v2388
    %v2390 = vadd.f32 %v2389, -0.4999988
    %v2391 = vmul.f32 %v2386, %v2390
    %v2392 = vadd.f32 1.0, %v2391
    %v2393 = vmul.f32 %v2384, %v2384
    %v2394 = vmul.f32 %v2393, -0.00019511016
    %v2395 = vadd.f32 %v2394, 0.008332121
    %v2396 = vmul.f32 %v2393, %v2395
    %v2397 = vadd.f32 %v2396, -0.16666654
    %v2398 = vmul.f32 %v2393, %v2397
    %v2399 = vadd.f32 %v2398, 1.0
    %v2400 = vmul.f32 %v2399, %v2384
    %vm2401 = vweird.f32 %v1798
    %v2402 = vadd.s32 %v2385, 3
    %v2403 = vand.u32 %v2402, 3
    %vm2404 = vcmp.lt.s32.totalorder %v2403, 2
    %vm2405 = vcmp.eq.s32.totalorder %v2403, 0
    %v2406 = vxor.u32 %v2400, 2147483648
    %v2407 = vsel %vm2405, %v2392, %v2406
    %vm2408 = vcmp.eq.s32.totalorder %v2403, 2
    %v2409 = vxor.u32 %v2392, 2147483648
    %v2410 = vsel %vm2408, %v2409, %v2400
    %v2411 = vsel %vm2404, %v2407, %v2410
    %v2412 = vsel %vm2401, nan, %v2411
    %v2413 = vand.u32 2147483647, %v1944
    %vm2414 = vcmp.le.f32.partialorder %v2413, 0.7853982
    %vm2415 = vcmp.lt.s32.totalorder %v1944, 0
    %v2416 = vand.u32 %v1944, 2139095040
    %v2417 = vshrl.u32 %v2416, 23
    %v2418 = vsub.s32 %v2417, 127
    %v2419 = vand.u32 2147483647, %v1944
    %v2420 = vand.u32 %v2419, 8388607
    %v2421 = vor.u32 %v2420, 8388608
    %v2422 = vsub.s32 0, %v2421
    %v2423 = vadd.s32 %v2418, 1
    %vm2424 = vcmp.gt.s32.totalorder %v2423, 0
    %v2425 = vsel %vm2424, %v2423, 0
    %v2426 = vshrl.u32 %v2425, 5
    %v2427 = vand.u32 %v2425, 31
    %v2428 = vsub.s32 32, %v2427
    %v2429 = vshrl.u32 683565275, %v2428
    %v2430 = vshll.u32 683565275, %v2427
    %v2431 = vshrl.u32 2475754826, %v2428
    %v2432 = vor.u32 %v2430, %v2431
    %v2433 = vshll.u32 2475754826, %v2427
    %v2434 = vshrl.u32 2131351028, %v2428
    %v2435 = vor.u32 %v2433, %v2434
    %v2436 = vshll.u32 2131351028, %v2427
    %v2437 = vshrl.u32 2102212464, %v2428
    %v2438 = vor.u32 %v2436, %v2437
    %v2439 = vshll.u32 2102212464, %v2427
    %v2440 = vshrl.u32 920167782, %v2428
    %v2441 = vor.u32 %v2439, %v2440
    %v2442 = vshll.u32 920167782, %v2427
    %v2443 = vshrl.u32 1326507024, %v2428
    %v2444 = vor.u32 %v2442, %v2443
    %vm2445 = vcmp.lt.s32.totalorder %v2426, 1
    %vm2446 = vcmp.lt.s32.totalorder %v2426, 2
    %vm2447 = vcmp.lt.s32.totalorder %v2426, 3
    %vm2448 = vcmp.lt.s32.totalorder %v2426, 4
    %v2449 = vsel %vm2445, %v2429, %v2432
    %v2450 = vsel %vm2448, %v2438, 2102212464
    %v2451 = vsel %vm2447, %v2435, %v2450
    %v2452 = vsel %vm2446, %v2449, %v2451
    %v2453 = vsel %vm2445, %v2432, %v2435
    %v2454 = vsel %vm2448, %v2441, 920167782
    %v2455 = vsel %vm2447, %v2438, %v2454
    %v2456 = vsel %vm2446, %v2453, %v2455
    %v2457 = vsel %vm2445, %v2435, %v2438
    %v2458 = vsel %vm2448, %v2444, 1326507024
    %v2459 = vsel %vm2447, %v2441, %v2458
    %v2460 = vsel %vm2446, %v2457, %v2459
    %v2461 = vshll.u32 %v2421, 8
    %v2462 = vand.u32 %v2461, 65535
    %v2463 = vshrl.u32 %v2461, 16
    %v2464 = vand.u32 %v2460, 65535
    %v2465 = vshrl.u32 %v2460, 16
    %v2466 = vmul.u32 %v2462, %v2464
    %v2467 = vmul.u32 %v2462, %v2465
    %v2468 = vmul.u32 %v2463, %v2464
    %v2469 = vmul.u32 %v2463, %v2465
    %v2470 = vshll.u32 %v2467, 16
    %v2471 = vshrl.u32 %v2467, 16
    %v2472 = vshll.u32 %v2468, 16
    %v2473 = vshrl.u32 %v2468, 16
    %vm2474 = vc.u32 %v2466, %v2470
    %v2475 = vsel %vm2474, 1, 0
    %v2476 = vadd.s32 %v2466, %v2470
    %v2477 = vadd.s32 %v2469, %v2475
    %vm2478 = vc.u32 %v2476, %v2472
    %v2479 = vsel %vm2478, 1, 0
    %v2480 = vadd.s32 %v2476, %v2472
    %v2481 = vadd.s32 %v2477, %v2479
    %v2482 = vadd.s32 %v2481, %v2471
    %v2483 = vadd.s32 %v2482, %v2473
    %v2484 = vand.u32 %v2461, 65535
    %v2485 = vshrl.u32 %v2461, 16
    %v2486 = vand.u32 %v2456, 65535
    %v2487 = vshrl.u32 %v2456, 16
    %v2488 = vmul.u32 %v2484, %v2486
    %v2489 = vmul.u32 %v2484, %v2487
    %v2490 = vmul.u32 %v2485, %v2486
    %v2491 = vmul.u32 %v2485, %v2487
    %v2492 = vshll.u32 %v2489, 16
    %v2493 = vshrl.u32 %v2489, 16
    %v2494 = vshll.u32 %v2490, 16
    %v2495 = vshrl.u32 %v2490, 16
    %vm2496 = vc.u32 %v2488, %v2492
    %v2497 = vsel %vm2496, 1, 0
    %v2498 = vadd.s32 %v2488, %v2492
    %v2499 = vadd.s32 %v2491, %v2497
    %vm2500 = vc.u32 %v2498, %v2494
    %v2501 = vsel %vm2500, 1, 0
    %v2502 = vadd.s32 %v2498, %v2494
    %v2503 = vadd.s32 %v2499, %v2501
    %v2504 = vadd.s32 %v2503, %v2493
    %v2505 = vadd.s32 %v2504, %v2495
    %v2506 = vmul.u32 %v2461, %v2452
    %v2507 = vadd.s32 %v2483, %v2502
    %vm2508 = vc.u32 %v2483, %v2502
    %v2509 = vadd.s32 %v2505, 1
    %v2510 = vsel %vm2508, %v2509, %v2505
    %v2511 = vadd.s32 %v2506, %v2510
    %v2512 = vadd.s32 %v2511, 536870912
    %v2513 = vshrl.u32 %v2512, 30
    %v2514 = vshll.u32 %v2513, 30
    %v2515 = vsub.s32 %v2511, %v2514
    %vm2516 = vcmp.lt.s32.totalorder %v2515, 0
    %v2517 = vsub.s32 0, %v2515
    %v2518 = vsel %vm2516, %v2517, %v2515
    %v2519 = vclz %v2518
    %v2520 = vsub.s32 %v2519, 2
    %vm2521 = vcmp.gt.s32.totalorder 0, %v2520
    %v2522 = vsel %vm2521, 0, %v2520
    %v2523 = vsub.s32 32, %v2522
    %v2524 = vshll.u32 %v2515, %v2522
    %v2525 = vshrl.u32 %v2507, %v2523
    %v2526 = vor.u32 %v2524, %v2525
    %v2527 = vsub.s32 4294967266, %v2522
    %v2528 = vadd.s32 %v2527, 127
    %v2529 = vshll.u32 %v2528, 23
    %v2530 = vor.u32 4788187, %v2529
    %v2531 = vand.u32 2147483647, %v2530
    %v2533 = vcvt.s32.f32 %v2526
    %v2534 = vmul.f32 %v2533, %v2531
    %v2535 = vxor.u32 %v2534, 2147483648
    %v2536 = vsel %vm2415, %v2535, %v2534
    %v2537 = vsub.s32 4, %v2513
    %v2538 = vsel %vm2415, %v2537, %v2513
    %v2539 = vsel %vm2414, %v1944, %v2536
    %v2540 = vsel %vm2414, 0, %v2538
    %v2541 = vmul.f32 %v2539, %v2539
    %v2542 = vmul.f32 %v2541, -0.001358992
    %v2543 = vadd.f32 %v2542, 0.041655596
    %v2544 = vmul.f32 %v2541, %v2543
    %v2545 = vadd.f32 %v2544, -0.4999988
    %v2546 = vmul.f32 %v2541, %v2545
    %v2547 = vadd.f32 1.0, %v2546
    %v2548 = vmul.f32 %v2539, %v2539
    %v2549 = vmul.f32 %v2548, -0.00019511016
    %v2550 = vadd.f32 %v2549, 0.008332121
    %v2551 = vmul.f32 %v2548, %v2550
    %v2552 = vadd.f32 %v2551, -0.16666654
    %v2553 = vmul.f32 %v2548, %v2552
    %v2554 = vadd.f32 %v2553, 1.0
    %v2555 = vmul.f32 %v2554, %v2539
    %vm2556 = vweird.f32 %v1944
    %v2557 = vadd.s32 %v2540, 3
    %v2558 = vand.u32 %v2557, 3
    %vm2559 = vcmp.lt.s32.totalorder %v2558, 2
    %vm2560 = vcmp.eq.s32.totalorder %v2558, 0
    %v2561 = vxor.u32 %v2555, 2147483648
    %v2562 = vsel %vm2560, %v2547, %v2561
    %vm2563 = vcmp.eq.s32.totalorder %v2558, 2
    %v2564 = vxor.u32 %v2547, 2147483648
    %v2565 = vsel %vm2563, %v2564, %v2555
    %v2566 = vsel %vm2559, %v2562, %v2565
    %v2567 = vsel %vm2556, nan, %v2566
    %v2568 = vmul.f32 %v1188, %v2412
    %v2569 = vmul.f32 %v1334, %v2567
    %v2570 = vpack.c.bf16 %v2568, %v2568
    %v2571 = vpack.c.bf16 %v2569, %v2569
    %v2572 = vld [vmem:[#allocation5] sm:$0xff]
    %v2573 = vld [vmem:[#allocation5 + $0x8] sm:$0xff]
    %v2574 = vld [vmem:[#allocation5 + $0x10] sm:$0xff]
    %v2575 = vld [vmem:[#allocation5 + $0x18] sm:$0xff]
    %v2576 = vld [vmem:[#allocation5 + $0x20] sm:$0xff]
    %v2577 = vld [vmem:[#allocation5 + $0x28] sm:$0xff]
    %v2578 = vld [vmem:[#allocation5 + $0x30] sm:$0xff]
    %v2579 = vld [vmem:[#allocation5 + $0x38] sm:$0xff]
    %v2580 = vld [vmem:[#allocation5 + $0x40] sm:$0xff]
    %v2581 = vld [vmem:[#allocation5 + $0x48] sm:$0xff]
    %v2582 = vld [vmem:[#allocation5 + $0x50] sm:$0xff]
    %v2583 = vld [vmem:[#allocation5 + $0x58] sm:$0xff]
    %v2584 = vld [vmem:[#allocation5 + $0x60] sm:$0xff]
    %v2585 = vld [vmem:[#allocation5 + $0x68] sm:$0xff]
    %v2586 = vld [vmem:[#allocation5 + $0x70] sm:$0xff]
    %v2587 = vld [vmem:[#allocation5 + $0x78] sm:$0xff]
    %v2588 = vld [vmem:[#allocation5 + $0x80] sm:$0xff]
    %v2589 = vld [vmem:[#allocation5 + $0x88] sm:$0xff]
    %v2590 = vld [vmem:[#allocation5 + $0x90] sm:$0xff]
    %v2591 = vld [vmem:[#allocation5 + $0x98] sm:$0xff]
    %v2592 = vld [vmem:[#allocation5 + $0xa0] sm:$0xff]
    %v2593 = vld [vmem:[#allocation5 + $0xa8] sm:$0xff]
    %v2594 = vld [vmem:[#allocation5 + $0xb0] sm:$0xff]
    %v2595 = vld [vmem:[#allocation5 + $0xb8] sm:$0xff]
    %v2596 = vld [vmem:[#allocation5 + $0xc0] sm:$0xff]
    %v2597 = vld [vmem:[#allocation5 + $0xc8] sm:$0xff]
    %v2598 = vld [vmem:[#allocation5 + $0xd0] sm:$0xff]
    %v2599 = vld [vmem:[#allocation5 + $0xd8] sm:$0xff]
    %v2600 = vld [vmem:[#allocation5 + $0xe0] sm:$0xff]
    %v2601 = vld [vmem:[#allocation5 + $0xe8] sm:$0xff]
    %v2602 = vld [vmem:[#allocation5 + $0xf0] sm:$0xff]
    %v2603 = vld [vmem:[#allocation5 + $0xf8] sm:$0xff]
    %v2604 = vld [vmem:[#allocation5 + $0x100] sm:$0xff]
    %v2605 = vld [vmem:[#allocation5 + $0x108] sm:$0xff]
    %v2606 = vld [vmem:[#allocation5 + $0x110] sm:$0xff]
    %v2607 = vld [vmem:[#allocation5 + $0x118] sm:$0xff]
    %v2608 = vld [vmem:[#allocation5 + $0x120] sm:$0xff]
    %v2609 = vld [vmem:[#allocation5 + $0x128] sm:$0xff]
    %v2610 = vld [vmem:[#allocation5 + $0x130] sm:$0xff]
    %v2611 = vld [vmem:[#allocation5 + $0x138] sm:$0xff]
    %v2612 = vld [vmem:[#allocation5 + $0x140] sm:$0xff]
    %v2613 = vld [vmem:[#allocation5 + $0x148] sm:$0xff]
    %v2614 = vld [vmem:[#allocation5 + $0x150] sm:$0xff]
    %v2615 = vld [vmem:[#allocation5 + $0x158] sm:$0xff]
    %v2616 = vld [vmem:[#allocation5 + $0x160] sm:$0xff]
    %v2617 = vld [vmem:[#allocation5 + $0x168] sm:$0xff]
    %v2618 = vld [vmem:[#allocation5 + $0x170] sm:$0xff]
    %v2619 = vld [vmem:[#allocation5 + $0x178] sm:$0xff]
    %v2620 = vld [vmem:[#allocation5 + $0x180] sm:$0xff]
    %v2621 = vld [vmem:[#allocation5 + $0x188] sm:$0xff]
    %v2622 = vld [vmem:[#allocation5 + $0x190] sm:$0xff]
    %v2623 = vld [vmem:[#allocation5 + $0x198] sm:$0xff]
    %v2624 = vld [vmem:[#allocation5 + $0x1a0] sm:$0xff]
    %v2625 = vld [vmem:[#allocation5 + $0x1a8] sm:$0xff]
    %v2626 = vld [vmem:[#allocation5 + $0x1b0] sm:$0xff]
    %v2627 = vld [vmem:[#allocation5 + $0x1b8] sm:$0xff]
    %v2628 = vld [vmem:[#allocation5 + $0x1c0] sm:$0xff]
    %v2629 = vld [vmem:[#allocation5 + $0x1c8] sm:$0xff]
    %v2630 = vld [vmem:[#allocation5 + $0x1d0] sm:$0xff]
    %v2631 = vld [vmem:[#allocation5 + $0x1d8] sm:$0xff]
    %v2632 = vld [vmem:[#allocation5 + $0x1e0] sm:$0xff]
    %v2633 = vld [vmem:[#allocation5 + $0x1e8] sm:$0xff]
    %v2634 = vld [vmem:[#allocation5 + $0x1f0] sm:$0xff]
    %v2635 = vld [vmem:[#allocation5 + $0x1f8] sm:$0xff]
    %v2700 = vunpack.c.l.b16 %v2572
    %v2701 = vunpack.c.h.b16 %v2572
    %v2702 = vunpack.c.l.b16 %v2573
    %v2703 = vunpack.c.h.b16 %v2573
    %v2704 = vunpack.c.l.b16 %v2574
    %v2705 = vunpack.c.h.b16 %v2574
    %v2706 = vunpack.c.l.b16 %v2575
    %v2707 = vunpack.c.h.b16 %v2575
    %v2708 = vunpack.c.l.b16 %v2576
    %v2709 = vunpack.c.h.b16 %v2576
    %v2710 = vunpack.c.l.b16 %v2577
    %v2711 = vunpack.c.h.b16 %v2577
    %v2712 = vunpack.c.l.b16 %v2578
    %v2713 = vunpack.c.h.b16 %v2578
    %v2714 = vunpack.c.l.b16 %v2579
    %v2715 = vunpack.c.h.b16 %v2579
    %v2716 = vunpack.c.l.b16 %v2580
    %v2717 = vunpack.c.h.b16 %v2580
    %v2718 = vunpack.c.l.b16 %v2581
    %v2719 = vunpack.c.h.b16 %v2581
    %v2720 = vunpack.c.l.b16 %v2582
    %v2721 = vunpack.c.h.b16 %v2582
    %v2722 = vunpack.c.l.b16 %v2583
    %v2723 = vunpack.c.h.b16 %v2583
    %v2724 = vunpack.c.l.b16 %v2584
    %v2725 = vunpack.c.h.b16 %v2584
    %v2726 = vunpack.c.l.b16 %v2585
    %v2727 = vunpack.c.h.b16 %v2585
    %v2728 = vunpack.c.l.b16 %v2586
    %v2729 = vunpack.c.h.b16 %v2586
    %v2730 = vunpack.c.l.b16 %v2587
    %v2731 = vunpack.c.h.b16 %v2587
    %v2732 = vunpack.c.l.b16 %v2588
    %v2733 = vunpack.c.h.b16 %v2588
    %v2734 = vunpack.c.l.b16 %v2589
    %v2735 = vunpack.c.h.b16 %v2589
    %v2736 = vunpack.c.l.b16 %v2590
    %v2737 = vunpack.c.h.b16 %v2590
    %v2738 = vunpack.c.l.b16 %v2591
    %v2739 = vunpack.c.h.b16 %v2591
    %v2740 = vunpack.c.l.b16 %v2592
    %v2741 = vunpack.c.h.b16 %v2592
    %v2742 = vunpack.c.l.b16 %v2593
    %v2743 = vunpack.c.h.b16 %v2593
    %v2744 = vunpack.c.l.b16 %v2594
    %v2745 = vunpack.c.h.b16 %v2594
    %v2746 = vunpack.c.l.b16 %v2595
    %v2747 = vunpack.c.h.b16 %v2595
    %v2748 = vunpack.c.l.b16 %v2596
    %v2749 = vunpack.c.h.b16 %v2596
    %v2750 = vunpack.c.l.b16 %v2597
    %v2751 = vunpack.c.h.b16 %v2597
    %v2752 = vunpack.c.l.b16 %v2598
    %v2753 = vunpack.c.h.b16 %v2598
    %v2754 = vunpack.c.l.b16 %v2599
    %v2755 = vunpack.c.h.b16 %v2599
    %v2756 = vunpack.c.l.b16 %v2600
    %v2757 = vunpack.c.h.b16 %v2600
    %v2758 = vunpack.c.l.b16 %v2601
    %v2759 = vunpack.c.h.b16 %v2601
    %v2760 = vunpack.c.l.b16 %v2602
    %v2761 = vunpack.c.h.b16 %v2602
    %v2762 = vunpack.c.l.b16 %v2603
    %v2763 = vunpack.c.h.b16 %v2603
    %v2764 = vunpack.c.l.b16 %v2604
    %v2765 = vunpack.c.h.b16 %v2604
    %v2766 = vunpack.c.l.b16 %v2605
    %v2767 = vunpack.c.h.b16 %v2605
    %v2768 = vunpack.c.l.b16 %v2606
    %v2769 = vunpack.c.h.b16 %v2606
    %v2770 = vunpack.c.l.b16 %v2607
    %v2771 = vunpack.c.h.b16 %v2607
    %v2772 = vunpack.c.l.b16 %v2608
    %v2773 = vunpack.c.h.b16 %v2608
    %v2774 = vunpack.c.l.b16 %v2609
    %v2775 = vunpack.c.h.b16 %v2609
    %v2776 = vunpack.c.l.b16 %v2610
    %v2777 = vunpack.c.h.b16 %v2610
    %v2778 = vunpack.c.l.b16 %v2611
    %v2779 = vunpack.c.h.b16 %v2611
    %v2780 = vunpack.c.l.b16 %v2612
    %v2781 = vunpack.c.h.b16 %v2612
    %v2782 = vunpack.c.l.b16 %v2613
    %v2783 = vunpack.c.h.b16 %v2613
    %v2784 = vunpack.c.l.b16 %v2614
    %v2785 = vunpack.c.h.b16 %v2614
    %v2786 = vunpack.c.l.b16 %v2615
    %v2787 = vunpack.c.h.b16 %v2615
    %v2788 = vunpack.c.l.b16 %v2616
    %v2789 = vunpack.c.h.b16 %v2616
    %v2790 = vunpack.c.l.b16 %v2617
    %v2791 = vunpack.c.h.b16 %v2617
    %v2792 = vunpack.c.l.b16 %v2618
    %v2793 = vunpack.c.h.b16 %v2618
    %v2794 = vunpack.c.l.b16 %v2619
    %v2795 = vunpack.c.h.b16 %v2619
    %v2796 = vunpack.c.l.b16 %v2620
    %v2797 = vunpack.c.h.b16 %v2620
    %v2798 = vunpack.c.l.b16 %v2621
    %v2799 = vunpack.c.h.b16 %v2621
    %v2800 = vunpack.c.l.b16 %v2622
    %v2801 = vunpack.c.h.b16 %v2622
    %v2802 = vunpack.c.l.b16 %v2623
    %v2803 = vunpack.c.h.b16 %v2623
    %v2804 = vunpack.c.l.b16 %v2624
    %v2805 = vunpack.c.h.b16 %v2624
    %v2806 = vunpack.c.l.b16 %v2625
    %v2807 = vunpack.c.h.b16 %v2625
    %v2808 = vunpack.c.l.b16 %v2626
    %v2809 = vunpack.c.h.b16 %v2626
    %v2810 = vunpack.c.l.b16 %v2627
    %v2811 = vunpack.c.h.b16 %v2627
    %v2812 = vunpack.c.l.b16 %v2628
    %v2813 = vunpack.c.h.b16 %v2628
    %v2814 = vunpack.c.l.b16 %v2629
    %v2815 = vunpack.c.h.b16 %v2629
    %v2816 = vunpack.c.l.b16 %v2630
    %v2817 = vunpack.c.h.b16 %v2630
    %v2818 = vunpack.c.l.b16 %v2631
    %v2819 = vunpack.c.h.b16 %v2631
    %v2820 = vunpack.c.l.b16 %v2632
    %v2821 = vunpack.c.h.b16 %v2632
    %v2822 = vunpack.c.l.b16 %v2633
    %v2823 = vunpack.c.h.b16 %v2633
    %v2824 = vunpack.c.l.b16 %v2634
    %v2825 = vunpack.c.h.b16 %v2634
    %v2826 = vunpack.c.l.b16 %v2635
    %v2827 = vunpack.c.h.b16 %v2635
    %v2828 = vpack.c.b16 %v2704, %v2700
    %v2829 = vpack.c.b16 %v2705, %v2701
    %v2830 = vpack.c.b16 %v2706, %v2702
    %v2831 = vpack.c.b16 %v2707, %v2703
    %v2832 = vpack.c.b16 %v2712, %v2708
    %v2833 = vpack.c.b16 %v2713, %v2709
    %v2834 = vpack.c.b16 %v2714, %v2710
    %v2835 = vpack.c.b16 %v2715, %v2711
    %v2836 = vpack.c.b16 %v2720, %v2716
    %v2837 = vpack.c.b16 %v2721, %v2717
    %v2838 = vpack.c.b16 %v2722, %v2718
    %v2839 = vpack.c.b16 %v2723, %v2719
    %v2840 = vpack.c.b16 %v2728, %v2724
    %v2841 = vpack.c.b16 %v2729, %v2725
    %v2842 = vpack.c.b16 %v2730, %v2726
    %v2843 = vpack.c.b16 %v2731, %v2727
    %v2844 = vpack.c.b16 %v2736, %v2732
    %v2845 = vpack.c.b16 %v2737, %v2733
    %v2846 = vpack.c.b16 %v2738, %v2734
    %v2847 = vpack.c.b16 %v2739, %v2735
    %v2848 = vpack.c.b16 %v2744, %v2740
    %v2849 = vpack.c.b16 %v2745, %v2741
    %v2850 = vpack.c.b16 %v2746, %v2742
    %v2851 = vpack.c.b16 %v2747, %v2743
    %v2852 = vpack.c.b16 %v2752, %v2748
    %v2853 = vpack.c.b16 %v2753, %v2749
    %v2854 = vpack.c.b16 %v2754, %v2750
    %v2855 = vpack.c.b16 %v2755, %v2751
    %v2856 = vpack.c.b16 %v2760, %v2756
    %v2857 = vpack.c.b16 %v2761, %v2757
    %v2858 = vpack.c.b16 %v2762, %v2758
    %v2859 = vpack.c.b16 %v2763, %v2759
    %v2860 = vpack.c.b16 %v2768, %v2764
    %v2861 = vpack.c.b16 %v2769, %v2765
    %v2862 = vpack.c.b16 %v2770, %v2766
    %v2863 = vpack.c.b16 %v2771, %v2767
    %v2864 = vpack.c.b16 %v2776, %v2772
    %v2865 = vpack.c.b16 %v2777, %v2773
    %v2866 = vpack.c.b16 %v2778, %v2774
    %v2867 = vpack.c.b16 %v2779, %v2775
    %v2868 = vpack.c.b16 %v2784, %v2780
    %v2869 = vpack.c.b16 %v2785, %v2781
    %v2870 = vpack.c.b16 %v2786, %v2782
    %v2871 = vpack.c.b16 %v2787, %v2783
    %v2872 = vpack.c.b16 %v2792, %v2788
    %v2873 = vpack.c.b16 %v2793, %v2789
    %v2874 = vpack.c.b16 %v2794, %v2790
    %v2875 = vpack.c.b16 %v2795, %v2791
    %v2876 = vpack.c.b16 %v2800, %v2796
    %v2877 = vpack.c.b16 %v2801, %v2797
    %v2878 = vpack.c.b16 %v2802, %v2798
    %v2879 = vpack.c.b16 %v2803, %v2799
    %v2880 = vpack.c.b16 %v2808, %v2804
    %v2881 = vpack.c.b16 %v2809, %v2805
    %v2882 = vpack.c.b16 %v2810, %v2806
    %v2883 = vpack.c.b16 %v2811, %v2807
    %v2884 = vpack.c.b16 %v2816, %v2812
    %v2885 = vpack.c.b16 %v2817, %v2813
    %v2886 = vpack.c.b16 %v2818, %v2814
    %v2887 = vpack.c.b16 %v2819, %v2815
    %v2888 = vpack.c.b16 %v2824, %v2820
    %v2889 = vpack.c.b16 %v2825, %v2821
    %v2890 = vpack.c.b16 %v2826, %v2822
    %v2891 = vpack.c.b16 %v2827, %v2823
    %2956 = vmatpush.bf16.msra.mxu0 %v2856
    %2957 = vmatpush.bf16.msra.mxu0 %v2852
    %2958 = vmatpush.bf16.msra.mxu0 %v2848
    %2959 = vmatpush.bf16.msra.mxu0 %v2844
    %2960 = vmatpush.bf16.msra.mxu0 %v2840
    %2961 = vmatpush.bf16.msra.mxu0 %v2836
    %2962 = vmatpush.bf16.msra.mxu0 %v2832
    %2963 = vmatpush.bf16.msra.mxu0 %v2828
    %2964 = vmatmul.bf16.gmra.mxu0 %v2256
    %v2965 = vpop.f32.mrf.mxu0
    %v2966 = vadd.f32 0.0, %v2965
    %v2967 = vpop.f32.mrf.mxu0
    %2968 = vdwg.mxu0
    %2969 = vmatpush.bf16.msra.mxu0 %v2888
    %2970 = vmatpush.bf16.msra.mxu0 %v2884
    %2971 = vmatpush.bf16.msra.mxu0 %v2880
    %2972 = vmatpush.bf16.msra.mxu0 %v2876
    %2973 = vmatpush.bf16.msra.mxu0 %v2872
    %2974 = vmatpush.bf16.msra.mxu0 %v2868
    %2975 = vmatpush.bf16.msra.mxu0 %v2864
    %2976 = vmatpush.bf16.msra.mxu0 %v2860
    %2977 = vmatmul.bf16.gmra.mxu0 %v2257
    %v2978 = vpop.f32.mrf.mxu0
    %v2979 = vadd.f32 %v2966, %v2978
    %v2980 = vpop.f32.mrf.mxu0
    %2981 = vdwg.mxu0
    %2982 = vmatpush.bf16.msra.mxu0 %v2857
    %2983 = vmatpush.bf16.msra.mxu0 %v2853
    %2984 = vmatpush.bf16.msra.mxu0 %v2849
    %2985 = vmatpush.bf16.msra.mxu0 %v2845
    %2986 = vmatpush.bf16.msra.mxu0 %v2841
    %2987 = vmatpush.bf16.msra.mxu0 %v2837
    %2988 = vmatpush.bf16.msra.mxu0 %v2833
    %2989 = vmatpush.bf16.msra.mxu0 %v2829
    %2990 = vmatmul.bf16.gmra.mxu0 %v2256
    %v2991 = vpop.f32.mrf.mxu0
    %v2992 = vadd.f32 0.0, %v2991
    %v2993 = vpop.f32.mrf.mxu0
    %2994 = vdwg.mxu0
    %2995 = vmatpush.bf16.msra.mxu0 %v2889
    %2996 = vmatpush.bf16.msra.mxu0 %v2885
    %2997 = vmatpush.bf16.msra.mxu0 %v2881
    %2998 = vmatpush.bf16.msra.mxu0 %v2877
    %2999 = vmatpush.bf16.msra.mxu0 %v2873
    %3000 = vmatpush.bf16.msra.mxu0 %v2869
    %3001 = vmatpush.bf16.msra.mxu0 %v2865
    %3002 = vmatpush.bf16.msra.mxu0 %v2861
    %3003 = vmatmul.bf16.gmra.mxu0 %v2257
    %v3004 = vpop.f32.mrf.mxu0
    %v3005 = vadd.f32 %v2992, %v3004
    %v3006 = vpop.f32.mrf.mxu0
    %3007 = vdwg.mxu0
    %3008 = vmatpush.bf16.msra.mxu0 %v2858
    %3009 = vmatpush.bf16.msra.mxu0 %v2854
    %3010 = vmatpush.bf16.msra.mxu0 %v2850
    %3011 = vmatpush.bf16.msra.mxu0 %v2846
    %3012 = vmatpush.bf16.msra.mxu0 %v2842
    %3013 = vmatpush.bf16.msra.mxu0 %v2838
    %3014 = vmatpush.bf16.msra.mxu0 %v2834
    %3015 = vmatpush.bf16.msra.mxu0 %v2830
    %3016 = vmatmul.bf16.gmra.mxu0 %v2256
    %v3017 = vpop.f32.mrf.mxu0
    %v3018 = vadd.f32 0.0, %v3017
    %v3019 = vpop.f32.mrf.mxu0
    %3020 = vdwg.mxu0
    %3021 = vmatpush.bf16.msra.mxu0 %v2890
    %3022 = vmatpush.bf16.msra.mxu0 %v2886
    %3023 = vmatpush.bf16.msra.mxu0 %v2882
    %3024 = vmatpush.bf16.msra.mxu0 %v2878
    %3025 = vmatpush.bf16.msra.mxu0 %v2874
    %3026 = vmatpush.bf16.msra.mxu0 %v2870
    %3027 = vmatpush.bf16.msra.mxu0 %v2866
    %3028 = vmatpush.bf16.msra.mxu0 %v2862
    %3029 = vmatmul.bf16.gmra.mxu0 %v2257
    %v3030 = vpop.f32.mrf.mxu0
    %v3031 = vadd.f32 %v3018, %v3030
    %v3032 = vpop.f32.mrf.mxu0
    %3033 = vdwg.mxu0
    %3034 = vmatpush.bf16.msra.mxu0 %v2859
    %3035 = vmatpush.bf16.msra.mxu0 %v2855
    %3036 = vmatpush.bf16.msra.mxu0 %v2851
    %3037 = vmatpush.bf16.msra.mxu0 %v2847
    %3038 = vmatpush.bf16.msra.mxu0 %v2843
    %3039 = vmatpush.bf16.msra.mxu0 %v2839
    %3040 = vmatpush.bf16.msra.mxu0 %v2835
    %3041 = vmatpush.bf16.msra.mxu0 %v2831
    %3042 = vmatmul.bf16.gmra.mxu0 %v2256
    %v3043 = vpop.f32.mrf.mxu0
    %v3044 = vadd.f32 0.0, %v3043
    %v3045 = vpop.f32.mrf.mxu0
    %3046 = vdwg.mxu0
    %3047 = vmatpush.bf16.msra.mxu0 %v2891
    %3048 = vmatpush.bf16.msra.mxu0 %v2887
    %3049 = vmatpush.bf16.msra.mxu0 %v2883
    %3050 = vmatpush.bf16.msra.mxu0 %v2879
    %3051 = vmatpush.bf16.msra.mxu0 %v2875
    %3052 = vmatpush.bf16.msra.mxu0 %v2871
    %3053 = vmatpush.bf16.msra.mxu0 %v2867
    %3054 = vmatpush.bf16.msra.mxu0 %v2863
    %3055 = vmatmul.bf16.gmra.mxu0 %v2257
    %v3056 = vpop.f32.mrf.mxu0
    %v3057 = vadd.f32 %v3044, %v3056
    %v3058 = vpop.f32.mrf.mxu0
    %3059 = vdwg.mxu0
    %3060 = vmatpush.bf16.msra.mxu0 %v2856
    %3061 = vmatpush.bf16.msra.mxu0 %v2852
    %3062 = vmatpush.bf16.msra.mxu0 %v2848
    %3063 = vmatpush.bf16.msra.mxu0 %v2844
    %3064 = vmatpush.bf16.msra.mxu0 %v2840
    %3065 = vmatpush.bf16.msra.mxu0 %v2836
    %3066 = vmatpush.bf16.msra.mxu0 %v2832
    %3067 = vmatpush.bf16.msra.mxu0 %v2828
    %3068 = vmatmul.bf16.gmra.mxu0 %v2570
    %v3069 = vpop.f32.mrf.mxu0
    %v3070 = vadd.f32 0.0, %v3069
    %v3071 = vpop.f32.mrf.mxu0
    %3072 = vdwg.mxu0
    %3073 = vmatpush.bf16.msra.mxu0 %v2888
    %3074 = vmatpush.bf16.msra.mxu0 %v2884
    %3075 = vmatpush.bf16.msra.mxu0 %v2880
    %3076 = vmatpush.bf16.msra.mxu0 %v2876
    %3077 = vmatpush.bf16.msra.mxu0 %v2872
    %3078 = vmatpush.bf16.msra.mxu0 %v2868
    %3079 = vmatpush.bf16.msra.mxu0 %v2864
    %3080 = vmatpush.bf16.msra.mxu0 %v2860
    %3081 = vmatmul.bf16.gmra.mxu0 %v2571
    %v3082 = vpop.f32.mrf.mxu0
    %v3083 = vadd.f32 %v3070, %v3082
    %v3084 = vpop.f32.mrf.mxu0
    %3085 = vdwg.mxu0
    %3086 = vmatpush.bf16.msra.mxu0 %v2857
    %3087 = vmatpush.bf16.msra.mxu0 %v2853
    %3088 = vmatpush.bf16.msra.mxu0 %v2849
    %3089 = vmatpush.bf16.msra.mxu0 %v2845
    %3090 = vmatpush.bf16.msra.mxu0 %v2841
    %3091 = vmatpush.bf16.msra.mxu0 %v2837
    %3092 = vmatpush.bf16.msra.mxu0 %v2833
    %3093 = vmatpush.bf16.msra.mxu0 %v2829
    %3094 = vmatmul.bf16.gmra.mxu0 %v2570
    %v3095 = vpop.f32.mrf.mxu0
    %v3096 = vadd.f32 0.0, %v3095
    %v3097 = vpop.f32.mrf.mxu0
    %3098 = vdwg.mxu0
    %3099 = vmatpush.bf16.msra.mxu0 %v2889
    %3100 = vmatpush.bf16.msra.mxu0 %v2885
    %3101 = vmatpush.bf16.msra.mxu0 %v2881
    %3102 = vmatpush.bf16.msra.mxu0 %v2877
    %3103 = vmatpush.bf16.msra.mxu0 %v2873
    %3104 = vmatpush.bf16.msra.mxu0 %v2869
    %3105 = vmatpush.bf16.msra.mxu0 %v2865
    %3106 = vmatpush.bf16.msra.mxu0 %v2861
    %3107 = vmatmul.bf16.gmra.mxu0 %v2571
    %v3108 = vpop.f32.mrf.mxu0
    %v3109 = vadd.f32 %v3096, %v3108
    %v3110 = vpop.f32.mrf.mxu0
    %3111 = vdwg.mxu0
    %3112 = vmatpush.bf16.msra.mxu0 %v2858
    %3113 = vmatpush.bf16.msra.mxu0 %v2854
    %3114 = vmatpush.bf16.msra.mxu0 %v2850
    %3115 = vmatpush.bf16.msra.mxu0 %v2846
    %3116 = vmatpush.bf16.msra.mxu0 %v2842
    %3117 = vmatpush.bf16.msra.mxu0 %v2838
    %3118 = vmatpush.bf16.msra.mxu0 %v2834
    %3119 = vmatpush.bf16.msra.mxu0 %v2830
    %3120 = vmatmul.bf16.gmra.mxu0 %v2570
    %v3121 = vpop.f32.mrf.mxu0
    %v3122 = vadd.f32 0.0, %v3121
    %v3123 = vpop.f32.mrf.mxu0
    %3124 = vdwg.mxu0
    %3125 = vmatpush.bf16.msra.mxu0 %v2890
    %3126 = vmatpush.bf16.msra.mxu0 %v2886
    %3127 = vmatpush.bf16.msra.mxu0 %v2882
    %3128 = vmatpush.bf16.msra.mxu0 %v2878
    %3129 = vmatpush.bf16.msra.mxu0 %v2874
    %3130 = vmatpush.bf16.msra.mxu0 %v2870
    %3131 = vmatpush.bf16.msra.mxu0 %v2866
    %3132 = vmatpush.bf16.msra.mxu0 %v2862
    %3133 = vmatmul.bf16.gmra.mxu0 %v2571
    %v3134 = vpop.f32.mrf.mxu0
    %v3135 = vadd.f32 %v3122, %v3134
    %v3136 = vpop.f32.mrf.mxu0
    %3137 = vdwg.mxu0
    %3138 = vmatpush.bf16.msra.mxu0 %v2859
    %3139 = vmatpush.bf16.msra.mxu0 %v2855
    %3140 = vmatpush.bf16.msra.mxu0 %v2851
    %3141 = vmatpush.bf16.msra.mxu0 %v2847
    %3142 = vmatpush.bf16.msra.mxu0 %v2843
    %3143 = vmatpush.bf16.msra.mxu0 %v2839
    %3144 = vmatpush.bf16.msra.mxu0 %v2835
    %3145 = vmatpush.bf16.msra.mxu0 %v2831
    %3146 = vmatmul.bf16.gmra.mxu0 %v2570
    %v3147 = vpop.f32.mrf.mxu0
    %v3148 = vadd.f32 0.0, %v3147
    %v3149 = vpop.f32.mrf.mxu0
    %3150 = vdwg.mxu0
    %3151 = vmatpush.bf16.msra.mxu0 %v2891
    %3152 = vmatpush.bf16.msra.mxu0 %v2887
    %3153 = vmatpush.bf16.msra.mxu0 %v2883
    %3154 = vmatpush.bf16.msra.mxu0 %v2879
    %3155 = vmatpush.bf16.msra.mxu0 %v2875
    %3156 = vmatpush.bf16.msra.mxu0 %v2871
    %3157 = vmatpush.bf16.msra.mxu0 %v2867
    %3158 = vmatpush.bf16.msra.mxu0 %v2863
    %3159 = vmatmul.bf16.gmra.mxu0 %v2571
    %v3160 = vpop.f32.mrf.mxu0
    %v3161 = vadd.f32 %v3148, %v3160
    %v3162 = vpop.f32.mrf.mxu0
    %3163 = vdwg.mxu0
    %v3164 = vsub.f32 %v2979, %v3135
    %v3165 = vsub.f32 %v3005, %v3161
    %v3166 = vadd.f32 %v3031, %v3083
    %v3167 = vadd.f32 %v3057, %v3109
    %v3168 = vmul.f32 %v3164, %v3164
    %v3169 = vmul.f32 %v3165, %v3165
    %v3170 = vmul.f32 %v3166, %v3166
    %v3171 = vmul.f32 %v3167, %v3167
    %v3172 = vadd.f32 %v3168, %v3170
    %v3173 = vadd.f32 %v3169, %v3171
    %v3174 = vrsqrt.pop %v3172
    %v3175 = vmul.f32 %v3174, %v3172
    %v3176 = vmul.f32 %v3175, %v3174
    %v3177 = vmul.f32 0.5, %v3176
    %v3178 = vsub.f32 1.5, %v3177
    %v3179 = vmul.f32 %v3174, %v3178
    %v3180 = vmul.f32 %v3172, %v3179
    %vm3181 = vcmp.eq.f32.partialorder %v3172, inf
    %v3182 = vsel %vm3181, %v3172, %v3180
    %vm3183 = vcmp.eq.f32.partialorder %v3172, 0.0
    %v3184 = vand.u32 %v3172, 2147483648
    %v3185 = vsel %vm3183, %v3184, %v3182
    %v3186 = vrsqrt.pop %v3173
    %v3187 = vmul.f32 %v3186, %v3173
    %v3188 = vmul.f32 %v3187, %v3186
    %v3189 = vmul.f32 0.5, %v3188
    %v3190 = vsub.f32 1.5, %v3189
    %v3191 = vmul.f32 %v3186, %v3190
    %v3192 = vmul.f32 %v3173, %v3191
    %vm3193 = vcmp.eq.f32.partialorder %v3173, inf
    %v3194 = vsel %vm3193, %v3173, %v3192
    %vm3195 = vcmp.eq.f32.partialorder %v3173, 0.0
    %v3196 = vand.u32 %v3173, 2147483648
    %v3197 = vsel %vm3195, %v3196, %v3194
    %v3198 = vld [vmem:[%s11] sm:$0xff]
    %v3199 = vld [vmem:[%s12] sm:$0xff]
    %3201 = vset.pattern.permute.xlu0 0
    %3202 = vperm.xlu0 %3201, %v3199
    %v3203 = vpop.permute.xlu0 %3202
    %v3206 = vsel %vm734, %v3198, 0
    %3208 = vmatpush.msra.mxu0 0.0
    %3209 = vmatpush.msra.mxu0 0.0
    %3210 = vmatpush.msra.mxu0 0.0
    %3211 = vmatpush.msra.mxu0 0.0
    %3212 = vmatpush.msra.mxu0 0.0
    %3213 = vmatpush.msra.mxu0 0.0
    %3214 = vmatpush.msra.mxu0 0.0
    %3215 = vmatpush.msra.mxu0 0.0
    %3216 = vmatpush.msra.mxu0 0.0
    %3217 = vmatpush.msra.mxu0 0.0
    %3218 = vmatpush.msra.mxu0 0.0
    %3219 = vmatpush.msra.mxu0 0.0
    %3220 = vmatpush.msra.mxu0 0.0
    %3221 = vmatpush.msra.mxu0 0.0
    %3222 = vmatpush.msra.mxu0 0.0
    %v3223 = vand.u32 %v3185, 4294901760
    %3224 = vmatpush.msra.mxu0 %v3223
    %v3225 = vand.u32 %v3206, 4294901760
    %v3226 = vsub.f32 %v3206, %v3225
    %v3227 = vand.u32 %v3226, 4294901760
    %v3228 = vsub.f32 %v3226, %v3227
    %v3229 = vand.u32 %v3228, 4294901760
    %3230 = vmatmul.f32.gmra.mxu0 %v3229
    %v3231 = vpop.f32.mrf.mxu0
    %v3232 = vadd.f32 %v3203, %v3231
    %3233 = vdwg.mxu0
    %3234 = vmatpush.msra.mxu0 0.0
    %3235 = vmatpush.msra.mxu0 0.0
    %3236 = vmatpush.msra.mxu0 0.0
    %3237 = vmatpush.msra.mxu0 0.0
    %3238 = vmatpush.msra.mxu0 0.0
    %3239 = vmatpush.msra.mxu0 0.0
    %3240 = vmatpush.msra.mxu0 0.0
    %3241 = vmatpush.msra.mxu0 0.0
    %3242 = vmatpush.msra.mxu0 0.0
    %3243 = vmatpush.msra.mxu0 0.0
    %3244 = vmatpush.msra.mxu0 0.0
    %3245 = vmatpush.msra.mxu0 0.0
    %3246 = vmatpush.msra.mxu0 0.0
    %3247 = vmatpush.msra.mxu0 0.0
    %3248 = vmatpush.msra.mxu0 0.0
    %v3249 = vand.u32 %v3185, 4294901760
    %v3250 = vsub.f32 %v3185, %v3249
    %v3251 = vand.u32 %v3250, 4294901760
    %v3252 = vsub.f32 %v3250, %v3251
    %v3253 = vand.u32 %v3252, 4294901760
    %3254 = vmatpush.msra.mxu0 %v3253
    %v3255 = vand.u32 %v3206, 4294901760
    %3256 = vmatmul.f32.gmra.mxu0 %v3255
    %v3257 = vpop.f32.mrf.mxu0
    %v3258 = vadd.f32 %v3232, %v3257
    %3259 = vdwg.mxu0
    %3260 = vmatpush.msra.mxu0 0.0
    %3261 = vmatpush.msra.mxu0 0.0
    %3262 = vmatpush.msra.mxu0 0.0
    %3263 = vmatpush.msra.mxu0 0.0
    %3264 = vmatpush.msra.mxu0 0.0
    %3265 = vmatpush.msra.mxu0 0.0
    %3266 = vmatpush.msra.mxu0 0.0
    %3267 = vmatpush.msra.mxu0 0.0
    %3268 = vmatpush.msra.mxu0 0.0
    %3269 = vmatpush.msra.mxu0 0.0
    %3270 = vmatpush.msra.mxu0 0.0
    %3271 = vmatpush.msra.mxu0 0.0
    %3272 = vmatpush.msra.mxu0 0.0
    %3273 = vmatpush.msra.mxu0 0.0
    %3274 = vmatpush.msra.mxu0 0.0
    %v3275 = vand.u32 %v3185, 4294901760
    %v3276 = vsub.f32 %v3185, %v3275
    %3277 = vmatpush.msra.mxu0 %v3276
    %v3278 = vand.u32 %v3206, 4294901760
    %v3279 = vsub.f32 %v3206, %v3278
    %3280 = vmatmul.f32.gmra.mxu0 %v3279
    %v3281 = vpop.f32.mrf.mxu0
    %v3282 = vadd.f32 %v3258, %v3281
    %3283 = vdwg.mxu0
    %3284 = vmatpush.msra.mxu0 0.0
    %3285 = vmatpush.msra.mxu0 0.0
    %3286 = vmatpush.msra.mxu0 0.0
    %3287 = vmatpush.msra.mxu0 0.0
    %3288 = vmatpush.msra.mxu0 0.0
    %3289 = vmatpush.msra.mxu0 0.0
    %3290 = vmatpush.msra.mxu0 0.0
    %3291 = vmatpush.msra.mxu0 0.0
    %3292 = vmatpush.msra.mxu0 0.0
    %3293 = vmatpush.msra.mxu0 0.0
    %3294 = vmatpush.msra.mxu0 0.0
    %3295 = vmatpush.msra.mxu0 0.0
    %3296 = vmatpush.msra.mxu0 0.0
    %3297 = vmatpush.msra.mxu0 0.0
    %3298 = vmatpush.msra.mxu0 0.0
    %v3299 = vand.u32 %v3185, 4294901760
    %3300 = vmatpush.msra.mxu0 %v3299
    %v3301 = vand.u32 %v3206, 4294901760
    %v3302 = vsub.f32 %v3206, %v3301
    %v3303 = vand.u32 %v3302, 4294901760
    %3304 = vmatmul.f32.gmra.mxu0 %v3303
    %v3305 = vpop.f32.mrf.mxu0
    %v3306 = vadd.f32 %v3282, %v3305
    %3307 = vdwg.mxu0
    %3308 = vmatpush.msra.mxu0 0.0
    %3309 = vmatpush.msra.mxu0 0.0
    %3310 = vmatpush.msra.mxu0 0.0
    %3311 = vmatpush.msra.mxu0 0.0
    %3312 = vmatpush.msra.mxu0 0.0
    %3313 = vmatpush.msra.mxu0 0.0
    %3314 = vmatpush.msra.mxu0 0.0
    %3315 = vmatpush.msra.mxu0 0.0
    %3316 = vmatpush.msra.mxu0 0.0
    %3317 = vmatpush.msra.mxu0 0.0
    %3318 = vmatpush.msra.mxu0 0.0
    %3319 = vmatpush.msra.mxu0 0.0
    %3320 = vmatpush.msra.mxu0 0.0
    %3321 = vmatpush.msra.mxu0 0.0
    %3322 = vmatpush.msra.mxu0 0.0
    %v3323 = vand.u32 %v3185, 4294901760
    %v3324 = vsub.f32 %v3185, %v3323
    %v3325 = vand.u32 %v3324, 4294901760
    %3326 = vmatpush.msra.mxu0 %v3325
    %v3327 = vand.u32 %v3206, 4294901760
    %3328 = vmatmul.f32.gmra.mxu0 %v3327
    %v3329 = vpop.f32.mrf.mxu0
    %v3330 = vadd.f32 %v3306, %v3329
    %3331 = vdwg.mxu0
    %3332 = vmatpush.msra.mxu0 0.0
    %3333 = vmatpush.msra.mxu0 0.0
    %3334 = vmatpush.msra.mxu0 0.0
    %3335 = vmatpush.msra.mxu0 0.0
    %3336 = vmatpush.msra.mxu0 0.0
    %3337 = vmatpush.msra.mxu0 0.0
    %3338 = vmatpush.msra.mxu0 0.0
    %3339 = vmatpush.msra.mxu0 0.0
    %3340 = vmatpush.msra.mxu0 0.0
    %3341 = vmatpush.msra.mxu0 0.0
    %3342 = vmatpush.msra.mxu0 0.0
    %3343 = vmatpush.msra.mxu0 0.0
    %3344 = vmatpush.msra.mxu0 0.0
    %3345 = vmatpush.msra.mxu0 0.0
    %3346 = vmatpush.msra.mxu0 0.0
    %v3347 = vand.u32 %v3185, 4294901760
    %3348 = vmatpush.msra.mxu0 %v3347
    %v3349 = vand.u32 %v3206, 4294901760
    %3350 = vmatmul.f32.gmra.mxu0 %v3349
    %v3351 = vpop.f32.mrf.mxu0
    %v3352 = vadd.f32 %v3330, %v3351
    %3353 = vdwg.mxu0
    %3354 = vmatpush.msra.mxu0 0.0
    %3355 = vmatpush.msra.mxu0 0.0
    %3356 = vmatpush.msra.mxu0 0.0
    %3357 = vmatpush.msra.mxu0 0.0
    %3358 = vmatpush.msra.mxu0 0.0
    %3359 = vmatpush.msra.mxu0 0.0
    %3360 = vmatpush.msra.mxu0 0.0
    %3361 = vmatpush.msra.mxu0 0.0
    %3362 = vmatpush.msra.mxu0 0.0
    %3363 = vmatpush.msra.mxu0 0.0
    %3364 = vmatpush.msra.mxu0 0.0
    %3365 = vmatpush.msra.mxu0 0.0
    %3366 = vmatpush.msra.mxu0 0.0
    %3367 = vmatpush.msra.mxu0 0.0
    %3368 = vmatpush.msra.mxu0 0.0
    %v3369 = vand.u32 %v3197, 4294901760
    %3370 = vmatpush.msra.mxu0 %v3369
    %v3371 = vand.u32 %v3206, 4294901760
    %v3372 = vsub.f32 %v3206, %v3371
    %v3373 = vand.u32 %v3372, 4294901760
    %v3374 = vsub.f32 %v3372, %v3373
    %v3375 = vand.u32 %v3374, 4294901760
    %3376 = vmatmul.f32.gmra.mxu0 %v3375
    %v3377 = vpop.f32.mrf.mxu0
    %v3378 = vadd.f32 %v3203, %v3377
    %3379 = vdwg.mxu0
    %3380 = vmatpush.msra.mxu0 0.0
    %3381 = vmatpush.msra.mxu0 0.0
    %3382 = vmatpush.msra.mxu0 0.0
    %3383 = vmatpush.msra.mxu0 0.0
    %3384 = vmatpush.msra.mxu0 0.0
    %3385 = vmatpush.msra.mxu0 0.0
    %3386 = vmatpush.msra.mxu0 0.0
    %3387 = vmatpush.msra.mxu0 0.0
    %3388 = vmatpush.msra.mxu0 0.0
    %3389 = vmatpush.msra.mxu0 0.0
    %3390 = vmatpush.msra.mxu0 0.0
    %3391 = vmatpush.msra.mxu0 0.0
    %3392 = vmatpush.msra.mxu0 0.0
    %3393 = vmatpush.msra.mxu0 0.0
    %3394 = vmatpush.msra.mxu0 0.0
    %v3395 = vand.u32 %v3197, 4294901760
    %v3396 = vsub.f32 %v3197, %v3395
    %v3397 = vand.u32 %v3396, 4294901760
    %v3398 = vsub.f32 %v3396, %v3397
    %v3399 = vand.u32 %v3398, 4294901760
    %3400 = vmatpush.msra.mxu0 %v3399
    %v3401 = vand.u32 %v3206, 4294901760
    %3402 = vmatmul.f32.gmra.mxu0 %v3401
    %v3403 = vpop.f32.mrf.mxu0
    %v3404 = vadd.f32 %v3378, %v3403
    %3405 = vdwg.mxu0
    %3406 = vmatpush.msra.mxu0 0.0
    %3407 = vmatpush.msra.mxu0 0.0
    %3408 = vmatpush.msra.mxu0 0.0
    %3409 = vmatpush.msra.mxu0 0.0
    %3410 = vmatpush.msra.mxu0 0.0
    %3411 = vmatpush.msra.mxu0 0.0
    %3412 = vmatpush.msra.mxu0 0.0
    %3413 = vmatpush.msra.mxu0 0.0
    %3414 = vmatpush.msra.mxu0 0.0
    %3415 = vmatpush.msra.mxu0 0.0
    %3416 = vmatpush.msra.mxu0 0.0
    %3417 = vmatpush.msra.mxu0 0.0
    %3418 = vmatpush.msra.mxu0 0.0
    %3419 = vmatpush.msra.mxu0 0.0
    %3420 = vmatpush.msra.mxu0 0.0
    %v3421 = vand.u32 %v3197, 4294901760
    %v3422 = vsub.f32 %v3197, %v3421
    %3423 = vmatpush.msra.mxu0 %v3422
    %v3424 = vand.u32 %v3206, 4294901760
    %v3425 = vsub.f32 %v3206, %v3424
    %3426 = vmatmul.f32.gmra.mxu0 %v3425
    %v3427 = vpop.f32.mrf.mxu0
    %v3428 = vadd.f32 %v3404, %v3427
    %3429 = vdwg.mxu0
    %3430 = vmatpush.msra.mxu0 0.0
    %3431 = vmatpush.msra.mxu0 0.0
    %3432 = vmatpush.msra.mxu0 0.0
    %3433 = vmatpush.msra.mxu0 0.0
    %3434 = vmatpush.msra.mxu0 0.0
    %3435 = vmatpush.msra.mxu0 0.0
    %3436 = vmatpush.msra.mxu0 0.0
    %3437 = vmatpush.msra.mxu0 0.0
    %3438 = vmatpush.msra.mxu0 0.0
    %3439 = vmatpush.msra.mxu0 0.0
    %3440 = vmatpush.msra.mxu0 0.0
    %3441 = vmatpush.msra.mxu0 0.0
    %3442 = vmatpush.msra.mxu0 0.0
    %3443 = vmatpush.msra.mxu0 0.0
    %3444 = vmatpush.msra.mxu0 0.0
    %v3445 = vand.u32 %v3197, 4294901760
    %3446 = vmatpush.msra.mxu0 %v3445
    %v3447 = vand.u32 %v3206, 4294901760
    %v3448 = vsub.f32 %v3206, %v3447
    %v3449 = vand.u32 %v3448, 4294901760
    %3450 = vmatmul.f32.gmra.mxu0 %v3449
    %v3451 = vpop.f32.mrf.mxu0
    %v3452 = vadd.f32 %v3428, %v3451
    %3453 = vdwg.mxu0
    %3454 = vmatpush.msra.mxu0 0.0
    %3455 = vmatpush.msra.mxu0 0.0
    %3456 = vmatpush.msra.mxu0 0.0
    %3457 = vmatpush.msra.mxu0 0.0
    %3458 = vmatpush.msra.mxu0 0.0
    %3459 = vmatpush.msra.mxu0 0.0
    %3460 = vmatpush.msra.mxu0 0.0
    %3461 = vmatpush.msra.mxu0 0.0
    %3462 = vmatpush.msra.mxu0 0.0
    %3463 = vmatpush.msra.mxu0 0.0
    %3464 = vmatpush.msra.mxu0 0.0
    %3465 = vmatpush.msra.mxu0 0.0
    %3466 = vmatpush.msra.mxu0 0.0
    %3467 = vmatpush.msra.mxu0 0.0
    %3468 = vmatpush.msra.mxu0 0.0
    %v3469 = vand.u32 %v3197, 4294901760
    %v3470 = vsub.f32 %v3197, %v3469
    %v3471 = vand.u32 %v3470, 4294901760
    %3472 = vmatpush.msra.mxu0 %v3471
    %v3473 = vand.u32 %v3206, 4294901760
    %3474 = vmatmul.f32.gmra.mxu0 %v3473
    %v3475 = vpop.f32.mrf.mxu0
    %v3476 = vadd.f32 %v3452, %v3475
    %3477 = vdwg.mxu0
    %3478 = vmatpush.msra.mxu0 0.0
    %3479 = vmatpush.msra.mxu0 0.0
    %3480 = vmatpush.msra.mxu0 0.0
    %3481 = vmatpush.msra.mxu0 0.0
    %3482 = vmatpush.msra.mxu0 0.0
    %3483 = vmatpush.msra.mxu0 0.0
    %3484 = vmatpush.msra.mxu0 0.0
    %3485 = vmatpush.msra.mxu0 0.0
    %3486 = vmatpush.msra.mxu0 0.0
    %3487 = vmatpush.msra.mxu0 0.0
    %3488 = vmatpush.msra.mxu0 0.0
    %3489 = vmatpush.msra.mxu0 0.0
    %3490 = vmatpush.msra.mxu0 0.0
    %3491 = vmatpush.msra.mxu0 0.0
    %3492 = vmatpush.msra.mxu0 0.0
    %v3493 = vand.u32 %v3197, 4294901760
    %3494 = vmatpush.msra.mxu0 %v3493
    %v3495 = vand.u32 %v3206, 4294901760
    %3496 = vmatmul.f32.gmra.mxu0 %v3495
    %v3497 = vpop.f32.mrf.mxu0
    %v3498 = vadd.f32 %v3476, %v3497
    %3499 = vdwg.mxu0
    %3500 = vst [vmem:[#allocation7] sm:$0xff] %v3352
    %3501 = vst [vmem:[#allocation7 + $0x8] sm:$0xff] %v3498
    // Predicated region
    $region62: #{tpu_custom_call.1} parent=1 // pred_check
      _
    $region63: #{tpu_custom_call.1} parent=1 // pred_check_branch
      %3503 = sbr.rel (0) target = $region65
    $region64: #{tpu_custom_call.1} parent=1 // pred_region
      %3505 = vsyncadd [#allocation4], 0
      %s3507 = sshll.u32 [#allocation7], 4
      %s3508 = int_to_ptr.vmem [resolvable:$true] %s3507
      %s3509 = sshll.u32 %s13, 4
      %s3510 = int_to_ptr.hbm [resolvable:$true] %s3509
      %3512 = dma.vmem_to_hbm [thread:$0]  %s3508, 256, %s3510, [#allocation4]
    $region65: #{tpu_custom_call.1} parent=1 // pred_fallthru
      _
    // Predicated region
    $region66: #{tpu_custom_call.1} parent=1 // pred_check
      _
    $region67: #{tpu_custom_call.1} parent=1 // pred_check_branch
      %3514 = sbr.rel (0) target = $region69
    $region68: #{tpu_custom_call.1} parent=1 // pred_region
      %3516 = dma.done [#allocation4], 256
    $region69: #{tpu_custom_call.1} parent=1 // pred_fallthru
      _
    %3517 = vsyncpa [#allocation3], 1
    %3518 = vsyncpa [#allocation6], 1
    %3519 = vsyncpa [#allocation4], 1

</llo_original>
